<compile_context>
chip_gen: v7x
topology: tpu7x:2x2x1
jax: 0.10.0
libtpu: 0.0.40
codegen_flags: <defaults>
</compile_context>

<pallas_src>
import functools

import jax
import jax.numpy as jnp
from jax.experimental import pallas as pl
from jax.experimental.pallas import tpu as pltpu

EPS = 1e-5
COMPUTE_DTYPE = jnp.bfloat16            # MXU-native on v5e/v6e/v7x; f32 accumulate
VMEM_LIMIT_BYTES = 32 * 1024 * 1024     # > v5e 16MiB default, <= v7x 64MiB physical


# --------------------------- Pallas kernel -----------------------------------

def _conv3x3x3_bn_relu_kernel(x0_ref, x1_ref, x2_ref, w_ref, b_ref, o_ref, *, H, W):
    # x{0,1,2}_ref: (C, Ppad)   padded input planes at depths d, d+1, d+2;
    #                           plane flattened as (H+2)*(W+2) (+2 slack) on lanes.
    # w_ref:        (27, Cout, C)  BN-scale-folded weights, taps ordered (kd, kh, kw).
    # b_ref:        (Cout, 1)      folded BN bias (f32).
    # o_ref:        (Cout, L)      L = H*(W+2); columns w in {W, W+1} of each row
    #                              are junk and stripped by the wrapper.
    Wp = W + 2
    L = H * Wp
    acc = None
    for kd, x_ref in enumerate((x0_ref, x1_ref, x2_ref)):
        for kh in range(3):
            for kw in range(3):
                off = kh * Wp + kw                         # static flat tap offset
                tap = x_ref[:, off:off + L]                # (C, L) window load
                wk = w_ref[kd * 9 + kh * 3 + kw]           # (Cout, C)
                part = jnp.dot(wk, tap, preferred_element_type=jnp.float32)
                acc = part if acc is None else acc + part
    y = jnp.maximum(acc + b_ref[...], 0.0)                 # folded-BN bias + ReLU
    o_ref[...] = y.astype(o_ref.dtype)


# --------------------------- wrapper ------------------------------------------

def _make_halo_index_map(kd):
    def index_map(n, d):
        return (n, d + kd, 0, 0)
    return index_map


def conv3d_bn_relu(x_ndchw, w_folded, bias, out_dtype):
    """3x3x3 'same' conv (no conv bias), BN scale pre-folded into w, + bias + ReLU.

    x_ndchw:  (N, D, C, H, W)      per-plane channel-major activation layout
    w_folded: (Cout, C, 3, 3, 3)   f32, already multiplied by BN scale
    bias:     (Cout,)              folded BN bias
    returns   (N, D, Cout, H, W)
    """
    N, D, C, H, W = x_ndchw.shape
    Cout = w_folded.shape[0]
    Hp, Wp = H + 2, W + 2
    P = Hp * Wp
    Ppad = P + 2                 # slack so every tap window off:off+L stays in bounds
    L = H * Wp                   # per-plane compute width (2 junk cols per row)

    # Zero-pad D/H/W by 1, flatten each (Hp, Wp) plane onto the lane axis,
    # add 2 lanes of slack, cast to the MXU compute dtype (halves DMA bytes).
    xpad = jnp.pad(x_ndchw, ((0, 0), (1, 1), (0, 0), (1, 1), (1, 1)))
    xflat = xpad.reshape(N, D + 2, C, P)
    xflat = jnp.pad(xflat, ((0, 0), (0, 0), (0, 0), (0, Ppad - P)))
    xflat = xflat.astype(COMPUTE_DTYPE)

    # (Cout, C, kd, kh, kw) -> (27, Cout, C), taps ordered kd-major.
    w_taps = jnp.transpose(w_folded, (2, 3, 4, 0, 1)).reshape(27, Cout, C)
    w_taps = w_taps.astype(COMPUTE_DTYPE)
    b2d = bias.reshape(Cout, 1).astype(jnp.float32)

    kernel = functools.partial(_conv3x3x3_bn_relu_kernel, H=H, W=W)

    out = pl.pallas_call(
        kernel,
        out_shape=jax.ShapeDtypeStruct((N, D, Cout, L), out_dtype),
        grid=(N, D),
        in_specs=[
            # same padded activation passed 3x with depth offsets 0/1/2 (halo)
            pl.BlockSpec((None, None, C, Ppad), _make_halo_index_map(0)),
            pl.BlockSpec((None, None, C, Ppad), _make_halo_index_map(1)),
            pl.BlockSpec((None, None, C, Ppad), _make_halo_index_map(2)),
            pl.BlockSpec((27, Cout, C), lambda n, d: (0, 0, 0)),   # weights (resident)
            pl.BlockSpec((Cout, 1), lambda n, d: (0, 0)),          # folded BN bias
        ],
        out_specs=pl.BlockSpec((None, None, Cout, L), lambda n, d: (n, d, 0, 0)),
        compiler_params=pltpu.CompilerParams(
            dimension_semantics=("parallel", "parallel"),
            vmem_limit_bytes=VMEM_LIMIT_BYTES),
    )(xflat, xflat, xflat, w_taps, b2d)

    # Strip the 2 junk columns per row: (N, D, Cout, L) -> (N, D, Cout, H, W).
    return out.reshape(N, D, Cout, H, Wp)[..., :W]


def _fold_bn(gamma, beta, mean, var):
    scale = gamma / jnp.sqrt(var + EPS)
    bias = beta - mean * scale
    return scale, bias


@jax.jit
def down_forward(x_ncdhw, params):
    """Equivalent of Down(in_channels, out_channels).forward(x) (inference BN)."""
    N, C, D, H, W = x_ncdhw.shape
    # MaxPool3d(2): plain reshape+max (even spatial dims assumed, as in v1).
    xpool = x_ncdhw.reshape(N, C, D // 2, 2, H // 2, 2, W // 2, 2).max(axis=(3, 5, 7))
    # (N, C, D', H', W') -> (N, D', C, H', W'): channels on sublanes, plane on lanes.
    xpool = jnp.transpose(xpool, (0, 2, 1, 3, 4))

    s1, b1 = _fold_bn(params["gamma1"], params["beta1"], params["mean1"], params["var1"])
    s2, b2 = _fold_bn(params["gamma2"], params["beta2"], params["mean2"], params["var2"])
    w1f = params["w1"] * s1[:, None, None, None, None]     # fold BN scale into weights
    w2f = params["w2"] * s2[:, None, None, None, None]

    y = conv3d_bn_relu(xpool, w1f, b1, out_dtype=COMPUTE_DTYPE)   # in  -> mid
    y = conv3d_bn_relu(y, w2f, b2, out_dtype=jnp.float32)         # mid -> out

    # (N, D', Cout, H', W') -> (N, Cout, D', H', W')  (cheap leading-axis swap)
    return jnp.transpose(y, (0, 2, 1, 3, 4))


# --------------------------- pure-JAX reference -------------------------------

def down_reference(x_ncdhw, params):
    x = jnp.transpose(x_ncdhw, (0, 2, 3, 4, 1))
    N, D, H, W, C = x.shape
    x = x.reshape(N, D // 2, 2, H // 2, 2, W // 2, 2, C).max(axis=(2, 4, 6))

    def conv_bn_relu(x, w, g, b, m, v):
        wt = jnp.transpose(w, (2, 3, 4, 1, 0))
        y = jax.lax.conv_general_dilated(
            x, wt, window_strides=(1, 1, 1), padding=[(1, 1)] * 3,
            dimension_numbers=("NDHWC", "DHWIO", "NDHWC"))
        y = (y - m) / jnp.sqrt(v + EPS) * g + b
        return jnp.maximum(y, 0.0)

    x = conv_bn_relu(x, params["w1"], params["gamma1"], params["beta1"],
                     params["mean1"], params["var1"])
    x = conv_bn_relu(x, params["w2"], params["gamma2"], params["beta2"],
                     params["mean2"], params["var2"])
    return jnp.transpose(x, (0, 4, 1, 2, 3))


# --------------------------- parameter init ----------------------------------

def init_down_params(key, c_in, c_out):
    ks = jax.random.split(key, 10)
    c_mid = c_out  # DoubleConv3d default: mid_channels = out_channels
    return {
        "w1": 0.1 * jax.random.normal(ks[0], (c_mid, c_in, 3, 3, 3), jnp.float32),
        "gamma1": 1.0 + 0.1 * jax.random.normal(ks[1], (c_mid,), jnp.float32),
        "beta1": 0.1 * jax.random.normal(ks[2], (c_mid,), jnp.float32),
        "mean1": 0.05 * jax.random.normal(ks[3], (c_mid,), jnp.float32),
        "var1": 1.0 + 0.1 * jnp.abs(jax.random.normal(ks[4], (c_mid,), jnp.float32)),
        "w2": 0.1 * jax.random.normal(ks[5], (c_out, c_mid, 3, 3, 3), jnp.float32),
        "gamma2": 1.0 + 0.1 * jax.random.normal(ks[6], (c_out,), jnp.float32),
        "beta2": 0.1 * jax.random.normal(ks[7], (c_out,), jnp.float32),
        "mean2": 0.05 * jax.random.normal(ks[8], (c_out,), jnp.float32),
        "var2": 1.0 + 0.1 * jnp.abs(jax.random.normal(ks[9], (c_out,), jnp.float32)),
    }


# --------------------------- main ---------------------------------------------

if __name__ == "__main__":
    key = jax.random.PRNGKey(0)
    k_x, k_p = jax.random.split(key)

    N, C_IN, C_OUT, S = 2, 4, 8, 16            # Down(4, 8), input 16^3
    x = jax.random.normal(k_x, (N, C_IN, S, S, S), jnp.float32)   # NCDHW (PyTorch)
    params = init_down_params(k_p, C_IN, C_OUT)

    out = jax.block_until_ready(down_forward(x, params))
    assert out.shape == (N, C_OUT, S // 2, S // 2, S // 2), out.shape

    ref = jax.block_until_ready(down_reference(x, params))
    # bf16 operands (f32 accumulation) vs the f32 reference -> small expected
    # drift (~1e-2 abs); tolerances sized accordingly.
    max_abs = float(jnp.max(jnp.abs(out - ref)))
    rel_l2 = float(jnp.linalg.norm(out - ref) / jnp.linalg.norm(ref))
    assert max_abs < 2e-1 and rel_l2 < 5e-2, (max_abs, rel_l2)

    print("KERNEL_OK")
</pallas_src>

<mosaic_0001>
module attributes {stable_mosaic.version = 11 : i64} {
  func.func @_conv3x3x3_bn_relu_kernel(%arg0: i32, %arg1: i32, %arg2: memref<1x1x4x102xbf16, #tpu.memory_space<vmem>>, %arg3: memref<1x1x4x102xbf16, #tpu.memory_space<vmem>>, %arg4: memref<1x1x4x102xbf16, #tpu.memory_space<vmem>>, %arg5: memref<27x8x4xbf16, #tpu.memory_space<vmem>>, %arg6: memref<8x1xf32, #tpu.memory_space<vmem>>, %arg7: memref<1x1x8x80xbf16, #tpu.memory_space<vmem>>) attributes {dimension_semantics = [#tpu.dimension_semantics<parallel>, #tpu.dimension_semantics<parallel>], iteration_bounds = array<i64: 2, 8>, scalar_prefetch = 0 : i64, scratch_operands = 0 : i64, tpu.core_type = #tpu.core_type<tc>, window_params = [{transform_indices = @transform_0, window_bounds = array<i64: 1, 1, 4, 102>}, {transform_indices = @transform_1, window_bounds = array<i64: 1, 1, 4, 102>}, {transform_indices = @transform_2, window_bounds = array<i64: 1, 1, 4, 102>}, {pipeline_mode = #tpu.pipeline_mode<synchronous>, transform_indices = @transform_3, window_bounds = array<i64: 27, 8, 4>}, {pipeline_mode = #tpu.pipeline_mode<synchronous>, transform_indices = @transform_4, window_bounds = array<i64: 8, 1>}, {transform_indices = @transform_5, window_bounds = array<i64: 1, 1, 8, 80>}]} {
    %c0 = arith.constant 0 : index
    %c0_0 = arith.constant 0 : index
    %c0_1 = arith.constant 0 : index
    %c0_2 = arith.constant 0 : index
    %0 = vector.load %arg2[%c0, %c0_0, %c0_1, %c0_2] : memref<1x1x4x102xbf16, #tpu.memory_space<vmem>>, vector<1x1x4x80xbf16>
    %1 = vector.shape_cast %0 : vector<1x1x4x80xbf16> to vector<4x80xbf16>
    %c0_3 = arith.constant 0 : index
    %c0_4 = arith.constant 0 : index
    %c0_5 = arith.constant 0 : index
    %2 = vector.load %arg5[%c0_3, %c0_4, %c0_5] : memref<27x8x4xbf16, #tpu.memory_space<vmem>>, vector<1x8x4xbf16>
    %3 = vector.shape_cast %2 : vector<1x8x4xbf16> to vector<8x4xbf16>
    %cst = arith.constant dense<0.000000e+00> : vector<8x80xf32>
    %4 = tpu.matmul %3, %1, %cst {dimension_numbers = #tpu.dot_dimension_numbers<[1], [0], [0], [1], [0, 0, 1, 1], [], []>} : vector<8x4xbf16>, vector<4x80xbf16>, vector<8x80xf32> -> vector<8x80xf32>
    %c0_6 = arith.constant 0 : index
    %c0_7 = arith.constant 0 : index
    %c0_8 = arith.constant 0 : index
    %c1 = arith.constant 1 : index
    %5 = vector.load %arg2[%c0_6, %c0_7, %c0_8, %c1] : memref<1x1x4x102xbf16, #tpu.memory_space<vmem>>, vector<1x1x4x80xbf16>
    %6 = vector.shape_cast %5 : vector<1x1x4x80xbf16> to vector<4x80xbf16>
    %c1_9 = arith.constant 1 : index
    %c0_10 = arith.constant 0 : index
    %c0_11 = arith.constant 0 : index
    %7 = vector.load %arg5[%c1_9, %c0_10, %c0_11] : memref<27x8x4xbf16, #tpu.memory_space<vmem>>, vector<1x8x4xbf16>
    %8 = vector.shape_cast %7 : vector<1x8x4xbf16> to vector<8x4xbf16>
    %cst_12 = arith.constant dense<0.000000e+00> : vector<8x80xf32>
    %9 = tpu.matmul %8, %6, %cst_12 {dimension_numbers = #tpu.dot_dimension_numbers<[1], [0], [0], [1], [0, 0, 1, 1], [], []>} : vector<8x4xbf16>, vector<4x80xbf16>, vector<8x80xf32> -> vector<8x80xf32>
    %10 = arith.addf %4, %9 : vector<8x80xf32>
    %c0_13 = arith.constant 0 : index
    %c0_14 = arith.constant 0 : index
    %c0_15 = arith.constant 0 : index
    %c2 = arith.constant 2 : index
    %11 = vector.load %arg2[%c0_13, %c0_14, %c0_15, %c2] : memref<1x1x4x102xbf16, #tpu.memory_space<vmem>>, vector<1x1x4x80xbf16>
    %12 = vector.shape_cast %11 : vector<1x1x4x80xbf16> to vector<4x80xbf16>
    %c2_16 = arith.constant 2 : index
    %c0_17 = arith.constant 0 : index
    %c0_18 = arith.constant 0 : index
    %13 = vector.load %arg5[%c2_16, %c0_17, %c0_18] : memref<27x8x4xbf16, #tpu.memory_space<vmem>>, vector<1x8x4xbf16>
    %14 = vector.shape_cast %13 : vector<1x8x4xbf16> to vector<8x4xbf16>
    %cst_19 = arith.constant dense<0.000000e+00> : vector<8x80xf32>
    %15 = tpu.matmul %14, %12, %cst_19 {dimension_numbers = #tpu.dot_dimension_numbers<[1], [0], [0], [1], [0, 0, 1, 1], [], []>} : vector<8x4xbf16>, vector<4x80xbf16>, vector<8x80xf32> -> vector<8x80xf32>
    %16 = arith.addf %10, %15 : vector<8x80xf32>
    %c0_20 = arith.constant 0 : index
    %c0_21 = arith.constant 0 : index
    %c0_22 = arith.constant 0 : index
    %c10 = arith.constant 10 : index
    %17 = vector.load %arg2[%c0_20, %c0_21, %c0_22, %c10] : memref<1x1x4x102xbf16, #tpu.memory_space<vmem>>, vector<1x1x4x80xbf16>
    %18 = vector.shape_cast %17 : vector<1x1x4x80xbf16> to vector<4x80xbf16>
    %c3 = arith.constant 3 : index
    %c0_23 = arith.constant 0 : index
    %c0_24 = arith.constant 0 : index
    %19 = vector.load %arg5[%c3, %c0_23, %c0_24] : memref<27x8x4xbf16, #tpu.memory_space<vmem>>, vector<1x8x4xbf16>
    %20 = vector.shape_cast %19 : vector<1x8x4xbf16> to vector<8x4xbf16>
    %cst_25 = arith.constant dense<0.000000e+00> : vector<8x80xf32>
    %21 = tpu.matmul %20, %18, %cst_25 {dimension_numbers = #tpu.dot_dimension_numbers<[1], [0], [0], [1], [0, 0, 1, 1], [], []>} : vector<8x4xbf16>, vector<4x80xbf16>, vector<8x80xf32> -> vector<8x80xf32>
    %22 = arith.addf %16, %21 : vector<8x80xf32>
    %c0_26 = arith.constant 0 : index
    %c0_27 = arith.constant 0 : index
    %c0_28 = arith.constant 0 : index
    %c11 = arith.constant 11 : index
    %23 = vector.load %arg2[%c0_26, %c0_27, %c0_28, %c11] : memref<1x1x4x102xbf16, #tpu.memory_space<vmem>>, vector<1x1x4x80xbf16>
    %24 = vector.shape_cast %23 : vector<1x1x4x80xbf16> to vector<4x80xbf16>
    %c4 = arith.constant 4 : index
    %c0_29 = arith.constant 0 : index
    %c0_30 = arith.constant 0 : index
    %25 = vector.load %arg5[%c4, %c0_29, %c0_30] : memref<27x8x4xbf16, #tpu.memory_space<vmem>>, vector<1x8x4xbf16>
    %26 = vector.shape_cast %25 : vector<1x8x4xbf16> to vector<8x4xbf16>
    %cst_31 = arith.constant dense<0.000000e+00> : vector<8x80xf32>
    %27 = tpu.matmul %26, %24, %cst_31 {dimension_numbers = #tpu.dot_dimension_numbers<[1], [0], [0], [1], [0, 0, 1, 1], [], []>} : vector<8x4xbf16>, vector<4x80xbf16>, vector<8x80xf32> -> vector<8x80xf32>
    %28 = arith.addf %22, %27 : vector<8x80xf32>
    %c0_32 = arith.constant 0 : index
    %c0_33 = arith.constant 0 : index
    %c0_34 = arith.constant 0 : index
    %c12 = arith.constant 12 : index
    %29 = vector.load %arg2[%c0_32, %c0_33, %c0_34, %c12] : memref<1x1x4x102xbf16, #tpu.memory_space<vmem>>, vector<1x1x4x80xbf16>
    %30 = vector.shape_cast %29 : vector<1x1x4x80xbf16> to vector<4x80xbf16>
    %c5 = arith.constant 5 : index
    %c0_35 = arith.constant 0 : index
    %c0_36 = arith.constant 0 : index
    %31 = vector.load %arg5[%c5, %c0_35, %c0_36] : memref<27x8x4xbf16, #tpu.memory_space<vmem>>, vector<1x8x4xbf16>
    %32 = vector.shape_cast %31 : vector<1x8x4xbf16> to vector<8x4xbf16>
    %cst_37 = arith.constant dense<0.000000e+00> : vector<8x80xf32>
    %33 = tpu.matmul %32, %30, %cst_37 {dimension_numbers = #tpu.dot_dimension_numbers<[1], [0], [0], [1], [0, 0, 1, 1], [], []>} : vector<8x4xbf16>, vector<4x80xbf16>, vector<8x80xf32> -> vector<8x80xf32>
    %34 = arith.addf %28, %33 : vector<8x80xf32>
    %c0_38 = arith.constant 0 : index
    %c0_39 = arith.constant 0 : index
    %c0_40 = arith.constant 0 : index
    %c20 = arith.constant 20 : index
    %35 = vector.load %arg2[%c0_38, %c0_39, %c0_40, %c20] : memref<1x1x4x102xbf16, #tpu.memory_space<vmem>>, vector<1x1x4x80xbf16>
    %36 = vector.shape_cast %35 : vector<1x1x4x80xbf16> to vector<4x80xbf16>
    %c6 = arith.constant 6 : index
    %c0_41 = arith.constant 0 : index
    %c0_42 = arith.constant 0 : index
    %37 = vector.load %arg5[%c6, %c0_41, %c0_42] : memref<27x8x4xbf16, #tpu.memory_space<vmem>>, vector<1x8x4xbf16>
    %38 = vector.shape_cast %37 : vector<1x8x4xbf16> to vector<8x4xbf16>
    %cst_43 = arith.constant dense<0.000000e+00> : vector<8x80xf32>
    %39 = tpu.matmul %38, %36, %cst_43 {dimension_numbers = #tpu.dot_dimension_numbers<[1], [0], [0], [1], [0, 0, 1, 1], [], []>} : vector<8x4xbf16>, vector<4x80xbf16>, vector<8x80xf32> -> vector<8x80xf32>
    %40 = arith.addf %34, %39 : vector<8x80xf32>
    %c0_44 = arith.constant 0 : index
    %c0_45 = arith.constant 0 : index
    %c0_46 = arith.constant 0 : index
    %c21 = arith.constant 21 : index
    %41 = vector.load %arg2[%c0_44, %c0_45, %c0_46, %c21] : memref<1x1x4x102xbf16, #tpu.memory_space<vmem>>, vector<1x1x4x80xbf16>
    %42 = vector.shape_cast %41 : vector<1x1x4x80xbf16> to vector<4x80xbf16>
    %c7 = arith.constant 7 : index
    %c0_47 = arith.constant 0 : index
    %c0_48 = arith.constant 0 : index
    %43 = vector.load %arg5[%c7, %c0_47, %c0_48] : memref<27x8x4xbf16, #tpu.memory_space<vmem>>, vector<1x8x4xbf16>
    %44 = vector.shape_cast %43 : vector<1x8x4xbf16> to vector<8x4xbf16>
    %cst_49 = arith.constant dense<0.000000e+00> : vector<8x80xf32>
    %45 = tpu.matmul %44, %42, %cst_49 {dimension_numbers = #tpu.dot_dimension_numbers<[1], [0], [0], [1], [0, 0, 1, 1], [], []>} : vector<8x4xbf16>, vector<4x80xbf16>, vector<8x80xf32> -> vector<8x80xf32>
    %46 = arith.addf %40, %45 : vector<8x80xf32>
    %c0_50 = arith.constant 0 : index
    %c0_51 = arith.constant 0 : index
    %c0_52 = arith.constant 0 : index
    %c22 = arith.constant 22 : index
    %47 = vector.load %arg2[%c0_50, %c0_51, %c0_52, %c22] : memref<1x1x4x102xbf16, #tpu.memory_space<vmem>>, vector<1x1x4x80xbf16>
    %48 = vector.shape_cast %47 : vector<1x1x4x80xbf16> to vector<4x80xbf16>
    %c8 = arith.constant 8 : index
    %c0_53 = arith.constant 0 : index
    %c0_54 = arith.constant 0 : index
    %49 = vector.load %arg5[%c8, %c0_53, %c0_54] : memref<27x8x4xbf16, #tpu.memory_space<vmem>>, vector<1x8x4xbf16>
    %50 = vector.shape_cast %49 : vector<1x8x4xbf16> to vector<8x4xbf16>
    %cst_55 = arith.constant dense<0.000000e+00> : vector<8x80xf32>
    %51 = tpu.matmul %50, %48, %cst_55 {dimension_numbers = #tpu.dot_dimension_numbers<[1], [0], [0], [1], [0, 0, 1, 1], [], []>} : vector<8x4xbf16>, vector<4x80xbf16>, vector<8x80xf32> -> vector<8x80xf32>
    %52 = arith.addf %46, %51 : vector<8x80xf32>
    %c0_56 = arith.constant 0 : index
    %c0_57 = arith.constant 0 : index
    %c0_58 = arith.constant 0 : index
    %c0_59 = arith.constant 0 : index
    %53 = vector.load %arg3[%c0_56, %c0_57, %c0_58, %c0_59] : memref<1x1x4x102xbf16, #tpu.memory_space<vmem>>, vector<1x1x4x80xbf16>
    %54 = vector.shape_cast %53 : vector<1x1x4x80xbf16> to vector<4x80xbf16>
    %c9 = arith.constant 9 : index
    %c0_60 = arith.constant 0 : index
    %c0_61 = arith.constant 0 : index
    %55 = vector.load %arg5[%c9, %c0_60, %c0_61] : memref<27x8x4xbf16, #tpu.memory_space<vmem>>, vector<1x8x4xbf16>
    %56 = vector.shape_cast %55 : vector<1x8x4xbf16> to vector<8x4xbf16>
    %cst_62 = arith.constant dense<0.000000e+00> : vector<8x80xf32>
    %57 = tpu.matmul %56, %54, %cst_62 {dimension_numbers = #tpu.dot_dimension_numbers<[1], [0], [0], [1], [0, 0, 1, 1], [], []>} : vector<8x4xbf16>, vector<4x80xbf16>, vector<8x80xf32> -> vector<8x80xf32>
    %58 = arith.addf %52, %57 : vector<8x80xf32>
    %c0_63 = arith.constant 0 : index
    %c0_64 = arith.constant 0 : index
    %c0_65 = arith.constant 0 : index
    %c1_66 = arith.constant 1 : index
    %59 = vector.load %arg3[%c0_63, %c0_64, %c0_65, %c1_66] : memref<1x1x4x102xbf16, #tpu.memory_space<vmem>>, vector<1x1x4x80xbf16>
    %60 = vector.shape_cast %59 : vector<1x1x4x80xbf16> to vector<4x80xbf16>
    %c10_67 = arith.constant 10 : index
    %c0_68 = arith.constant 0 : index
    %c0_69 = arith.constant 0 : index
    %61 = vector.load %arg5[%c10_67, %c0_68, %c0_69] : memref<27x8x4xbf16, #tpu.memory_space<vmem>>, vector<1x8x4xbf16>
    %62 = vector.shape_cast %61 : vector<1x8x4xbf16> to vector<8x4xbf16>
    %cst_70 = arith.constant dense<0.000000e+00> : vector<8x80xf32>
    %63 = tpu.matmul %62, %60, %cst_70 {dimension_numbers = #tpu.dot_dimension_numbers<[1], [0], [0], [1], [0, 0, 1, 1], [], []>} : vector<8x4xbf16>, vector<4x80xbf16>, vector<8x80xf32> -> vector<8x80xf32>
    %64 = arith.addf %58, %63 : vector<8x80xf32>
    %c0_71 = arith.constant 0 : index
    %c0_72 = arith.constant 0 : index
    %c0_73 = arith.constant 0 : index
    %c2_74 = arith.constant 2 : index
    %65 = vector.load %arg3[%c0_71, %c0_72, %c0_73, %c2_74] : memref<1x1x4x102xbf16, #tpu.memory_space<vmem>>, vector<1x1x4x80xbf16>
    %66 = vector.shape_cast %65 : vector<1x1x4x80xbf16> to vector<4x80xbf16>
    %c11_75 = arith.constant 11 : index
    %c0_76 = arith.constant 0 : index
    %c0_77 = arith.constant 0 : index
    %67 = vector.load %arg5[%c11_75, %c0_76, %c0_77] : memref<27x8x4xbf16, #tpu.memory_space<vmem>>, vector<1x8x4xbf16>
    %68 = vector.shape_cast %67 : vector<1x8x4xbf16> to vector<8x4xbf16>
    %cst_78 = arith.constant dense<0.000000e+00> : vector<8x80xf32>
    %69 = tpu.matmul %68, %66, %cst_78 {dimension_numbers = #tpu.dot_dimension_numbers<[1], [0], [0], [1], [0, 0, 1, 1], [], []>} : vector<8x4xbf16>, vector<4x80xbf16>, vector<8x80xf32> -> vector<8x80xf32>
    %70 = arith.addf %64, %69 : vector<8x80xf32>
    %c0_79 = arith.constant 0 : index
    %c0_80 = arith.constant 0 : index
    %c0_81 = arith.constant 0 : index
    %c10_82 = arith.constant 10 : index
    %71 = vector.load %arg3[%c0_79, %c0_80, %c0_81, %c10_82] : memref<1x1x4x102xbf16, #tpu.memory_space<vmem>>, vector<1x1x4x80xbf16>
    %72 = vector.shape_cast %71 : vector<1x1x4x80xbf16> to vector<4x80xbf16>
    %c12_83 = arith.constant 12 : index
    %c0_84 = arith.constant 0 : index
    %c0_85 = arith.constant 0 : index
    %73 = vector.load %arg5[%c12_83, %c0_84, %c0_85] : memref<27x8x4xbf16, #tpu.memory_space<vmem>>, vector<1x8x4xbf16>
    %74 = vector.shape_cast %73 : vector<1x8x4xbf16> to vector<8x4xbf16>
    %cst_86 = arith.constant dense<0.000000e+00> : vector<8x80xf32>
    %75 = tpu.matmul %74, %72, %cst_86 {dimension_numbers = #tpu.dot_dimension_numbers<[1], [0], [0], [1], [0, 0, 1, 1], [], []>} : vector<8x4xbf16>, vector<4x80xbf16>, vector<8x80xf32> -> vector<8x80xf32>
    %76 = arith.addf %70, %75 : vector<8x80xf32>
    %c0_87 = arith.constant 0 : index
    %c0_88 = arith.constant 0 : index
    %c0_89 = arith.constant 0 : index
    %c11_90 = arith.constant 11 : index
    %77 = vector.load %arg3[%c0_87, %c0_88, %c0_89, %c11_90] : memref<1x1x4x102xbf16, #tpu.memory_space<vmem>>, vector<1x1x4x80xbf16>
    %78 = vector.shape_cast %77 : vector<1x1x4x80xbf16> to vector<4x80xbf16>
    %c13 = arith.constant 13 : index
    %c0_91 = arith.constant 0 : index
    %c0_92 = arith.constant 0 : index
    %79 = vector.load %arg5[%c13, %c0_91, %c0_92] : memref<27x8x4xbf16, #tpu.memory_space<vmem>>, vector<1x8x4xbf16>
    %80 = vector.shape_cast %79 : vector<1x8x4xbf16> to vector<8x4xbf16>
    %cst_93 = arith.constant dense<0.000000e+00> : vector<8x80xf32>
    %81 = tpu.matmul %80, %78, %cst_93 {dimension_numbers = #tpu.dot_dimension_numbers<[1], [0], [0], [1], [0, 0, 1, 1], [], []>} : vector<8x4xbf16>, vector<4x80xbf16>, vector<8x80xf32> -> vector<8x80xf32>
    %82 = arith.addf %76, %81 : vector<8x80xf32>
    %c0_94 = arith.constant 0 : index
    %c0_95 = arith.constant 0 : index
    %c0_96 = arith.constant 0 : index
    %c12_97 = arith.constant 12 : index
    %83 = vector.load %arg3[%c0_94, %c0_95, %c0_96, %c12_97] : memref<1x1x4x102xbf16, #tpu.memory_space<vmem>>, vector<1x1x4x80xbf16>
    %84 = vector.shape_cast %83 : vector<1x1x4x80xbf16> to vector<4x80xbf16>
    %c14 = arith.constant 14 : index
    %c0_98 = arith.constant 0 : index
    %c0_99 = arith.constant 0 : index
    %85 = vector.load %arg5[%c14, %c0_98, %c0_99] : memref<27x8x4xbf16, #tpu.memory_space<vmem>>, vector<1x8x4xbf16>
    %86 = vector.shape_cast %85 : vector<1x8x4xbf16> to vector<8x4xbf16>
    %cst_100 = arith.constant dense<0.000000e+00> : vector<8x80xf32>
    %87 = tpu.matmul %86, %84, %cst_100 {dimension_numbers = #tpu.dot_dimension_numbers<[1], [0], [0], [1], [0, 0, 1, 1], [], []>} : vector<8x4xbf16>, vector<4x80xbf16>, vector<8x80xf32> -> vector<8x80xf32>
    %88 = arith.addf %82, %87 : vector<8x80xf32>
    %c0_101 = arith.constant 0 : index
    %c0_102 = arith.constant 0 : index
    %c0_103 = arith.constant 0 : index
    %c20_104 = arith.constant 20 : index
    %89 = vector.load %arg3[%c0_101, %c0_102, %c0_103, %c20_104] : memref<1x1x4x102xbf16, #tpu.memory_space<vmem>>, vector<1x1x4x80xbf16>
    %90 = vector.shape_cast %89 : vector<1x1x4x80xbf16> to vector<4x80xbf16>
    %c15 = arith.constant 15 : index
    %c0_105 = arith.constant 0 : index
    %c0_106 = arith.constant 0 : index
    %91 = vector.load %arg5[%c15, %c0_105, %c0_106] : memref<27x8x4xbf16, #tpu.memory_space<vmem>>, vector<1x8x4xbf16>
    %92 = vector.shape_cast %91 : vector<1x8x4xbf16> to vector<8x4xbf16>
    %cst_107 = arith.constant dense<0.000000e+00> : vector<8x80xf32>
    %93 = tpu.matmul %92, %90, %cst_107 {dimension_numbers = #tpu.dot_dimension_numbers<[1], [0], [0], [1], [0, 0, 1, 1], [], []>} : vector<8x4xbf16>, vector<4x80xbf16>, vector<8x80xf32> -> vector<8x80xf32>
    %94 = arith.addf %88, %93 : vector<8x80xf32>
    %c0_108 = arith.constant 0 : index
    %c0_109 = arith.constant 0 : index
    %c0_110 = arith.constant 0 : index
    %c21_111 = arith.constant 21 : index
    %95 = vector.load %arg3[%c0_108, %c0_109, %c0_110, %c21_111] : memref<1x1x4x102xbf16, #tpu.memory_space<vmem>>, vector<1x1x4x80xbf16>
    %96 = vector.shape_cast %95 : vector<1x1x4x80xbf16> to vector<4x80xbf16>
    %c16 = arith.constant 16 : index
    %c0_112 = arith.constant 0 : index
    %c0_113 = arith.constant 0 : index
    %97 = vector.load %arg5[%c16, %c0_112, %c0_113] : memref<27x8x4xbf16, #tpu.memory_space<vmem>>, vector<1x8x4xbf16>
    %98 = vector.shape_cast %97 : vector<1x8x4xbf16> to vector<8x4xbf16>
    %cst_114 = arith.constant dense<0.000000e+00> : vector<8x80xf32>
    %99 = tpu.matmul %98, %96, %cst_114 {dimension_numbers = #tpu.dot_dimension_numbers<[1], [0], [0], [1], [0, 0, 1, 1], [], []>} : vector<8x4xbf16>, vector<4x80xbf16>, vector<8x80xf32> -> vector<8x80xf32>
    %100 = arith.addf %94, %99 : vector<8x80xf32>
    %c0_115 = arith.constant 0 : index
    %c0_116 = arith.constant 0 : index
    %c0_117 = arith.constant 0 : index
    %c22_118 = arith.constant 22 : index
    %101 = vector.load %arg3[%c0_115, %c0_116, %c0_117, %c22_118] : memref<1x1x4x102xbf16, #tpu.memory_space<vmem>>, vector<1x1x4x80xbf16>
    %102 = vector.shape_cast %101 : vector<1x1x4x80xbf16> to vector<4x80xbf16>
    %c17 = arith.constant 17 : index
    %c0_119 = arith.constant 0 : index
    %c0_120 = arith.constant 0 : index
    %103 = vector.load %arg5[%c17, %c0_119, %c0_120] : memref<27x8x4xbf16, #tpu.memory_space<vmem>>, vector<1x8x4xbf16>
    %104 = vector.shape_cast %103 : vector<1x8x4xbf16> to vector<8x4xbf16>
    %cst_121 = arith.constant dense<0.000000e+00> : vector<8x80xf32>
    %105 = tpu.matmul %104, %102, %cst_121 {dimension_numbers = #tpu.dot_dimension_numbers<[1], [0], [0], [1], [0, 0, 1, 1], [], []>} : vector<8x4xbf16>, vector<4x80xbf16>, vector<8x80xf32> -> vector<8x80xf32>
    %106 = arith.addf %100, %105 : vector<8x80xf32>
    %c0_122 = arith.constant 0 : index
    %c0_123 = arith.constant 0 : index
    %c0_124 = arith.constant 0 : index
    %c0_125 = arith.constant 0 : index
    %107 = vector.load %arg4[%c0_122, %c0_123, %c0_124, %c0_125] : memref<1x1x4x102xbf16, #tpu.memory_space<vmem>>, vector<1x1x4x80xbf16>
    %108 = vector.shape_cast %107 : vector<1x1x4x80xbf16> to vector<4x80xbf16>
    %c18 = arith.constant 18 : index
    %c0_126 = arith.constant 0 : index
    %c0_127 = arith.constant 0 : index
    %109 = vector.load %arg5[%c18, %c0_126, %c0_127] : memref<27x8x4xbf16, #tpu.memory_space<vmem>>, vector<1x8x4xbf16>
    %110 = vector.shape_cast %109 : vector<1x8x4xbf16> to vector<8x4xbf16>
    %cst_128 = arith.constant dense<0.000000e+00> : vector<8x80xf32>
    %111 = tpu.matmul %110, %108, %cst_128 {dimension_numbers = #tpu.dot_dimension_numbers<[1], [0], [0], [1], [0, 0, 1, 1], [], []>} : vector<8x4xbf16>, vector<4x80xbf16>, vector<8x80xf32> -> vector<8x80xf32>
    %112 = arith.addf %106, %111 : vector<8x80xf32>
    %c0_129 = arith.constant 0 : index
    %c0_130 = arith.constant 0 : index
    %c0_131 = arith.constant 0 : index
    %c1_132 = arith.constant 1 : index
    %113 = vector.load %arg4[%c0_129, %c0_130, %c0_131, %c1_132] : memref<1x1x4x102xbf16, #tpu.memory_space<vmem>>, vector<1x1x4x80xbf16>
    %114 = vector.shape_cast %113 : vector<1x1x4x80xbf16> to vector<4x80xbf16>
    %c19 = arith.constant 19 : index
    %c0_133 = arith.constant 0 : index
    %c0_134 = arith.constant 0 : index
    %115 = vector.load %arg5[%c19, %c0_133, %c0_134] : memref<27x8x4xbf16, #tpu.memory_space<vmem>>, vector<1x8x4xbf16>
    %116 = vector.shape_cast %115 : vector<1x8x4xbf16> to vector<8x4xbf16>
    %cst_135 = arith.constant dense<0.000000e+00> : vector<8x80xf32>
    %117 = tpu.matmul %116, %114, %cst_135 {dimension_numbers = #tpu.dot_dimension_numbers<[1], [0], [0], [1], [0, 0, 1, 1], [], []>} : vector<8x4xbf16>, vector<4x80xbf16>, vector<8x80xf32> -> vector<8x80xf32>
    %118 = arith.addf %112, %117 : vector<8x80xf32>
    %c0_136 = arith.constant 0 : index
    %c0_137 = arith.constant 0 : index
    %c0_138 = arith.constant 0 : index
    %c2_139 = arith.constant 2 : index
    %119 = vector.load %arg4[%c0_136, %c0_137, %c0_138, %c2_139] : memref<1x1x4x102xbf16, #tpu.memory_space<vmem>>, vector<1x1x4x80xbf16>
    %120 = vector.shape_cast %119 : vector<1x1x4x80xbf16> to vector<4x80xbf16>
    %c20_140 = arith.constant 20 : index
    %c0_141 = arith.constant 0 : index
    %c0_142 = arith.constant 0 : index
    %121 = vector.load %arg5[%c20_140, %c0_141, %c0_142] : memref<27x8x4xbf16, #tpu.memory_space<vmem>>, vector<1x8x4xbf16>
    %122 = vector.shape_cast %121 : vector<1x8x4xbf16> to vector<8x4xbf16>
    %cst_143 = arith.constant dense<0.000000e+00> : vector<8x80xf32>
    %123 = tpu.matmul %122, %120, %cst_143 {dimension_numbers = #tpu.dot_dimension_numbers<[1], [0], [0], [1], [0, 0, 1, 1], [], []>} : vector<8x4xbf16>, vector<4x80xbf16>, vector<8x80xf32> -> vector<8x80xf32>
    %124 = arith.addf %118, %123 : vector<8x80xf32>
    %c0_144 = arith.constant 0 : index
    %c0_145 = arith.constant 0 : index
    %c0_146 = arith.constant 0 : index
    %c10_147 = arith.constant 10 : index
    %125 = vector.load %arg4[%c0_144, %c0_145, %c0_146, %c10_147] : memref<1x1x4x102xbf16, #tpu.memory_space<vmem>>, vector<1x1x4x80xbf16>
    %126 = vector.shape_cast %125 : vector<1x1x4x80xbf16> to vector<4x80xbf16>
    %c21_148 = arith.constant 21 : index
    %c0_149 = arith.constant 0 : index
    %c0_150 = arith.constant 0 : index
    %127 = vector.load %arg5[%c21_148, %c0_149, %c0_150] : memref<27x8x4xbf16, #tpu.memory_space<vmem>>, vector<1x8x4xbf16>
    %128 = vector.shape_cast %127 : vector<1x8x4xbf16> to vector<8x4xbf16>
    %cst_151 = arith.constant dense<0.000000e+00> : vector<8x80xf32>
    %129 = tpu.matmul %128, %126, %cst_151 {dimension_numbers = #tpu.dot_dimension_numbers<[1], [0], [0], [1], [0, 0, 1, 1], [], []>} : vector<8x4xbf16>, vector<4x80xbf16>, vector<8x80xf32> -> vector<8x80xf32>
    %130 = arith.addf %124, %129 : vector<8x80xf32>
    %c0_152 = arith.constant 0 : index
    %c0_153 = arith.constant 0 : index
    %c0_154 = arith.constant 0 : index
    %c11_155 = arith.constant 11 : index
    %131 = vector.load %arg4[%c0_152, %c0_153, %c0_154, %c11_155] : memref<1x1x4x102xbf16, #tpu.memory_space<vmem>>, vector<1x1x4x80xbf16>
    %132 = vector.shape_cast %131 : vector<1x1x4x80xbf16> to vector<4x80xbf16>
    %c22_156 = arith.constant 22 : index
    %c0_157 = arith.constant 0 : index
    %c0_158 = arith.constant 0 : index
    %133 = vector.load %arg5[%c22_156, %c0_157, %c0_158] : memref<27x8x4xbf16, #tpu.memory_space<vmem>>, vector<1x8x4xbf16>
    %134 = vector.shape_cast %133 : vector<1x8x4xbf16> to vector<8x4xbf16>
    %cst_159 = arith.constant dense<0.000000e+00> : vector<8x80xf32>
    %135 = tpu.matmul %134, %132, %cst_159 {dimension_numbers = #tpu.dot_dimension_numbers<[1], [0], [0], [1], [0, 0, 1, 1], [], []>} : vector<8x4xbf16>, vector<4x80xbf16>, vector<8x80xf32> -> vector<8x80xf32>
    %136 = arith.addf %130, %135 : vector<8x80xf32>
    %c0_160 = arith.constant 0 : index
    %c0_161 = arith.constant 0 : index
    %c0_162 = arith.constant 0 : index
    %c12_163 = arith.constant 12 : index
    %137 = vector.load %arg4[%c0_160, %c0_161, %c0_162, %c12_163] : memref<1x1x4x102xbf16, #tpu.memory_space<vmem>>, vector<1x1x4x80xbf16>
    %138 = vector.shape_cast %137 : vector<1x1x4x80xbf16> to vector<4x80xbf16>
    %c23 = arith.constant 23 : index
    %c0_164 = arith.constant 0 : index
    %c0_165 = arith.constant 0 : index
    %139 = vector.load %arg5[%c23, %c0_164, %c0_165] : memref<27x8x4xbf16, #tpu.memory_space<vmem>>, vector<1x8x4xbf16>
    %140 = vector.shape_cast %139 : vector<1x8x4xbf16> to vector<8x4xbf16>
    %cst_166 = arith.constant dense<0.000000e+00> : vector<8x80xf32>
    %141 = tpu.matmul %140, %138, %cst_166 {dimension_numbers = #tpu.dot_dimension_numbers<[1], [0], [0], [1], [0, 0, 1, 1], [], []>} : vector<8x4xbf16>, vector<4x80xbf16>, vector<8x80xf32> -> vector<8x80xf32>
    %142 = arith.addf %136, %141 : vector<8x80xf32>
    %c0_167 = arith.constant 0 : index
    %c0_168 = arith.constant 0 : index
    %c0_169 = arith.constant 0 : index
    %c20_170 = arith.constant 20 : index
    %143 = vector.load %arg4[%c0_167, %c0_168, %c0_169, %c20_170] : memref<1x1x4x102xbf16, #tpu.memory_space<vmem>>, vector<1x1x4x80xbf16>
    %144 = vector.shape_cast %143 : vector<1x1x4x80xbf16> to vector<4x80xbf16>
    %c24 = arith.constant 24 : index
    %c0_171 = arith.constant 0 : index
    %c0_172 = arith.constant 0 : index
    %145 = vector.load %arg5[%c24, %c0_171, %c0_172] : memref<27x8x4xbf16, #tpu.memory_space<vmem>>, vector<1x8x4xbf16>
    %146 = vector.shape_cast %145 : vector<1x8x4xbf16> to vector<8x4xbf16>
    %cst_173 = arith.constant dense<0.000000e+00> : vector<8x80xf32>
    %147 = tpu.matmul %146, %144, %cst_173 {dimension_numbers = #tpu.dot_dimension_numbers<[1], [0], [0], [1], [0, 0, 1, 1], [], []>} : vector<8x4xbf16>, vector<4x80xbf16>, vector<8x80xf32> -> vector<8x80xf32>
    %148 = arith.addf %142, %147 : vector<8x80xf32>
    %c0_174 = arith.constant 0 : index
    %c0_175 = arith.constant 0 : index
    %c0_176 = arith.constant 0 : index
    %c21_177 = arith.constant 21 : index
    %149 = vector.load %arg4[%c0_174, %c0_175, %c0_176, %c21_177] : memref<1x1x4x102xbf16, #tpu.memory_space<vmem>>, vector<1x1x4x80xbf16>
    %150 = vector.shape_cast %149 : vector<1x1x4x80xbf16> to vector<4x80xbf16>
    %c25 = arith.constant 25 : index
    %c0_178 = arith.constant 0 : index
    %c0_179 = arith.constant 0 : index
    %151 = vector.load %arg5[%c25, %c0_178, %c0_179] : memref<27x8x4xbf16, #tpu.memory_space<vmem>>, vector<1x8x4xbf16>
    %152 = vector.shape_cast %151 : vector<1x8x4xbf16> to vector<8x4xbf16>
    %cst_180 = arith.constant dense<0.000000e+00> : vector<8x80xf32>
    %153 = tpu.matmul %152, %150, %cst_180 {dimension_numbers = #tpu.dot_dimension_numbers<[1], [0], [0], [1], [0, 0, 1, 1], [], []>} : vector<8x4xbf16>, vector<4x80xbf16>, vector<8x80xf32> -> vector<8x80xf32>
    %154 = arith.addf %148, %153 : vector<8x80xf32>
    %c0_181 = arith.constant 0 : index
    %c0_182 = arith.constant 0 : index
    %c0_183 = arith.constant 0 : index
    %c22_184 = arith.constant 22 : index
    %155 = vector.load %arg4[%c0_181, %c0_182, %c0_183, %c22_184] : memref<1x1x4x102xbf16, #tpu.memory_space<vmem>>, vector<1x1x4x80xbf16>
    %156 = vector.shape_cast %155 : vector<1x1x4x80xbf16> to vector<4x80xbf16>
    %c26 = arith.constant 26 : index
    %c0_185 = arith.constant 0 : index
    %c0_186 = arith.constant 0 : index
    %157 = vector.load %arg5[%c26, %c0_185, %c0_186] : memref<27x8x4xbf16, #tpu.memory_space<vmem>>, vector<1x8x4xbf16>
    %158 = vector.shape_cast %157 : vector<1x8x4xbf16> to vector<8x4xbf16>
    %cst_187 = arith.constant dense<0.000000e+00> : vector<8x80xf32>
    %159 = tpu.matmul %158, %156, %cst_187 {dimension_numbers = #tpu.dot_dimension_numbers<[1], [0], [0], [1], [0, 0, 1, 1], [], []>} : vector<8x4xbf16>, vector<4x80xbf16>, vector<8x80xf32> -> vector<8x80xf32>
    %160 = arith.addf %154, %159 : vector<8x80xf32>
    %c0_188 = arith.constant 0 : index
    %c0_189 = arith.constant 0 : index
    %161 = vector.load %arg6[%c0_188, %c0_189] : memref<8x1xf32, #tpu.memory_space<vmem>>, vector<8x1xf32>
    %162 = vector.broadcast %161 : vector<8x1xf32> to vector<8x80xf32>
    %163 = arith.addf %160, %162 : vector<8x80xf32>
    %cst_190 = arith.constant 0.000000e+00 : f32
    %164 = vector.broadcast %cst_190 : f32 to vector<8x80xf32>
    %165 = arith.maximumf %163, %164 : vector<8x80xf32>
    %166 = arith.truncf %165 : vector<8x80xf32> to vector<8x80xbf16>
    %c0_191 = arith.constant 0 : index
    %c0_192 = arith.constant 0 : index
    %c0_193 = arith.constant 0 : index
    %c0_194 = arith.constant 0 : index
    %167 = vector.load %arg7[%c0_191, %c0_192, %c0_193, %c0_194] : memref<1x1x8x80xbf16, #tpu.memory_space<vmem>>, vector<1x1x8x80xbf16>
    %168 = vector.shape_cast %167 : vector<1x1x8x80xbf16> to vector<8x80xbf16>
    %169 = vector.shape_cast %166 : vector<8x80xbf16> to vector<1x1x8x80xbf16>
    tpu.vector_store %arg7[%c0_191, %c0_192, %c0_193, %c0_194], %169 {strides = array<i32>} : memref<1x1x8x80xbf16, #tpu.memory_space<vmem>>, vector<1x1x8x80xbf16>,
    return
  }
  func.func @transform_0(%arg0: i32, %arg1: i32) -> (i32, i32, i32, i32) {
    %c0_i32 = arith.constant 0 : i32
    %0 = arith.addi %arg1, %c0_i32 : i32
    %c0_i32_0 = arith.constant 0 : i32
    %c0_i32_1 = arith.constant 0 : i32
    %c0_i32_2 = arith.constant 0 : i32
    return %arg0, %0, %c0_i32_0, %c0_i32_1 : i32, i32, i32, i32
  }
  func.func @transform_1(%arg0: i32, %arg1: i32) -> (i32, i32, i32, i32) {
    %c1_i32 = arith.constant 1 : i32
    %0 = arith.addi %arg1, %c1_i32 : i32
    %c0_i32 = arith.constant 0 : i32
    %c0_i32_0 = arith.constant 0 : i32
    %c0_i32_1 = arith.constant 0 : i32
    return %arg0, %0, %c0_i32, %c0_i32_0 : i32, i32, i32, i32
  }
  func.func @transform_2(%arg0: i32, %arg1: i32) -> (i32, i32, i32, i32) {
    %c2_i32 = arith.constant 2 : i32
    %0 = arith.addi %arg1, %c2_i32 : i32
    %c0_i32 = arith.constant 0 : i32
    %c0_i32_0 = arith.constant 0 : i32
    %c0_i32_1 = arith.constant 0 : i32
    return %arg0, %0, %c0_i32, %c0_i32_0 : i32, i32, i32, i32
  }
  func.func @transform_3(%arg0: i32, %arg1: i32) -> (i32, i32, i32) {
    %c0_i32 = arith.constant 0 : i32
    %c0_i32_0 = arith.constant 0 : i32
    %c0_i32_1 = arith.constant 0 : i32
    %c0_i32_2 = arith.constant 0 : i32
    return %c0_i32, %c0_i32_0, %c0_i32_1 : i32, i32, i32
  }
  func.func @transform_4(%arg0: i32, %arg1: i32) -> (i32, i32) {
    %c0_i32 = arith.constant 0 : i32
    %c0_i32_0 = arith.constant 0 : i32
    %c0_i32_1 = arith.constant 0 : i32
    return %c0_i32, %c0_i32_0 : i32, i32
  }
  func.func @transform_5(%arg0: i32, %arg1: i32) -> (i32, i32, i32, i32) {
    %c0_i32 = arith.constant 0 : i32
    %c0_i32_0 = arith.constant 0 : i32
    %c0_i32_1 = arith.constant 0 : i32
    return %arg0, %arg1, %c0_i32, %c0_i32_0 : i32, i32, i32, i32
  }
}

module attributes {stable_mosaic.version = 11 : i64} {
  func.func @_conv3x3x3_bn_relu_kernel(%arg0: i32, %arg1: i32, %arg2: memref<1x1x8x102xbf16, #tpu.memory_space<vmem>>, %arg3: memref<1x1x8x102xbf16, #tpu.memory_space<vmem>>, %arg4: memref<1x1x8x102xbf16, #tpu.memory_space<vmem>>, %arg5: memref<27x8x8xbf16, #tpu.memory_space<vmem>>, %arg6: memref<8x1xf32, #tpu.memory_space<vmem>>, %arg7: memref<1x1x8x80xf32, #tpu.memory_space<vmem>>) attributes {dimension_semantics = [#tpu.dimension_semantics<parallel>, #tpu.dimension_semantics<parallel>], iteration_bounds = array<i64: 2, 8>, scalar_prefetch = 0 : i64, scratch_operands = 0 : i64, tpu.core_type = #tpu.core_type<tc>, window_params = [{transform_indices = @transform_0, window_bounds = array<i64: 1, 1, 8, 102>}, {transform_indices = @transform_1, window_bounds = array<i64: 1, 1, 8, 102>}, {transform_indices = @transform_2, window_bounds = array<i64: 1, 1, 8, 102>}, {pipeline_mode = #tpu.pipeline_mode<synchronous>, transform_indices = @transform_3, window_bounds = array<i64: 27, 8, 8>}, {pipeline_mode = #tpu.pipeline_mode<synchronous>, transform_indices = @transform_4, window_bounds = array<i64: 8, 1>}, {transform_indices = @transform_5, window_bounds = array<i64: 1, 1, 8, 80>}]} {
    %c0 = arith.constant 0 : index
    %c0_0 = arith.constant 0 : index
    %c0_1 = arith.constant 0 : index
    %c0_2 = arith.constant 0 : index
    %0 = vector.load %arg2[%c0, %c0_0, %c0_1, %c0_2] : memref<1x1x8x102xbf16, #tpu.memory_space<vmem>>, vector<1x1x8x80xbf16>
    %1 = vector.shape_cast %0 : vector<1x1x8x80xbf16> to vector<8x80xbf16>
    %c0_3 = arith.constant 0 : index
    %c0_4 = arith.constant 0 : index
    %c0_5 = arith.constant 0 : index
    %2 = vector.load %arg5[%c0_3, %c0_4, %c0_5] : memref<27x8x8xbf16, #tpu.memory_space<vmem>>, vector<1x8x8xbf16>
    %3 = vector.shape_cast %2 : vector<1x8x8xbf16> to vector<8x8xbf16>
    %cst = arith.constant dense<0.000000e+00> : vector<8x80xf32>
    %4 = tpu.matmul %3, %1, %cst {dimension_numbers = #tpu.dot_dimension_numbers<[1], [0], [0], [1], [0, 0, 1, 1], [], []>} : vector<8x8xbf16>, vector<8x80xbf16>, vector<8x80xf32> -> vector<8x80xf32>
    %c0_6 = arith.constant 0 : index
    %c0_7 = arith.constant 0 : index
    %c0_8 = arith.constant 0 : index
    %c1 = arith.constant 1 : index
    %5 = vector.load %arg2[%c0_6, %c0_7, %c0_8, %c1] : memref<1x1x8x102xbf16, #tpu.memory_space<vmem>>, vector<1x1x8x80xbf16>
    %6 = vector.shape_cast %5 : vector<1x1x8x80xbf16> to vector<8x80xbf16>
    %c1_9 = arith.constant 1 : index
    %c0_10 = arith.constant 0 : index
    %c0_11 = arith.constant 0 : index
    %7 = vector.load %arg5[%c1_9, %c0_10, %c0_11] : memref<27x8x8xbf16, #tpu.memory_space<vmem>>, vector<1x8x8xbf16>
    %8 = vector.shape_cast %7 : vector<1x8x8xbf16> to vector<8x8xbf16>
    %cst_12 = arith.constant dense<0.000000e+00> : vector<8x80xf32>
    %9 = tpu.matmul %8, %6, %cst_12 {dimension_numbers = #tpu.dot_dimension_numbers<[1], [0], [0], [1], [0, 0, 1, 1], [], []>} : vector<8x8xbf16>, vector<8x80xbf16>, vector<8x80xf32> -> vector<8x80xf32>
    %10 = arith.addf %4, %9 : vector<8x80xf32>
    %c0_13 = arith.constant 0 : index
    %c0_14 = arith.constant 0 : index
    %c0_15 = arith.constant 0 : index
    %c2 = arith.constant 2 : index
    %11 = vector.load %arg2[%c0_13, %c0_14, %c0_15, %c2] : memref<1x1x8x102xbf16, #tpu.memory_space<vmem>>, vector<1x1x8x80xbf16>
    %12 = vector.shape_cast %11 : vector<1x1x8x80xbf16> to vector<8x80xbf16>
    %c2_16 = arith.constant 2 : index
    %c0_17 = arith.constant 0 : index
    %c0_18 = arith.constant 0 : index
    %13 = vector.load %arg5[%c2_16, %c0_17, %c0_18] : memref<27x8x8xbf16, #tpu.memory_space<vmem>>, vector<1x8x8xbf16>
    %14 = vector.shape_cast %13 : vector<1x8x8xbf16> to vector<8x8xbf16>
    %cst_19 = arith.constant dense<0.000000e+00> : vector<8x80xf32>
    %15 = tpu.matmul %14, %12, %cst_19 {dimension_numbers = #tpu.dot_dimension_numbers<[1], [0], [0], [1], [0, 0, 1, 1], [], []>} : vector<8x8xbf16>, vector<8x80xbf16>, vector<8x80xf32> -> vector<8x80xf32>
    %16 = arith.addf %10, %15 : vector<8x80xf32>
    %c0_20 = arith.constant 0 : index
    %c0_21 = arith.constant 0 : index
    %c0_22 = arith.constant 0 : index
    %c10 = arith.constant 10 : index
    %17 = vector.load %arg2[%c0_20, %c0_21, %c0_22, %c10] : memref<1x1x8x102xbf16, #tpu.memory_space<vmem>>, vector<1x1x8x80xbf16>
    %18 = vector.shape_cast %17 : vector<1x1x8x80xbf16> to vector<8x80xbf16>
    %c3 = arith.constant 3 : index
    %c0_23 = arith.constant 0 : index
    %c0_24 = arith.constant 0 : index
    %19 = vector.load %arg5[%c3, %c0_23, %c0_24] : memref<27x8x8xbf16, #tpu.memory_space<vmem>>, vector<1x8x8xbf16>
    %20 = vector.shape_cast %19 : vector<1x8x8xbf16> to vector<8x8xbf16>
    %cst_25 = arith.constant dense<0.000000e+00> : vector<8x80xf32>
    %21 = tpu.matmul %20, %18, %cst_25 {dimension_numbers = #tpu.dot_dimension_numbers<[1], [0], [0], [1], [0, 0, 1, 1], [], []>} : vector<8x8xbf16>, vector<8x80xbf16>, vector<8x80xf32> -> vector<8x80xf32>
    %22 = arith.addf %16, %21 : vector<8x80xf32>
    %c0_26 = arith.constant 0 : index
    %c0_27 = arith.constant 0 : index
    %c0_28 = arith.constant 0 : index
    %c11 = arith.constant 11 : index
    %23 = vector.load %arg2[%c0_26, %c0_27, %c0_28, %c11] : memref<1x1x8x102xbf16, #tpu.memory_space<vmem>>, vector<1x1x8x80xbf16>
    %24 = vector.shape_cast %23 : vector<1x1x8x80xbf16> to vector<8x80xbf16>
    %c4 = arith.constant 4 : index
    %c0_29 = arith.constant 0 : index
    %c0_30 = arith.constant 0 : index
    %25 = vector.load %arg5[%c4, %c0_29, %c0_30] : memref<27x8x8xbf16, #tpu.memory_space<vmem>>, vector<1x8x8xbf16>
    %26 = vector.shape_cast %25 : vector<1x8x8xbf16> to vector<8x8xbf16>
    %cst_31 = arith.constant dense<0.000000e+00> : vector<8x80xf32>
    %27 = tpu.matmul %26, %24, %cst_31 {dimension_numbers = #tpu.dot_dimension_numbers<[1], [0], [0], [1], [0, 0, 1, 1], [], []>} : vector<8x8xbf16>, vector<8x80xbf16>, vector<8x80xf32> -> vector<8x80xf32>
    %28 = arith.addf %22, %27 : vector<8x80xf32>
    %c0_32 = arith.constant 0 : index
    %c0_33 = arith.constant 0 : index
    %c0_34 = arith.constant 0 : index
    %c12 = arith.constant 12 : index
    %29 = vector.load %arg2[%c0_32, %c0_33, %c0_34, %c12] : memref<1x1x8x102xbf16, #tpu.memory_space<vmem>>, vector<1x1x8x80xbf16>
    %30 = vector.shape_cast %29 : vector<1x1x8x80xbf16> to vector<8x80xbf16>
    %c5 = arith.constant 5 : index
    %c0_35 = arith.constant 0 : index
    %c0_36 = arith.constant 0 : index
    %31 = vector.load %arg5[%c5, %c0_35, %c0_36] : memref<27x8x8xbf16, #tpu.memory_space<vmem>>, vector<1x8x8xbf16>
    %32 = vector.shape_cast %31 : vector<1x8x8xbf16> to vector<8x8xbf16>
    %cst_37 = arith.constant dense<0.000000e+00> : vector<8x80xf32>
    %33 = tpu.matmul %32, %30, %cst_37 {dimension_numbers = #tpu.dot_dimension_numbers<[1], [0], [0], [1], [0, 0, 1, 1], [], []>} : vector<8x8xbf16>, vector<8x80xbf16>, vector<8x80xf32> -> vector<8x80xf32>
    %34 = arith.addf %28, %33 : vector<8x80xf32>
    %c0_38 = arith.constant 0 : index
    %c0_39 = arith.constant 0 : index
    %c0_40 = arith.constant 0 : index
    %c20 = arith.constant 20 : index
    %35 = vector.load %arg2[%c0_38, %c0_39, %c0_40, %c20] : memref<1x1x8x102xbf16, #tpu.memory_space<vmem>>, vector<1x1x8x80xbf16>
    %36 = vector.shape_cast %35 : vector<1x1x8x80xbf16> to vector<8x80xbf16>
    %c6 = arith.constant 6 : index
    %c0_41 = arith.constant 0 : index
    %c0_42 = arith.constant 0 : index
    %37 = vector.load %arg5[%c6, %c0_41, %c0_42] : memref<27x8x8xbf16, #tpu.memory_space<vmem>>, vector<1x8x8xbf16>
    %38 = vector.shape_cast %37 : vector<1x8x8xbf16> to vector<8x8xbf16>
    %cst_43 = arith.constant dense<0.000000e+00> : vector<8x80xf32>
    %39 = tpu.matmul %38, %36, %cst_43 {dimension_numbers = #tpu.dot_dimension_numbers<[1], [0], [0], [1], [0, 0, 1, 1], [], []>} : vector<8x8xbf16>, vector<8x80xbf16>, vector<8x80xf32> -> vector<8x80xf32>
    %40 = arith.addf %34, %39 : vector<8x80xf32>
    %c0_44 = arith.constant 0 : index
    %c0_45 = arith.constant 0 : index
    %c0_46 = arith.constant 0 : index
    %c21 = arith.constant 21 : index
    %41 = vector.load %arg2[%c0_44, %c0_45, %c0_46, %c21] : memref<1x1x8x102xbf16, #tpu.memory_space<vmem>>, vector<1x1x8x80xbf16>
    %42 = vector.shape_cast %41 : vector<1x1x8x80xbf16> to vector<8x80xbf16>
    %c7 = arith.constant 7 : index
    %c0_47 = arith.constant 0 : index
    %c0_48 = arith.constant 0 : index
    %43 = vector.load %arg5[%c7, %c0_47, %c0_48] : memref<27x8x8xbf16, #tpu.memory_space<vmem>>, vector<1x8x8xbf16>
    %44 = vector.shape_cast %43 : vector<1x8x8xbf16> to vector<8x8xbf16>
    %cst_49 = arith.constant dense<0.000000e+00> : vector<8x80xf32>
    %45 = tpu.matmul %44, %42, %cst_49 {dimension_numbers = #tpu.dot_dimension_numbers<[1], [0], [0], [1], [0, 0, 1, 1], [], []>} : vector<8x8xbf16>, vector<8x80xbf16>, vector<8x80xf32> -> vector<8x80xf32>
    %46 = arith.addf %40, %45 : vector<8x80xf32>
    %c0_50 = arith.constant 0 : index
    %c0_51 = arith.constant 0 : index
    %c0_52 = arith.constant 0 : index
    %c22 = arith.constant 22 : index
    %47 = vector.load %arg2[%c0_50, %c0_51, %c0_52, %c22] : memref<1x1x8x102xbf16, #tpu.memory_space<vmem>>, vector<1x1x8x80xbf16>
    %48 = vector.shape_cast %47 : vector<1x1x8x80xbf16> to vector<8x80xbf16>
    %c8 = arith.constant 8 : index
    %c0_53 = arith.constant 0 : index
    %c0_54 = arith.constant 0 : index
    %49 = vector.load %arg5[%c8, %c0_53, %c0_54] : memref<27x8x8xbf16, #tpu.memory_space<vmem>>, vector<1x8x8xbf16>
    %50 = vector.shape_cast %49 : vector<1x8x8xbf16> to vector<8x8xbf16>
    %cst_55 = arith.constant dense<0.000000e+00> : vector<8x80xf32>
    %51 = tpu.matmul %50, %48, %cst_55 {dimension_numbers = #tpu.dot_dimension_numbers<[1], [0], [0], [1], [0, 0, 1, 1], [], []>} : vector<8x8xbf16>, vector<8x80xbf16>, vector<8x80xf32> -> vector<8x80xf32>
    %52 = arith.addf %46, %51 : vector<8x80xf32>
    %c0_56 = arith.constant 0 : index
    %c0_57 = arith.constant 0 : index
    %c0_58 = arith.constant 0 : index
    %c0_59 = arith.constant 0 : index
    %53 = vector.load %arg3[%c0_56, %c0_57, %c0_58, %c0_59] : memref<1x1x8x102xbf16, #tpu.memory_space<vmem>>, vector<1x1x8x80xbf16>
    %54 = vector.shape_cast %53 : vector<1x1x8x80xbf16> to vector<8x80xbf16>
    %c9 = arith.constant 9 : index
    %c0_60 = arith.constant 0 : index
    %c0_61 = arith.constant 0 : index
    %55 = vector.load %arg5[%c9, %c0_60, %c0_61] : memref<27x8x8xbf16, #tpu.memory_space<vmem>>, vector<1x8x8xbf16>
    %56 = vector.shape_cast %55 : vector<1x8x8xbf16> to vector<8x8xbf16>
    %cst_62 = arith.constant dense<0.000000e+00> : vector<8x80xf32>
    %57 = tpu.matmul %56, %54, %cst_62 {dimension_numbers = #tpu.dot_dimension_numbers<[1], [0], [0], [1], [0, 0, 1, 1], [], []>} : vector<8x8xbf16>, vector<8x80xbf16>, vector<8x80xf32> -> vector<8x80xf32>
    %58 = arith.addf %52, %57 : vector<8x80xf32>
    %c0_63 = arith.constant 0 : index
    %c0_64 = arith.constant 0 : index
    %c0_65 = arith.constant 0 : index
    %c1_66 = arith.constant 1 : index
    %59 = vector.load %arg3[%c0_63, %c0_64, %c0_65, %c1_66] : memref<1x1x8x102xbf16, #tpu.memory_space<vmem>>, vector<1x1x8x80xbf16>
    %60 = vector.shape_cast %59 : vector<1x1x8x80xbf16> to vector<8x80xbf16>
    %c10_67 = arith.constant 10 : index
    %c0_68 = arith.constant 0 : index
    %c0_69 = arith.constant 0 : index
    %61 = vector.load %arg5[%c10_67, %c0_68, %c0_69] : memref<27x8x8xbf16, #tpu.memory_space<vmem>>, vector<1x8x8xbf16>
    %62 = vector.shape_cast %61 : vector<1x8x8xbf16> to vector<8x8xbf16>
    %cst_70 = arith.constant dense<0.000000e+00> : vector<8x80xf32>
    %63 = tpu.matmul %62, %60, %cst_70 {dimension_numbers = #tpu.dot_dimension_numbers<[1], [0], [0], [1], [0, 0, 1, 1], [], []>} : vector<8x8xbf16>, vector<8x80xbf16>, vector<8x80xf32> -> vector<8x80xf32>
    %64 = arith.addf %58, %63 : vector<8x80xf32>
    %c0_71 = arith.constant 0 : index
    %c0_72 = arith.constant 0 : index
    %c0_73 = arith.constant 0 : index
    %c2_74 = arith.constant 2 : index
    %65 = vector.load %arg3[%c0_71, %c0_72, %c0_73, %c2_74] : memref<1x1x8x102xbf16, #tpu.memory_space<vmem>>, vector<1x1x8x80xbf16>
    %66 = vector.shape_cast %65 : vector<1x1x8x80xbf16> to vector<8x80xbf16>
    %c11_75 = arith.constant 11 : index
    %c0_76 = arith.constant 0 : index
    %c0_77 = arith.constant 0 : index
    %67 = vector.load %arg5[%c11_75, %c0_76, %c0_77] : memref<27x8x8xbf16, #tpu.memory_space<vmem>>, vector<1x8x8xbf16>
    %68 = vector.shape_cast %67 : vector<1x8x8xbf16> to vector<8x8xbf16>
    %cst_78 = arith.constant dense<0.000000e+00> : vector<8x80xf32>
    %69 = tpu.matmul %68, %66, %cst_78 {dimension_numbers = #tpu.dot_dimension_numbers<[1], [0], [0], [1], [0, 0, 1, 1], [], []>} : vector<8x8xbf16>, vector<8x80xbf16>, vector<8x80xf32> -> vector<8x80xf32>
    %70 = arith.addf %64, %69 : vector<8x80xf32>
    %c0_79 = arith.constant 0 : index
    %c0_80 = arith.constant 0 : index
    %c0_81 = arith.constant 0 : index
    %c10_82 = arith.constant 10 : index
    %71 = vector.load %arg3[%c0_79, %c0_80, %c0_81, %c10_82] : memref<1x1x8x102xbf16, #tpu.memory_space<vmem>>, vector<1x1x8x80xbf16>
    %72 = vector.shape_cast %71 : vector<1x1x8x80xbf16> to vector<8x80xbf16>
    %c12_83 = arith.constant 12 : index
    %c0_84 = arith.constant 0 : index
    %c0_85 = arith.constant 0 : index
    %73 = vector.load %arg5[%c12_83, %c0_84, %c0_85] : memref<27x8x8xbf16, #tpu.memory_space<vmem>>, vector<1x8x8xbf16>
    %74 = vector.shape_cast %73 : vector<1x8x8xbf16> to vector<8x8xbf16>
    %cst_86 = arith.constant dense<0.000000e+00> : vector<8x80xf32>
    %75 = tpu.matmul %74, %72, %cst_86 {dimension_numbers = #tpu.dot_dimension_numbers<[1], [0], [0], [1], [0, 0, 1, 1], [], []>} : vector<8x8xbf16>, vector<8x80xbf16>, vector<8x80xf32> -> vector<8x80xf32>
    %76 = arith.addf %70, %75 : vector<8x80xf32>
    %c0_87 = arith.constant 0 : index
    %c0_88 = arith.constant 0 : index
    %c0_89 = arith.constant 0 : index
    %c11_90 = arith.constant 11 : index
    %77 = vector.load %arg3[%c0_87, %c0_88, %c0_89, %c11_90] : memref<1x1x8x102xbf16, #tpu.memory_space<vmem>>, vector<1x1x8x80xbf16>
    %78 = vector.shape_cast %77 : vector<1x1x8x80xbf16> to vector<8x80xbf16>
    %c13 = arith.constant 13 : index
    %c0_91 = arith.constant 0 : index
    %c0_92 = arith.constant 0 : index
    %79 = vector.load %arg5[%c13, %c0_91, %c0_92] : memref<27x8x8xbf16, #tpu.memory_space<vmem>>, vector<1x8x8xbf16>
    %80 = vector.shape_cast %79 : vector<1x8x8xbf16> to vector<8x8xbf16>
    %cst_93 = arith.constant dense<0.000000e+00> : vector<8x80xf32>
    %81 = tpu.matmul %80, %78, %cst_93 {dimension_numbers = #tpu.dot_dimension_numbers<[1], [0], [0], [1], [0, 0, 1, 1], [], []>} : vector<8x8xbf16>, vector<8x80xbf16>, vector<8x80xf32> -> vector<8x80xf32>
    %82 = arith.addf %76, %81 : vector<8x80xf32>
    %c0_94 = arith.constant 0 : index
    %c0_95 = arith.constant 0 : index
    %c0_96 = arith.constant 0 : index
    %c12_97 = arith.constant 12 : index
    %83 = vector.load %arg3[%c0_94, %c0_95, %c0_96, %c12_97] : memref<1x1x8x102xbf16, #tpu.memory_space<vmem>>, vector<1x1x8x80xbf16>
    %84 = vector.shape_cast %83 : vector<1x1x8x80xbf16> to vector<8x80xbf16>
    %c14 = arith.constant 14 : index
    %c0_98 = arith.constant 0 : index
    %c0_99 = arith.constant 0 : index
    %85 = vector.load %arg5[%c14, %c0_98, %c0_99] : memref<27x8x8xbf16, #tpu.memory_space<vmem>>, vector<1x8x8xbf16>
    %86 = vector.shape_cast %85 : vector<1x8x8xbf16> to vector<8x8xbf16>
    %cst_100 = arith.constant dense<0.000000e+00> : vector<8x80xf32>
    %87 = tpu.matmul %86, %84, %cst_100 {dimension_numbers = #tpu.dot_dimension_numbers<[1], [0], [0], [1], [0, 0, 1, 1], [], []>} : vector<8x8xbf16>, vector<8x80xbf16>, vector<8x80xf32> -> vector<8x80xf32>
    %88 = arith.addf %82, %87 : vector<8x80xf32>
    %c0_101 = arith.constant 0 : index
    %c0_102 = arith.constant 0 : index
    %c0_103 = arith.constant 0 : index
    %c20_104 = arith.constant 20 : index
    %89 = vector.load %arg3[%c0_101, %c0_102, %c0_103, %c20_104] : memref<1x1x8x102xbf16, #tpu.memory_space<vmem>>, vector<1x1x8x80xbf16>
    %90 = vector.shape_cast %89 : vector<1x1x8x80xbf16> to vector<8x80xbf16>
    %c15 = arith.constant 15 : index
    %c0_105 = arith.constant 0 : index
    %c0_106 = arith.constant 0 : index
    %91 = vector.load %arg5[%c15, %c0_105, %c0_106] : memref<27x8x8xbf16, #tpu.memory_space<vmem>>, vector<1x8x8xbf16>
    %92 = vector.shape_cast %91 : vector<1x8x8xbf16> to vector<8x8xbf16>
    %cst_107 = arith.constant dense<0.000000e+00> : vector<8x80xf32>
    %93 = tpu.matmul %92, %90, %cst_107 {dimension_numbers = #tpu.dot_dimension_numbers<[1], [0], [0], [1], [0, 0, 1, 1], [], []>} : vector<8x8xbf16>, vector<8x80xbf16>, vector<8x80xf32> -> vector<8x80xf32>
    %94 = arith.addf %88, %93 : vector<8x80xf32>
    %c0_108 = arith.constant 0 : index
    %c0_109 = arith.constant 0 : index
    %c0_110 = arith.constant 0 : index
    %c21_111 = arith.constant 21 : index
    %95 = vector.load %arg3[%c0_108, %c0_109, %c0_110, %c21_111] : memref<1x1x8x102xbf16, #tpu.memory_space<vmem>>, vector<1x1x8x80xbf16>
    %96 = vector.shape_cast %95 : vector<1x1x8x80xbf16> to vector<8x80xbf16>
    %c16 = arith.constant 16 : index
    %c0_112 = arith.constant 0 : index
    %c0_113 = arith.constant 0 : index
    %97 = vector.load %arg5[%c16, %c0_112, %c0_113] : memref<27x8x8xbf16, #tpu.memory_space<vmem>>, vector<1x8x8xbf16>
    %98 = vector.shape_cast %97 : vector<1x8x8xbf16> to vector<8x8xbf16>
    %cst_114 = arith.constant dense<0.000000e+00> : vector<8x80xf32>
    %99 = tpu.matmul %98, %96, %cst_114 {dimension_numbers = #tpu.dot_dimension_numbers<[1], [0], [0], [1], [0, 0, 1, 1], [], []>} : vector<8x8xbf16>, vector<8x80xbf16>, vector<8x80xf32> -> vector<8x80xf32>
    %100 = arith.addf %94, %99 : vector<8x80xf32>
    %c0_115 = arith.constant 0 : index
    %c0_116 = arith.constant 0 : index
    %c0_117 = arith.constant 0 : index
    %c22_118 = arith.constant 22 : index
    %101 = vector.load %arg3[%c0_115, %c0_116, %c0_117, %c22_118] : memref<1x1x8x102xbf16, #tpu.memory_space<vmem>>, vector<1x1x8x80xbf16>
    %102 = vector.shape_cast %101 : vector<1x1x8x80xbf16> to vector<8x80xbf16>
    %c17 = arith.constant 17 : index
    %c0_119 = arith.constant 0 : index
    %c0_120 = arith.constant 0 : index
    %103 = vector.load %arg5[%c17, %c0_119, %c0_120] : memref<27x8x8xbf16, #tpu.memory_space<vmem>>, vector<1x8x8xbf16>
    %104 = vector.shape_cast %103 : vector<1x8x8xbf16> to vector<8x8xbf16>
    %cst_121 = arith.constant dense<0.000000e+00> : vector<8x80xf32>
    %105 = tpu.matmul %104, %102, %cst_121 {dimension_numbers = #tpu.dot_dimension_numbers<[1], [0], [0], [1], [0, 0, 1, 1], [], []>} : vector<8x8xbf16>, vector<8x80xbf16>, vector<8x80xf32> -> vector<8x80xf32>
    %106 = arith.addf %100, %105 : vector<8x80xf32>
    %c0_122 = arith.constant 0 : index
    %c0_123 = arith.constant 0 : index
    %c0_124 = arith.constant 0 : index
    %c0_125 = arith.constant 0 : index
    %107 = vector.load %arg4[%c0_122, %c0_123, %c0_124, %c0_125] : memref<1x1x8x102xbf16, #tpu.memory_space<vmem>>, vector<1x1x8x80xbf16>
    %108 = vector.shape_cast %107 : vector<1x1x8x80xbf16> to vector<8x80xbf16>
    %c18 = arith.constant 18 : index
    %c0_126 = arith.constant 0 : index
    %c0_127 = arith.constant 0 : index
    %109 = vector.load %arg5[%c18, %c0_126, %c0_127] : memref<27x8x8xbf16, #tpu.memory_space<vmem>>, vector<1x8x8xbf16>
    %110 = vector.shape_cast %109 : vector<1x8x8xbf16> to vector<8x8xbf16>
    %cst_128 = arith.constant dense<0.000000e+00> : vector<8x80xf32>
    %111 = tpu.matmul %110, %108, %cst_128 {dimension_numbers = #tpu.dot_dimension_numbers<[1], [0], [0], [1], [0, 0, 1, 1], [], []>} : vector<8x8xbf16>, vector<8x80xbf16>, vector<8x80xf32> -> vector<8x80xf32>
    %112 = arith.addf %106, %111 : vector<8x80xf32>
    %c0_129 = arith.constant 0 : index
    %c0_130 = arith.constant 0 : index
    %c0_131 = arith.constant 0 : index
    %c1_132 = arith.constant 1 : index
    %113 = vector.load %arg4[%c0_129, %c0_130, %c0_131, %c1_132] : memref<1x1x8x102xbf16, #tpu.memory_space<vmem>>, vector<1x1x8x80xbf16>
    %114 = vector.shape_cast %113 : vector<1x1x8x80xbf16> to vector<8x80xbf16>
    %c19 = arith.constant 19 : index
    %c0_133 = arith.constant 0 : index
    %c0_134 = arith.constant 0 : index
    %115 = vector.load %arg5[%c19, %c0_133, %c0_134] : memref<27x8x8xbf16, #tpu.memory_space<vmem>>, vector<1x8x8xbf16>
    %116 = vector.shape_cast %115 : vector<1x8x8xbf16> to vector<8x8xbf16>
    %cst_135 = arith.constant dense<0.000000e+00> : vector<8x80xf32>
    %117 = tpu.matmul %116, %114, %cst_135 {dimension_numbers = #tpu.dot_dimension_numbers<[1], [0], [0], [1], [0, 0, 1, 1], [], []>} : vector<8x8xbf16>, vector<8x80xbf16>, vector<8x80xf32> -> vector<8x80xf32>
    %118 = arith.addf %112, %117 : vector<8x80xf32>
    %c0_136 = arith.constant 0 : index
    %c0_137 = arith.constant 0 : index
    %c0_138 = arith.constant 0 : index
    %c2_139 = arith.constant 2 : index
    %119 = vector.load %arg4[%c0_136, %c0_137, %c0_138, %c2_139] : memref<1x1x8x102xbf16, #tpu.memory_space<vmem>>, vector<1x1x8x80xbf16>
    %120 = vector.shape_cast %119 : vector<1x1x8x80xbf16> to vector<8x80xbf16>
    %c20_140 = arith.constant 20 : index
    %c0_141 = arith.constant 0 : index
    %c0_142 = arith.constant 0 : index
    %121 = vector.load %arg5[%c20_140, %c0_141, %c0_142] : memref<27x8x8xbf16, #tpu.memory_space<vmem>>, vector<1x8x8xbf16>
    %122 = vector.shape_cast %121 : vector<1x8x8xbf16> to vector<8x8xbf16>
    %cst_143 = arith.constant dense<0.000000e+00> : vector<8x80xf32>
    %123 = tpu.matmul %122, %120, %cst_143 {dimension_numbers = #tpu.dot_dimension_numbers<[1], [0], [0], [1], [0, 0, 1, 1], [], []>} : vector<8x8xbf16>, vector<8x80xbf16>, vector<8x80xf32> -> vector<8x80xf32>
    %124 = arith.addf %118, %123 : vector<8x80xf32>
    %c0_144 = arith.constant 0 : index
    %c0_145 = arith.constant 0 : index
    %c0_146 = arith.constant 0 : index
    %c10_147 = arith.constant 10 : index
    %125 = vector.load %arg4[%c0_144, %c0_145, %c0_146, %c10_147] : memref<1x1x8x102xbf16, #tpu.memory_space<vmem>>, vector<1x1x8x80xbf16>
    %126 = vector.shape_cast %125 : vector<1x1x8x80xbf16> to vector<8x80xbf16>
    %c21_148 = arith.constant 21 : index
    %c0_149 = arith.constant 0 : index
    %c0_150 = arith.constant 0 : index
    %127 = vector.load %arg5[%c21_148, %c0_149, %c0_150] : memref<27x8x8xbf16, #tpu.memory_space<vmem>>, vector<1x8x8xbf16>
    %128 = vector.shape_cast %127 : vector<1x8x8xbf16> to vector<8x8xbf16>
    %cst_151 = arith.constant dense<0.000000e+00> : vector<8x80xf32>
    %129 = tpu.matmul %128, %126, %cst_151 {dimension_numbers = #tpu.dot_dimension_numbers<[1], [0], [0], [1], [0, 0, 1, 1], [], []>} : vector<8x8xbf16>, vector<8x80xbf16>, vector<8x80xf32> -> vector<8x80xf32>
    %130 = arith.addf %124, %129 : vector<8x80xf32>
    %c0_152 = arith.constant 0 : index
    %c0_153 = arith.constant 0 : index
    %c0_154 = arith.constant 0 : index
    %c11_155 = arith.constant 11 : index
    %131 = vector.load %arg4[%c0_152, %c0_153, %c0_154, %c11_155] : memref<1x1x8x102xbf16, #tpu.memory_space<vmem>>, vector<1x1x8x80xbf16>
    %132 = vector.shape_cast %131 : vector<1x1x8x80xbf16> to vector<8x80xbf16>
    %c22_156 = arith.constant 22 : index
    %c0_157 = arith.constant 0 : index
    %c0_158 = arith.constant 0 : index
    %133 = vector.load %arg5[%c22_156, %c0_157, %c0_158] : memref<27x8x8xbf16, #tpu.memory_space<vmem>>, vector<1x8x8xbf16>
    %134 = vector.shape_cast %133 : vector<1x8x8xbf16> to vector<8x8xbf16>
    %cst_159 = arith.constant dense<0.000000e+00> : vector<8x80xf32>
    %135 = tpu.matmul %134, %132, %cst_159 {dimension_numbers = #tpu.dot_dimension_numbers<[1], [0], [0], [1], [0, 0, 1, 1], [], []>} : vector<8x8xbf16>, vector<8x80xbf16>, vector<8x80xf32> -> vector<8x80xf32>
    %136 = arith.addf %130, %135 : vector<8x80xf32>
    %c0_160 = arith.constant 0 : index
    %c0_161 = arith.constant 0 : index
    %c0_162 = arith.constant 0 : index
    %c12_163 = arith.constant 12 : index
    %137 = vector.load %arg4[%c0_160, %c0_161, %c0_162, %c12_163] : memref<1x1x8x102xbf16, #tpu.memory_space<vmem>>, vector<1x1x8x80xbf16>
    %138 = vector.shape_cast %137 : vector<1x1x8x80xbf16> to vector<8x80xbf16>
    %c23 = arith.constant 23 : index
    %c0_164 = arith.constant 0 : index
    %c0_165 = arith.constant 0 : index
    %139 = vector.load %arg5[%c23, %c0_164, %c0_165] : memref<27x8x8xbf16, #tpu.memory_space<vmem>>, vector<1x8x8xbf16>
    %140 = vector.shape_cast %139 : vector<1x8x8xbf16> to vector<8x8xbf16>
    %cst_166 = arith.constant dense<0.000000e+00> : vector<8x80xf32>
    %141 = tpu.matmul %140, %138, %cst_166 {dimension_numbers = #tpu.dot_dimension_numbers<[1], [0], [0], [1], [0, 0, 1, 1], [], []>} : vector<8x8xbf16>, vector<8x80xbf16>, vector<8x80xf32> -> vector<8x80xf32>
    %142 = arith.addf %136, %141 : vector<8x80xf32>
    %c0_167 = arith.constant 0 : index
    %c0_168 = arith.constant 0 : index
    %c0_169 = arith.constant 0 : index
    %c20_170 = arith.constant 20 : index
    %143 = vector.load %arg4[%c0_167, %c0_168, %c0_169, %c20_170] : memref<1x1x8x102xbf16, #tpu.memory_space<vmem>>, vector<1x1x8x80xbf16>
    %144 = vector.shape_cast %143 : vector<1x1x8x80xbf16> to vector<8x80xbf16>
    %c24 = arith.constant 24 : index
    %c0_171 = arith.constant 0 : index
    %c0_172 = arith.constant 0 : index
    %145 = vector.load %arg5[%c24, %c0_171, %c0_172] : memref<27x8x8xbf16, #tpu.memory_space<vmem>>, vector<1x8x8xbf16>
    %146 = vector.shape_cast %145 : vector<1x8x8xbf16> to vector<8x8xbf16>
    %cst_173 = arith.constant dense<0.000000e+00> : vector<8x80xf32>
    %147 = tpu.matmul %146, %144, %cst_173 {dimension_numbers = #tpu.dot_dimension_numbers<[1], [0], [0], [1], [0, 0, 1, 1], [], []>} : vector<8x8xbf16>, vector<8x80xbf16>, vector<8x80xf32> -> vector<8x80xf32>
    %148 = arith.addf %142, %147 : vector<8x80xf32>
    %c0_174 = arith.constant 0 : index
    %c0_175 = arith.constant 0 : index
    %c0_176 = arith.constant 0 : index
    %c21_177 = arith.constant 21 : index
    %149 = vector.load %arg4[%c0_174, %c0_175, %c0_176, %c21_177] : memref<1x1x8x102xbf16, #tpu.memory_space<vmem>>, vector<1x1x8x80xbf16>
    %150 = vector.shape_cast %149 : vector<1x1x8x80xbf16> to vector<8x80xbf16>
    %c25 = arith.constant 25 : index
    %c0_178 = arith.constant 0 : index
    %c0_179 = arith.constant 0 : index
    %151 = vector.load %arg5[%c25, %c0_178, %c0_179] : memref<27x8x8xbf16, #tpu.memory_space<vmem>>, vector<1x8x8xbf16>
    %152 = vector.shape_cast %151 : vector<1x8x8xbf16> to vector<8x8xbf16>
    %cst_180 = arith.constant dense<0.000000e+00> : vector<8x80xf32>
    %153 = tpu.matmul %152, %150, %cst_180 {dimension_numbers = #tpu.dot_dimension_numbers<[1], [0], [0], [1], [0, 0, 1, 1], [], []>} : vector<8x8xbf16>, vector<8x80xbf16>, vector<8x80xf32> -> vector<8x80xf32>
    %154 = arith.addf %148, %153 : vector<8x80xf32>
    %c0_181 = arith.constant 0 : index
    %c0_182 = arith.constant 0 : index
    %c0_183 = arith.constant 0 : index
    %c22_184 = arith.constant 22 : index
    %155 = vector.load %arg4[%c0_181, %c0_182, %c0_183, %c22_184] : memref<1x1x8x102xbf16, #tpu.memory_space<vmem>>, vector<1x1x8x80xbf16>
    %156 = vector.shape_cast %155 : vector<1x1x8x80xbf16> to vector<8x80xbf16>
    %c26 = arith.constant 26 : index
    %c0_185 = arith.constant 0 : index
    %c0_186 = arith.constant 0 : index
    %157 = vector.load %arg5[%c26, %c0_185, %c0_186] : memref<27x8x8xbf16, #tpu.memory_space<vmem>>, vector<1x8x8xbf16>
    %158 = vector.shape_cast %157 : vector<1x8x8xbf16> to vector<8x8xbf16>
    %cst_187 = arith.constant dense<0.000000e+00> : vector<8x80xf32>
    %159 = tpu.matmul %158, %156, %cst_187 {dimension_numbers = #tpu.dot_dimension_numbers<[1], [0], [0], [1], [0, 0, 1, 1], [], []>} : vector<8x8xbf16>, vector<8x80xbf16>, vector<8x80xf32> -> vector<8x80xf32>
    %160 = arith.addf %154, %159 : vector<8x80xf32>
    %c0_188 = arith.constant 0 : index
    %c0_189 = arith.constant 0 : index
    %161 = vector.load %arg6[%c0_188, %c0_189] : memref<8x1xf32, #tpu.memory_space<vmem>>, vector<8x1xf32>
    %162 = vector.broadcast %161 : vector<8x1xf32> to vector<8x80xf32>
    %163 = arith.addf %160, %162 : vector<8x80xf32>
    %cst_190 = arith.constant 0.000000e+00 : f32
    %164 = vector.broadcast %cst_190 : f32 to vector<8x80xf32>
    %165 = arith.maximumf %163, %164 : vector<8x80xf32>
    %c0_191 = arith.constant 0 : index
    %c0_192 = arith.constant 0 : index
    %c0_193 = arith.constant 0 : index
    %c0_194 = arith.constant 0 : index
    %166 = vector.load %arg7[%c0_191, %c0_192, %c0_193, %c0_194] : memref<1x1x8x80xf32, #tpu.memory_space<vmem>>, vector<1x1x8x80xf32>
    %167 = vector.shape_cast %166 : vector<1x1x8x80xf32> to vector<8x80xf32>
    %168 = vector.shape_cast %165 : vector<8x80xf32> to vector<1x1x8x80xf32>
    tpu.vector_store %arg7[%c0_191, %c0_192, %c0_193, %c0_194], %168 {strides = array<i32>} : memref<1x1x8x80xf32, #tpu.memory_space<vmem>>, vector<1x1x8x80xf32>,
    return
  }
  func.func @transform_0(%arg0: i32, %arg1: i32) -> (i32, i32, i32, i32) {
    %c0_i32 = arith.constant 0 : i32
    %0 = arith.addi %arg1, %c0_i32 : i32
    %c0_i32_0 = arith.constant 0 : i32
    %c0_i32_1 = arith.constant 0 : i32
    %c0_i32_2 = arith.constant 0 : i32
    return %arg0, %0, %c0_i32_0, %c0_i32_1 : i32, i32, i32, i32
  }
  func.func @transform_1(%arg0: i32, %arg1: i32) -> (i32, i32, i32, i32) {
    %c1_i32 = arith.constant 1 : i32
    %0 = arith.addi %arg1, %c1_i32 : i32
    %c0_i32 = arith.constant 0 : i32
    %c0_i32_0 = arith.constant 0 : i32
    %c0_i32_1 = arith.constant 0 : i32
    return %arg0, %0, %c0_i32, %c0_i32_0 : i32, i32, i32, i32
  }
  func.func @transform_2(%arg0: i32, %arg1: i32) -> (i32, i32, i32, i32) {
    %c2_i32 = arith.constant 2 : i32
    %0 = arith.addi %arg1, %c2_i32 : i32
    %c0_i32 = arith.constant 0 : i32
    %c0_i32_0 = arith.constant 0 : i32
    %c0_i32_1 = arith.constant 0 : i32
    return %arg0, %0, %c0_i32, %c0_i32_0 : i32, i32, i32, i32
  }
  func.func @transform_3(%arg0: i32, %arg1: i32) -> (i32, i32, i32) {
    %c0_i32 = arith.constant 0 : i32
    %c0_i32_0 = arith.constant 0 : i32
    %c0_i32_1 = arith.constant 0 : i32
    %c0_i32_2 = arith.constant 0 : i32
    return %c0_i32, %c0_i32_0, %c0_i32_1 : i32, i32, i32
  }
  func.func @transform_4(%arg0: i32, %arg1: i32) -> (i32, i32) {
    %c0_i32 = arith.constant 0 : i32
    %c0_i32_0 = arith.constant 0 : i32
    %c0_i32_1 = arith.constant 0 : i32
    return %c0_i32, %c0_i32_0 : i32, i32
  }
  func.func @transform_5(%arg0: i32, %arg1: i32) -> (i32, i32, i32, i32) {
    %c0_i32 = arith.constant 0 : i32
    %c0_i32_0 = arith.constant 0 : i32
    %c0_i32_1 = arith.constant 0 : i32
    return %arg0, %arg1, %c0_i32, %c0_i32_0 : i32, i32, i32, i32
  }
}

</mosaic_0001>

<llo_original>
// kernel: down_forward.2
$region0: #{down_forward.2}
  #allocation0 [shape = 'u32[]', space=smem, size = 0x4, offset = 0x4, fixed_abs, tag = 'smem constant byte address 0x4 - core index']
  #allocation1 [shape = 'u32[144,128]{1,0:T(1,128)}', space=vmem, size = 0x12000, scoped, tag = 'internal scratch']
  %s0 = inlined_call_operand.vmem [shape: bf16[2,10,4,102], index: 0, kind: input, shape index: {}, may-alias: {0,1,2}]
  %s1 = inlined_call_operand.vmem [shape: bf16[2,10,4,102], index: 1, kind: input, shape index: {}, may-alias: {0,1,2}]
  %s2 = inlined_call_operand.vmem [shape: bf16[2,10,4,102], index: 2, kind: input, shape index: {}, may-alias: {0,1,2}]
  %s3 = inlined_call_operand.vmem [shape: bf16[27,8,4], index: 3, kind: input, shape index: {}]
  %s4 = inlined_call_operand.vmem [shape: f32[8,1], index: 4, kind: input, shape index: {}]
  %s5 = inlined_call_operand.vmem [shape: bf16[2,8,8,80], index: 5, kind: output, shape index: {}]
  %s6 = sld [smem:[#allocation0]]
  $region53: #{down_forward.2} parent=0
    _
  %s8 = ssub.s32 1, %s6
  %s9 = scalar_select 0, %s8, %s6
  loop: start=0, step=1, limit=18
  $region2: #{down_forward.2} parent=0 // loop_pre_header
    _
  $region3: #{down_forward.2} parent=0 // loop_header
    %s11 = sphi 0, %s15
    %p12 = scmp.ge.s32.totalorder %s11, 18
    %s18 = sphi 0, %s30
    %s19 = sphi 0, %s26
    %s20 = sphi 0, %s18
    %s21 = sphi 0, %s19
    %s22 = sphi 0, %s20
    %s23 = sphi 0, %s21
    %s35 = sphi 0, %s37
    %s38 = sphi 0, %s35
    %s39 = sphi 0, %s38
    %s55 = sphi 0, %s39
    %s65 = sphi 0, %s67
    %s68 = sphi 0, %s65
    %s69 = sphi 0, %s68
    %s85 = sphi 0, %s69
    %s95 = sphi 0, %s97
    %s98 = sphi 0, %s95
    %s99 = sphi 0, %s98
    %s115 = sphi 0, %s99
    %s119 = sphi 0, %s119
    %s121 = sphi 0, %s119
    %s122 = sphi 0, %s121
    %s136 = sphi 0, %s122
    %s140 = sphi 0, %s140
    %s142 = sphi 0, %s140
    %s143 = sphi 0, %s142
    %s157 = sphi 0, %s143
    %s165 = sphi 0, %s167
    %s168 = sphi 0, %s165
    %s169 = sphi 0, %s168
    %s185 = sphi 0, %s169
  $region4: #{down_forward.2} parent=0 // loop_header_branch
    %14 = sbr.rel (%p12) target = $region8
  $region5: #{down_forward.2} parent=0 // loop_body
    %s16 = ssub.s32 %s11, 1
    %s17 = ssub.s32 %s11, 2
    %s24 = sadd.s32 1, %s19
    %p25 = scmp.ge.s32.totalorder %s24, 8
    %s26 = scalar_select %p25, 0, %s24
    %s27 = sadd.s32 1, %s18
    %s28 = scalar_select %p25, %s27, %s18
    %p29 = scmp.ge.s32.totalorder %s28, 2
    %s30 = scalar_select %p29, 0, %s28
    %s31 = ssub.s32 %s18, %s30
    %s32 = ssub.s32 %s19, %s26
    %s33 = sor.u32 %s31, %s32
    %p34 = scmp.eq.s32.totalorder %s33, 0
    %s36 = sadd.s32 %s35, 1
    %s37 = scalar_select %p34, %s35, %s36
    %p40 = pneg %p34
    %p41 = scmp.eq.s32.totalorder %s11, 15
    %p42 = por %p40, %p41
    %p43 = scmp.ne.s32.totalorder %s35, %s38
    %p44 = scmp.eq.s32.totalorder %s11, 0
    %p45 = por %p43, %p44
    %p46 = scmp.ne.s32.totalorder %s35, %s38
    %p47 = scmp.eq.s32.totalorder %s16, 15
    %p48 = por %p46, %p47
    %p49 = scmp.ne.s32.totalorder %s38, %s39
    %p50 = scmp.eq.s32.totalorder %s16, 0
    %p51 = por %p49, %p50
    %p52 = scmp.ne.s32.totalorder %s38, %s39
    %p53 = scmp.eq.s32.totalorder %s17, 15
    %p54 = por %p52, %p53
    %p56 = scmp.ne.s32.totalorder %s39, %s55
    %p57 = scmp.eq.s32.totalorder %s17, 0
    %p58 = por %p56, %p57
    %s59 = sadd.s32 %s19, 1
    %s60 = sadd.s32 %s26, 1
    %s61 = ssub.s32 %s18, %s30
    %s62 = ssub.s32 %s59, %s60
    %s63 = sor.u32 %s61, %s62
    %p64 = scmp.eq.s32.totalorder %s63, 0
    %s66 = sadd.s32 %s65, 1
    %s67 = scalar_select %p64, %s65, %s66
    %p70 = pneg %p64
    %p71 = scmp.eq.s32.totalorder %s11, 15
    %p72 = por %p70, %p71
    %p73 = scmp.ne.s32.totalorder %s65, %s68
    %p74 = scmp.eq.s32.totalorder %s11, 0
    %p75 = por %p73, %p74
    %p76 = scmp.ne.s32.totalorder %s65, %s68
    %p77 = scmp.eq.s32.totalorder %s16, 15
    %p78 = por %p76, %p77
    %p79 = scmp.ne.s32.totalorder %s68, %s69
    %p80 = scmp.eq.s32.totalorder %s16, 0
    %p81 = por %p79, %p80
    %p82 = scmp.ne.s32.totalorder %s68, %s69
    %p83 = scmp.eq.s32.totalorder %s17, 15
    %p84 = por %p82, %p83
    %p86 = scmp.ne.s32.totalorder %s69, %s85
    %p87 = scmp.eq.s32.totalorder %s17, 0
    %p88 = por %p86, %p87
    %s89 = sadd.s32 %s19, 2
    %s90 = sadd.s32 %s26, 2
    %s91 = ssub.s32 %s18, %s30
    %s92 = ssub.s32 %s89, %s90
    %s93 = sor.u32 %s91, %s92
    %p94 = scmp.eq.s32.totalorder %s93, 0
    %s96 = sadd.s32 %s95, 1
    %s97 = scalar_select %p94, %s95, %s96
    %p100 = pneg %p94
    %p101 = scmp.eq.s32.totalorder %s11, 15
    %p102 = por %p100, %p101
    %p103 = scmp.ne.s32.totalorder %s95, %s98
    %p104 = scmp.eq.s32.totalorder %s11, 0
    %p105 = por %p103, %p104
    %p106 = scmp.ne.s32.totalorder %s95, %s98
    %p107 = scmp.eq.s32.totalorder %s16, 15
    %p108 = por %p106, %p107
    %p109 = scmp.ne.s32.totalorder %s98, %s99
    %p110 = scmp.eq.s32.totalorder %s16, 0
    %p111 = por %p109, %p110
    %p112 = scmp.ne.s32.totalorder %s98, %s99
    %p113 = scmp.eq.s32.totalorder %s17, 15
    %p114 = por %p112, %p113
    %p116 = scmp.ne.s32.totalorder %s99, %s115
    %p117 = scmp.eq.s32.totalorder %s17, 0
    %p118 = por %p116, %p117
    %s120 = sadd.s32 %s119, 1
    %p123 = scmp.eq.s32.totalorder %s11, 15
    %p124 = scmp.ne.s32.totalorder %s119, %s121
    %p125 = scmp.eq.s32.totalorder %s11, 0
    %p126 = por %p124, %p125
    %p127 = scmp.ne.s32.totalorder %s119, %s121
    %p128 = scmp.eq.s32.totalorder %s16, 15
    %p129 = por %p127, %p128
    %p130 = scmp.ne.s32.totalorder %s121, %s122
    %p131 = scmp.eq.s32.totalorder %s16, 0
    %p132 = por %p130, %p131
    %p133 = scmp.ne.s32.totalorder %s121, %s122
    %p134 = scmp.eq.s32.totalorder %s17, 15
    %p135 = por %p133, %p134
    %p137 = scmp.ne.s32.totalorder %s122, %s136
    %p138 = scmp.eq.s32.totalorder %s17, 0
    %p139 = por %p137, %p138
    %s141 = sadd.s32 %s140, 1
    %p144 = scmp.eq.s32.totalorder %s11, 15
    %p145 = scmp.ne.s32.totalorder %s140, %s142
    %p146 = scmp.eq.s32.totalorder %s11, 0
    %p147 = por %p145, %p146
    %p148 = scmp.ne.s32.totalorder %s140, %s142
    %p149 = scmp.eq.s32.totalorder %s16, 15
    %p150 = por %p148, %p149
    %p151 = scmp.ne.s32.totalorder %s142, %s143
    %p152 = scmp.eq.s32.totalorder %s16, 0
    %p153 = por %p151, %p152
    %p154 = scmp.ne.s32.totalorder %s142, %s143
    %p155 = scmp.eq.s32.totalorder %s17, 15
    %p156 = por %p154, %p155
    %p158 = scmp.ne.s32.totalorder %s143, %s157
    %p159 = scmp.eq.s32.totalorder %s17, 0
    %p160 = por %p158, %p159
    %s161 = ssub.s32 %s18, %s30
    %s162 = ssub.s32 %s19, %s26
    %s163 = sor.u32 %s161, %s162
    %p164 = scmp.eq.s32.totalorder %s163, 0
    %s166 = sadd.s32 %s165, 1
    %s167 = scalar_select %p164, %s165, %s166
    %p170 = pneg %p164
    %p171 = scmp.eq.s32.totalorder %s11, 15
    %p172 = por %p170, %p171
    %p173 = scmp.ne.s32.totalorder %s165, %s168
    %p174 = scmp.eq.s32.totalorder %s11, 0
    %p175 = por %p173, %p174
    %p176 = scmp.ne.s32.totalorder %s165, %s168
    %p177 = scmp.eq.s32.totalorder %s16, 15
    %p178 = por %p176, %p177
    %p179 = scmp.ne.s32.totalorder %s168, %s169
    %p180 = scmp.eq.s32.totalorder %s16, 0
    %p181 = por %p179, %p180
    %p182 = scmp.ne.s32.totalorder %s168, %s169
    %p183 = scmp.eq.s32.totalorder %s17, 15
    %p184 = por %p182, %p183
    %p186 = scmp.ne.s32.totalorder %s169, %s185
    %p187 = scmp.eq.s32.totalorder %s17, 0
    %p188 = por %p186, %p187
    %p189 = scmp.le.s32.totalorder 1, %s11
    %p190 = scmp.lt.s32.totalorder %s11, 17
    %p191 = pnand %p189, %p190
    %p192 = pneg %p191
    // Predicated region
    $region9: #{down_forward.2} parent=5 // pred_check
      _
    $region10: #{down_forward.2} parent=5 // pred_check_branch
      %194 = sbr.rel (%p191) target = $region12
    $region11: #{down_forward.2} parent=5 // pred_region
      %s195 = ssub.s32 %s11, 1
      // Predicated region
      $region13: #{down_forward.2} parent=11 // pred_check
        %p196 = pneg %p132
      $region14: #{down_forward.2} parent=11 // pred_check_branch
        %198 = sbr.rel (%p196) target = $region16
      $region15: #{down_forward.2} parent=11 // pred_region
        _
      $region16: #{down_forward.2} parent=11 // pred_fallthru
        _
      // Predicated region
      $region17: #{down_forward.2} parent=11 // pred_check
        %p199 = pneg %p153
      $region18: #{down_forward.2} parent=11 // pred_check_branch
        %201 = sbr.rel (%p199) target = $region20
      $region19: #{down_forward.2} parent=11 // pred_region
        _
      $region20: #{down_forward.2} parent=11 // pred_fallthru
        _
    $region12: #{down_forward.2} parent=5 // pred_fallthru
      _
    %p202 = scmp.lt.s32.totalorder %s11, 16
    // Predicated region
    $region21: #{down_forward.2} parent=5 // pred_check
      %p203 = pneg %p202
    $region22: #{down_forward.2} parent=5 // pred_check_branch
      %205 = sbr.rel (%p203) target = $region24
    $region23: #{down_forward.2} parent=5 // pred_region
      // Predicated region
      $region25: #{down_forward.2} parent=23 // pred_check
        %p206 = pneg %p45
      $region26: #{down_forward.2} parent=23 // pred_check_branch
        %208 = sbr.rel (%p206) target = $region28
      $region27: #{down_forward.2} parent=23 // pred_region
        %p209 = scmp.lt.s32.totalorder %s18, 1
        %s210 = scalar_select %p209, %s18, 1
        %p211 = scmp.lt.s32.totalorder %s19, 9
        %s212 = scalar_select %p211, %s19, 9
        %s213 = smul.addr %s210, 10
        %s214 = sadd.s32 %s212, %s213
        %s215 = smul.addr %s214, 2
        %s216 = scalar_lea.vmem %s0, %s215
      $region28: #{down_forward.2} parent=23 // pred_fallthru
        _
      // Predicated region
      $region29: #{down_forward.2} parent=23 // pred_check
        %p217 = pneg %p75
      $region30: #{down_forward.2} parent=23 // pred_check_branch
        %219 = sbr.rel (%p217) target = $region32
      $region31: #{down_forward.2} parent=23 // pred_region
        %s220 = sadd.s32 %s19, 1
        %p221 = scmp.lt.s32.totalorder %s18, 1
        %s222 = scalar_select %p221, %s18, 1
        %p223 = scmp.lt.s32.totalorder %s220, 9
        %s224 = scalar_select %p223, %s220, 9
        %s225 = smul.addr %s222, 10
        %s226 = sadd.s32 %s224, %s225
        %s227 = smul.addr %s226, 2
        %s228 = scalar_lea.vmem %s1, %s227
        %s229 = sadd.s32 %s19, 1
      $region32: #{down_forward.2} parent=23 // pred_fallthru
        _
      // Predicated region
      $region33: #{down_forward.2} parent=23 // pred_check
        %p230 = pneg %p105
      $region34: #{down_forward.2} parent=23 // pred_check_branch
        %232 = sbr.rel (%p230) target = $region36
      $region35: #{down_forward.2} parent=23 // pred_region
        %s233 = sadd.s32 %s19, 2
        %p234 = scmp.lt.s32.totalorder %s18, 1
        %s235 = scalar_select %p234, %s18, 1
        %p236 = scmp.lt.s32.totalorder %s233, 9
        %s237 = scalar_select %p236, %s233, 9
        %s238 = smul.addr %s235, 10
        %s239 = sadd.s32 %s237, %s238
        %s240 = smul.addr %s239, 2
        %s241 = scalar_lea.vmem %s2, %s240
        %s242 = sadd.s32 %s19, 2
      $region36: #{down_forward.2} parent=23 // pred_fallthru
        _
    $region24: #{down_forward.2} parent=5 // pred_fallthru
      _
    %p243 = scmp.le.s32.totalorder 1, %s11
    %p244 = scmp.lt.s32.totalorder %s11, 17
    %p245 = pnand %p243, %p244
    %p246 = pneg %p245
    // Predicated region
    $region37: #{down_forward.2} parent=5 // pred_check
      _
    $region38: #{down_forward.2} parent=5 // pred_check_branch
      %248 = sbr.rel (%p245) target = $region40
    $region39: #{down_forward.2} parent=5 // pred_region
      %s249 = ssub.s32 %s11, 1
      %p250 = scmp.lt.s32.totalorder %s20, 1
      %s251 = scalar_select %p250, %s20, 1
      %p252 = scmp.lt.s32.totalorder %s21, 9
      %s253 = scalar_select %p252, %s21, 9
      %s254 = smul.addr %s251, 10
      %s255 = sadd.s32 %s253, %s254
      %s256 = smul.addr %s255, 2
      %s257 = scalar_lea.vmem %s0, %s256
      %p258 = pneg %p51
      %p259 = pneg %p48
      %s260 = sadd.s32 %s21, 1
      %p261 = scmp.lt.s32.totalorder %s20, 1
      %s262 = scalar_select %p261, %s20, 1
      %p263 = scmp.lt.s32.totalorder %s260, 9
      %s264 = scalar_select %p263, %s260, 9
      %s265 = smul.addr %s262, 10
      %s266 = sadd.s32 %s264, %s265
      %s267 = smul.addr %s266, 2
      %s268 = scalar_lea.vmem %s1, %s267
      %p269 = pneg %p81
      %p270 = pneg %p78
      %s271 = sadd.s32 %s21, 2
      %p272 = scmp.lt.s32.totalorder %s20, 1
      %s273 = scalar_select %p272, %s20, 1
      %p274 = scmp.lt.s32.totalorder %s271, 9
      %s275 = scalar_select %p274, %s271, 9
      %s276 = smul.addr %s273, 10
      %s277 = sadd.s32 %s275, %s276
      %s278 = smul.addr %s277, 2
      %s279 = scalar_lea.vmem %s2, %s278
      %p280 = pneg %p111
      %p281 = pneg %p108
      %p282 = pneg %p132
      %p283 = pneg %p129
      %p284 = pneg %p153
      %p285 = pneg %p150
      %p286 = pneg %p181
      %p287 = pneg %p178
      %p288 = scmp.lt.s32.totalorder %s20, 1
      %s289 = scalar_select %p288, %s20, 1
      %p290 = scmp.lt.s32.totalorder %s21, 7
      %s291 = scalar_select %p290, %s21, 7
      %s292 = smul.addr %s289, 8
      %s293 = sadd.s32 %s291, %s292
      %s294 = smul.addr %s293, 4
      %s295 = scalar_lea.vmem %s5, %s294
      %p296 = scmp.lt.s32.totalorder %s20, 1
      %s297 = scalar_select %p296, %s20, 1
      %p298 = scmp.lt.s32.totalorder %s21, 9
      %s299 = scalar_select %p298, %s21, 9
      %s300 = smul.addr %s297, 10
      %s301 = sadd.s32 %s299, %s300
      %s302 = smul.addr %s301, 2
      %s303 = scalar_lea.vmem %s0, %s302
      %s304 = sadd.s32 %s21, 1
      %p305 = scmp.lt.s32.totalorder %s20, 1
      %s306 = scalar_select %p305, %s20, 1
      %p307 = scmp.lt.s32.totalorder %s304, 9
      %s308 = scalar_select %p307, %s304, 9
      %s309 = smul.addr %s306, 10
      %s310 = sadd.s32 %s308, %s309
      %s311 = smul.addr %s310, 2
      %s312 = scalar_lea.vmem %s1, %s311
      %s313 = sadd.s32 %s21, 1
      %s314 = sadd.s32 %s21, 2
      %p315 = scmp.lt.s32.totalorder %s20, 1
      %s316 = scalar_select %p315, %s20, 1
      %p317 = scmp.lt.s32.totalorder %s314, 9
      %s318 = scalar_select %p317, %s314, 9
      %s319 = smul.addr %s316, 10
      %s320 = sadd.s32 %s318, %s319
      %s321 = smul.addr %s320, 2
      %s322 = scalar_lea.vmem %s2, %s321
      %s323 = sadd.s32 %s21, 2
      %p324 = scmp.lt.s32.totalorder %s20, 1
      %s325 = scalar_select %p324, %s20, 1
      %p326 = scmp.lt.s32.totalorder %s21, 7
      %s327 = scalar_select %p326, %s21, 7
      %s328 = smul.addr %s325, 8
      %s329 = sadd.s32 %s327, %s328
      %s330 = smul.addr %s329, 4
      %s331 = scalar_lea.vmem %s5, %s330
      %v333 = vld [vmem:[%s303] sm:$0x3]
      %v334 = vld [vmem:[%s3] sm:$0xf]
      %s335 = scalar_lea.vmem %s3, 4
      %v336 = vld [vmem:[%s335] sm:$0xf]
      %v339 = vunpack.c.l.s4 1983009808
      %v340 = vunpack.c.0.s8 %v339
      %v341 = vlaneseq
      %v342 = vshrl.u32 %v341, 7
      %v343 = vsub.s32 %v340, %v342
      %v344 = vrot.slane %v333, %v343
      %345 = vrot.lane.b32.xlu0 %v344, 127
      %v346 = vpop.permute.xlu0 %345
      %vm347 = vcmask 31744
      %v349 = vsel %vm347, %v336, 0
      %vm351 = vcmask 1041408
      %v353 = vsel %vm351, %v346, 0
      %355 = vmatprep.subr.bf16.mxu0 0
      %356 = vmatpush1.bf16.msra.mxu0 %v353
      %357 = vmatprep.subr.bf16.mxu0 0
      %358 = vmatpush1.bf16.msra.mxu0 0
      %359 = vmatprep.subr.bf16.mxu0 0
      %360 = vmatpush1.bf16.msra.mxu0 0
      %361 = vmatprep.subr.bf16.mxu0 0
      %362 = vmatpush1.bf16.msra.mxu0 0
      %363 = vmatprep.subr.bf16.mxu0 0
      %364 = vmatpush1.bf16.msra.mxu0 0
      %365 = vmatprep.subr.bf16.mxu0 0
      %366 = vmatpush1.bf16.msra.mxu0 0
      %367 = vmatprep.subr.bf16.mxu0 0
      %368 = vmatpush1.bf16.msra.mxu0 0
      %369 = vmatprep.subr.bf16.mxu0 0
      %370 = vmatpush1.bf16.msra.mxu0 0
      %371 = vmatprep.subr.bf16.mxu0 0
      %372 = vmatpush1.bf16.msra.mxu0 0
      %373 = vmatprep.subr.bf16.mxu0 0
      %374 = vmatpush1.bf16.msra.mxu0 0
      %375 = vmatprep.subr.bf16.mxu0 0
      %376 = vmatpush1.bf16.msra.mxu0 0
      %377 = vmatprep.subr.bf16.mxu0 0
      %378 = vmatpush1.bf16.msra.mxu0 0
      %379 = vmatprep.subr.bf16.mxu0 0
      %380 = vmatpush1.bf16.msra.mxu0 0
      %381 = vmatprep.subr.bf16.mxu0 0
      %382 = vmatpush1.bf16.msra.mxu0 0
      %383 = vmatprep.subr.bf16.mxu0 0
      %384 = vmatpush1.bf16.msra.mxu0 0
      %385 = vmatprep.subr.bf16.mxu0 0
      %386 = vmatpush1.bf16.msra.mxu0 0
      %387 = vmatprep.mubr.bf16.mxu0 0
      %388 = vmatmul.mubr.bf16.gmra.mrb[0].mxu0 %v349
      %v389 = vpop.f32.mrb[0].mxu0
      %v390 = vadd.f32 0.0, %v389
      %v391 = vpop.f32.mrb[0].mxu0
      %v392 = vpop.f32.mrb[0].mxu0
      %v393 = vpop.f32.mrb[0].mxu0
      %394 = vdwg.mxu0
      %v396 = vsel %vm347, %v334, 0
      %v399 = vsel %vm351, %v333, 0
      %401 = vmatprep.subr.bf16.mxu0 0
      %402 = vmatpush1.bf16.msra.mxu0 %v399
      %403 = vmatprep.subr.bf16.mxu0 0
      %404 = vmatpush1.bf16.msra.mxu0 0
      %405 = vmatprep.subr.bf16.mxu0 0
      %406 = vmatpush1.bf16.msra.mxu0 0
      %407 = vmatprep.subr.bf16.mxu0 0
      %408 = vmatpush1.bf16.msra.mxu0 0
      %409 = vmatprep.subr.bf16.mxu0 0
      %410 = vmatpush1.bf16.msra.mxu0 0
      %411 = vmatprep.subr.bf16.mxu0 0
      %412 = vmatpush1.bf16.msra.mxu0 0
      %413 = vmatprep.subr.bf16.mxu0 0
      %414 = vmatpush1.bf16.msra.mxu0 0
      %415 = vmatprep.subr.bf16.mxu0 0
      %416 = vmatpush1.bf16.msra.mxu0 0
      %417 = vmatprep.subr.bf16.mxu0 0
      %418 = vmatpush1.bf16.msra.mxu0 0
      %419 = vmatprep.subr.bf16.mxu0 0
      %420 = vmatpush1.bf16.msra.mxu0 0
      %421 = vmatprep.subr.bf16.mxu0 0
      %422 = vmatpush1.bf16.msra.mxu0 0
      %423 = vmatprep.subr.bf16.mxu0 0
      %424 = vmatpush1.bf16.msra.mxu0 0
      %425 = vmatprep.subr.bf16.mxu0 0
      %426 = vmatpush1.bf16.msra.mxu0 0
      %427 = vmatprep.subr.bf16.mxu0 0
      %428 = vmatpush1.bf16.msra.mxu0 0
      %429 = vmatprep.subr.bf16.mxu0 0
      %430 = vmatpush1.bf16.msra.mxu0 0
      %431 = vmatprep.subr.bf16.mxu0 0
      %432 = vmatpush1.bf16.msra.mxu0 0
      %433 = vmatprep.mubr.bf16.mxu0 0
      %434 = vmatmul.mubr.bf16.gmra.mrb[0].mxu0 %v396
      %v435 = vpop.f32.mrb[0].mxu0
      %v436 = vadd.f32 %v390, %v435
      %v437 = vpop.f32.mrb[0].mxu0
      %v438 = vpop.f32.mrb[0].mxu0
      %v439 = vpop.f32.mrb[0].mxu0
      %440 = vdwg.mxu0
      %v441 = vld [vmem:[%s303] sm:$0x3]
      %s442 = scalar_lea.vmem %s3, 8
      %v443 = vld [vmem:[%s442] sm:$0xf]
      %v446 = vunpack.c.l.s4 1983009808
      %v447 = vunpack.c.0.s8 %v446
      %v448 = vlaneseq
      %v449 = vshrl.u32 %v448, 7
      %v450 = vsub.s32 %v447, %v449
      %v451 = vrot.slane %v441, %v450
      %452 = vrot.lane.b32.xlu0 %v451, 126
      %v453 = vpop.permute.xlu0 %452
      %v455 = vsel %vm347, %v443, 0
      %v458 = vsel %vm351, %v453, 0
      %460 = vmatprep.subr.bf16.mxu0 0
      %461 = vmatpush1.bf16.msra.mxu0 %v458
      %462 = vmatprep.subr.bf16.mxu0 0
      %463 = vmatpush1.bf16.msra.mxu0 0
      %464 = vmatprep.subr.bf16.mxu0 0
      %465 = vmatpush1.bf16.msra.mxu0 0
      %466 = vmatprep.subr.bf16.mxu0 0
      %467 = vmatpush1.bf16.msra.mxu0 0
      %468 = vmatprep.subr.bf16.mxu0 0
      %469 = vmatpush1.bf16.msra.mxu0 0
      %470 = vmatprep.subr.bf16.mxu0 0
      %471 = vmatpush1.bf16.msra.mxu0 0
      %472 = vmatprep.subr.bf16.mxu0 0
      %473 = vmatpush1.bf16.msra.mxu0 0
      %474 = vmatprep.subr.bf16.mxu0 0
      %475 = vmatpush1.bf16.msra.mxu0 0
      %476 = vmatprep.subr.bf16.mxu0 0
      %477 = vmatpush1.bf16.msra.mxu0 0
      %478 = vmatprep.subr.bf16.mxu0 0
      %479 = vmatpush1.bf16.msra.mxu0 0
      %480 = vmatprep.subr.bf16.mxu0 0
      %481 = vmatpush1.bf16.msra.mxu0 0
      %482 = vmatprep.subr.bf16.mxu0 0
      %483 = vmatpush1.bf16.msra.mxu0 0
      %484 = vmatprep.subr.bf16.mxu0 0
      %485 = vmatpush1.bf16.msra.mxu0 0
      %486 = vmatprep.subr.bf16.mxu0 0
      %487 = vmatpush1.bf16.msra.mxu0 0
      %488 = vmatprep.subr.bf16.mxu0 0
      %489 = vmatpush1.bf16.msra.mxu0 0
      %490 = vmatprep.subr.bf16.mxu0 0
      %491 = vmatpush1.bf16.msra.mxu0 0
      %492 = vmatprep.mubr.bf16.mxu0 0
      %493 = vmatmul.mubr.bf16.gmra.mrb[0].mxu0 %v455
      %v494 = vpop.f32.mrb[0].mxu0
      %v495 = vadd.f32 0.0, %v494
      %v496 = vpop.f32.mrb[0].mxu0
      %v497 = vpop.f32.mrb[0].mxu0
      %v498 = vpop.f32.mrb[0].mxu0
      %499 = vdwg.mxu0
      %v500 = vadd.f32 %v436, %v495
      %v501 = vld [vmem:[%s303] sm:$0x3]
      %s502 = scalar_lea.vmem %s3, 12
      %v503 = vld [vmem:[%s502] sm:$0xf]
      %v506 = vunpack.c.l.s4 1983009808
      %v507 = vunpack.c.0.s8 %v506
      %v508 = vlaneseq
      %v509 = vshrl.u32 %v508, 7
      %v510 = vsub.s32 %v507, %v509
      %v511 = vrot.slane %v501, %v510
      %512 = vrot.lane.b32.xlu0 %v511, 118
      %v513 = vpop.permute.xlu0 %512
      %v515 = vsel %vm347, %v503, 0
      %v518 = vsel %vm351, %v513, 0
      %520 = vmatprep.subr.bf16.mxu0 0
      %521 = vmatpush1.bf16.msra.mxu0 %v518
      %522 = vmatprep.subr.bf16.mxu0 0
      %523 = vmatpush1.bf16.msra.mxu0 0
      %524 = vmatprep.subr.bf16.mxu0 0
      %525 = vmatpush1.bf16.msra.mxu0 0
      %526 = vmatprep.subr.bf16.mxu0 0
      %527 = vmatpush1.bf16.msra.mxu0 0
      %528 = vmatprep.subr.bf16.mxu0 0
      %529 = vmatpush1.bf16.msra.mxu0 0
      %530 = vmatprep.subr.bf16.mxu0 0
      %531 = vmatpush1.bf16.msra.mxu0 0
      %532 = vmatprep.subr.bf16.mxu0 0
      %533 = vmatpush1.bf16.msra.mxu0 0
      %534 = vmatprep.subr.bf16.mxu0 0
      %535 = vmatpush1.bf16.msra.mxu0 0
      %536 = vmatprep.subr.bf16.mxu0 0
      %537 = vmatpush1.bf16.msra.mxu0 0
      %538 = vmatprep.subr.bf16.mxu0 0
      %539 = vmatpush1.bf16.msra.mxu0 0
      %540 = vmatprep.subr.bf16.mxu0 0
      %541 = vmatpush1.bf16.msra.mxu0 0
      %542 = vmatprep.subr.bf16.mxu0 0
      %543 = vmatpush1.bf16.msra.mxu0 0
      %544 = vmatprep.subr.bf16.mxu0 0
      %545 = vmatpush1.bf16.msra.mxu0 0
      %546 = vmatprep.subr.bf16.mxu0 0
      %547 = vmatpush1.bf16.msra.mxu0 0
      %548 = vmatprep.subr.bf16.mxu0 0
      %549 = vmatpush1.bf16.msra.mxu0 0
      %550 = vmatprep.subr.bf16.mxu0 0
      %551 = vmatpush1.bf16.msra.mxu0 0
      %552 = vmatprep.mubr.bf16.mxu0 0
      %553 = vmatmul.mubr.bf16.gmra.mrb[0].mxu0 %v515
      %v554 = vpop.f32.mrb[0].mxu0
      %v555 = vadd.f32 0.0, %v554
      %v556 = vpop.f32.mrb[0].mxu0
      %v557 = vpop.f32.mrb[0].mxu0
      %v558 = vpop.f32.mrb[0].mxu0
      %559 = vdwg.mxu0
      %v560 = vadd.f32 %v500, %v555
      %v561 = vld [vmem:[%s303] sm:$0x3]
      %s562 = scalar_lea.vmem %s3, 16
      %v563 = vld [vmem:[%s562] sm:$0xf]
      %v566 = vunpack.c.l.s4 1983009808
      %v567 = vunpack.c.0.s8 %v566
      %v568 = vlaneseq
      %v569 = vshrl.u32 %v568, 7
      %v570 = vsub.s32 %v567, %v569
      %v571 = vrot.slane %v561, %v570
      %572 = vrot.lane.b32.xlu0 %v571, 117
      %v573 = vpop.permute.xlu0 %572
      %v575 = vsel %vm347, %v563, 0
      %v578 = vsel %vm351, %v573, 0
      %580 = vmatprep.subr.bf16.mxu0 0
      %581 = vmatpush1.bf16.msra.mxu0 %v578
      %582 = vmatprep.subr.bf16.mxu0 0
      %583 = vmatpush1.bf16.msra.mxu0 0
      %584 = vmatprep.subr.bf16.mxu0 0
      %585 = vmatpush1.bf16.msra.mxu0 0
      %586 = vmatprep.subr.bf16.mxu0 0
      %587 = vmatpush1.bf16.msra.mxu0 0
      %588 = vmatprep.subr.bf16.mxu0 0
      %589 = vmatpush1.bf16.msra.mxu0 0
      %590 = vmatprep.subr.bf16.mxu0 0
      %591 = vmatpush1.bf16.msra.mxu0 0
      %592 = vmatprep.subr.bf16.mxu0 0
      %593 = vmatpush1.bf16.msra.mxu0 0
      %594 = vmatprep.subr.bf16.mxu0 0
      %595 = vmatpush1.bf16.msra.mxu0 0
      %596 = vmatprep.subr.bf16.mxu0 0
      %597 = vmatpush1.bf16.msra.mxu0 0
      %598 = vmatprep.subr.bf16.mxu0 0
      %599 = vmatpush1.bf16.msra.mxu0 0
      %600 = vmatprep.subr.bf16.mxu0 0
      %601 = vmatpush1.bf16.msra.mxu0 0
      %602 = vmatprep.subr.bf16.mxu0 0
      %603 = vmatpush1.bf16.msra.mxu0 0
      %604 = vmatprep.subr.bf16.mxu0 0
      %605 = vmatpush1.bf16.msra.mxu0 0
      %606 = vmatprep.subr.bf16.mxu0 0
      %607 = vmatpush1.bf16.msra.mxu0 0
      %608 = vmatprep.subr.bf16.mxu0 0
      %609 = vmatpush1.bf16.msra.mxu0 0
      %610 = vmatprep.subr.bf16.mxu0 0
      %611 = vmatpush1.bf16.msra.mxu0 0
      %612 = vmatprep.mubr.bf16.mxu0 0
      %613 = vmatmul.mubr.bf16.gmra.mrb[0].mxu0 %v575
      %v614 = vpop.f32.mrb[0].mxu0
      %v615 = vadd.f32 0.0, %v614
      %v616 = vpop.f32.mrb[0].mxu0
      %v617 = vpop.f32.mrb[0].mxu0
      %v618 = vpop.f32.mrb[0].mxu0
      %619 = vdwg.mxu0
      %v620 = vadd.f32 %v560, %v615
      %v621 = vld [vmem:[%s303] sm:$0x3]
      %s622 = scalar_lea.vmem %s3, 20
      %v623 = vld [vmem:[%s622] sm:$0xf]
      %v626 = vunpack.c.l.s4 1983009808
      %v627 = vunpack.c.0.s8 %v626
      %v628 = vlaneseq
      %v629 = vshrl.u32 %v628, 7
      %v630 = vsub.s32 %v627, %v629
      %v631 = vrot.slane %v621, %v630
      %632 = vrot.lane.b32.xlu0 %v631, 116
      %v633 = vpop.permute.xlu0 %632
      %v635 = vsel %vm347, %v623, 0
      %v638 = vsel %vm351, %v633, 0
      %640 = vmatprep.subr.bf16.mxu0 0
      %641 = vmatpush1.bf16.msra.mxu0 %v638
      %642 = vmatprep.subr.bf16.mxu0 0
      %643 = vmatpush1.bf16.msra.mxu0 0
      %644 = vmatprep.subr.bf16.mxu0 0
      %645 = vmatpush1.bf16.msra.mxu0 0
      %646 = vmatprep.subr.bf16.mxu0 0
      %647 = vmatpush1.bf16.msra.mxu0 0
      %648 = vmatprep.subr.bf16.mxu0 0
      %649 = vmatpush1.bf16.msra.mxu0 0
      %650 = vmatprep.subr.bf16.mxu0 0
      %651 = vmatpush1.bf16.msra.mxu0 0
      %652 = vmatprep.subr.bf16.mxu0 0
      %653 = vmatpush1.bf16.msra.mxu0 0
      %654 = vmatprep.subr.bf16.mxu0 0
      %655 = vmatpush1.bf16.msra.mxu0 0
      %656 = vmatprep.subr.bf16.mxu0 0
      %657 = vmatpush1.bf16.msra.mxu0 0
      %658 = vmatprep.subr.bf16.mxu0 0
      %659 = vmatpush1.bf16.msra.mxu0 0
      %660 = vmatprep.subr.bf16.mxu0 0
      %661 = vmatpush1.bf16.msra.mxu0 0
      %662 = vmatprep.subr.bf16.mxu0 0
      %663 = vmatpush1.bf16.msra.mxu0 0
      %664 = vmatprep.subr.bf16.mxu0 0
      %665 = vmatpush1.bf16.msra.mxu0 0
      %666 = vmatprep.subr.bf16.mxu0 0
      %667 = vmatpush1.bf16.msra.mxu0 0
      %668 = vmatprep.subr.bf16.mxu0 0
      %669 = vmatpush1.bf16.msra.mxu0 0
      %670 = vmatprep.subr.bf16.mxu0 0
      %671 = vmatpush1.bf16.msra.mxu0 0
      %672 = vmatprep.mubr.bf16.mxu0 0
      %673 = vmatmul.mubr.bf16.gmra.mrb[0].mxu0 %v635
      %v674 = vpop.f32.mrb[0].mxu0
      %v675 = vadd.f32 0.0, %v674
      %v676 = vpop.f32.mrb[0].mxu0
      %v677 = vpop.f32.mrb[0].mxu0
      %v678 = vpop.f32.mrb[0].mxu0
      %679 = vdwg.mxu0
      %v680 = vadd.f32 %v620, %v675
      %v681 = vld [vmem:[%s303] sm:$0x3]
      %s682 = scalar_lea.vmem %s3, 24
      %v683 = vld [vmem:[%s682] sm:$0xf]
      %v686 = vunpack.c.l.s4 1983009808
      %v687 = vunpack.c.0.s8 %v686
      %v688 = vlaneseq
      %v689 = vshrl.u32 %v688, 7
      %v690 = vsub.s32 %v687, %v689
      %v691 = vrot.slane %v681, %v690
      %692 = vrot.lane.b32.xlu0 %v691, 108
      %v693 = vpop.permute.xlu0 %692
      %v695 = vsel %vm347, %v683, 0
      %v698 = vsel %vm351, %v693, 0
      %700 = vmatprep.subr.bf16.mxu0 0
      %701 = vmatpush1.bf16.msra.mxu0 %v698
      %702 = vmatprep.subr.bf16.mxu0 0
      %703 = vmatpush1.bf16.msra.mxu0 0
      %704 = vmatprep.subr.bf16.mxu0 0
      %705 = vmatpush1.bf16.msra.mxu0 0
      %706 = vmatprep.subr.bf16.mxu0 0
      %707 = vmatpush1.bf16.msra.mxu0 0
      %708 = vmatprep.subr.bf16.mxu0 0
      %709 = vmatpush1.bf16.msra.mxu0 0
      %710 = vmatprep.subr.bf16.mxu0 0
      %711 = vmatpush1.bf16.msra.mxu0 0
      %712 = vmatprep.subr.bf16.mxu0 0
      %713 = vmatpush1.bf16.msra.mxu0 0
      %714 = vmatprep.subr.bf16.mxu0 0
      %715 = vmatpush1.bf16.msra.mxu0 0
      %716 = vmatprep.subr.bf16.mxu0 0
      %717 = vmatpush1.bf16.msra.mxu0 0
      %718 = vmatprep.subr.bf16.mxu0 0
      %719 = vmatpush1.bf16.msra.mxu0 0
      %720 = vmatprep.subr.bf16.mxu0 0
      %721 = vmatpush1.bf16.msra.mxu0 0
      %722 = vmatprep.subr.bf16.mxu0 0
      %723 = vmatpush1.bf16.msra.mxu0 0
      %724 = vmatprep.subr.bf16.mxu0 0
      %725 = vmatpush1.bf16.msra.mxu0 0
      %726 = vmatprep.subr.bf16.mxu0 0
      %727 = vmatpush1.bf16.msra.mxu0 0
      %728 = vmatprep.subr.bf16.mxu0 0
      %729 = vmatpush1.bf16.msra.mxu0 0
      %730 = vmatprep.subr.bf16.mxu0 0
      %731 = vmatpush1.bf16.msra.mxu0 0
      %732 = vmatprep.mubr.bf16.mxu0 0
      %733 = vmatmul.mubr.bf16.gmra.mrb[0].mxu0 %v695
      %v734 = vpop.f32.mrb[0].mxu0
      %v735 = vadd.f32 0.0, %v734
      %v736 = vpop.f32.mrb[0].mxu0
      %v737 = vpop.f32.mrb[0].mxu0
      %v738 = vpop.f32.mrb[0].mxu0
      %739 = vdwg.mxu0
      %v740 = vadd.f32 %v680, %v735
      %v741 = vld [vmem:[%s303] sm:$0x3]
      %s742 = scalar_lea.vmem %s3, 28
      %v743 = vld [vmem:[%s742] sm:$0xf]
      %v746 = vunpack.c.l.s4 1983009808
      %v747 = vunpack.c.0.s8 %v746
      %v748 = vlaneseq
      %v749 = vshrl.u32 %v748, 7
      %v750 = vsub.s32 %v747, %v749
      %v751 = vrot.slane %v741, %v750
      %752 = vrot.lane.b32.xlu0 %v751, 107
      %v753 = vpop.permute.xlu0 %752
      %v755 = vsel %vm347, %v743, 0
      %v758 = vsel %vm351, %v753, 0
      %760 = vmatprep.subr.bf16.mxu0 0
      %761 = vmatpush1.bf16.msra.mxu0 %v758
      %762 = vmatprep.subr.bf16.mxu0 0
      %763 = vmatpush1.bf16.msra.mxu0 0
      %764 = vmatprep.subr.bf16.mxu0 0
      %765 = vmatpush1.bf16.msra.mxu0 0
      %766 = vmatprep.subr.bf16.mxu0 0
      %767 = vmatpush1.bf16.msra.mxu0 0
      %768 = vmatprep.subr.bf16.mxu0 0
      %769 = vmatpush1.bf16.msra.mxu0 0
      %770 = vmatprep.subr.bf16.mxu0 0
      %771 = vmatpush1.bf16.msra.mxu0 0
      %772 = vmatprep.subr.bf16.mxu0 0
      %773 = vmatpush1.bf16.msra.mxu0 0
      %774 = vmatprep.subr.bf16.mxu0 0
      %775 = vmatpush1.bf16.msra.mxu0 0
      %776 = vmatprep.subr.bf16.mxu0 0
      %777 = vmatpush1.bf16.msra.mxu0 0
      %778 = vmatprep.subr.bf16.mxu0 0
      %779 = vmatpush1.bf16.msra.mxu0 0
      %780 = vmatprep.subr.bf16.mxu0 0
      %781 = vmatpush1.bf16.msra.mxu0 0
      %782 = vmatprep.subr.bf16.mxu0 0
      %783 = vmatpush1.bf16.msra.mxu0 0
      %784 = vmatprep.subr.bf16.mxu0 0
      %785 = vmatpush1.bf16.msra.mxu0 0
      %786 = vmatprep.subr.bf16.mxu0 0
      %787 = vmatpush1.bf16.msra.mxu0 0
      %788 = vmatprep.subr.bf16.mxu0 0
      %789 = vmatpush1.bf16.msra.mxu0 0
      %790 = vmatprep.subr.bf16.mxu0 0
      %791 = vmatpush1.bf16.msra.mxu0 0
      %792 = vmatprep.mubr.bf16.mxu0 0
      %793 = vmatmul.mubr.bf16.gmra.mrb[0].mxu0 %v755
      %v794 = vpop.f32.mrb[0].mxu0
      %v795 = vadd.f32 0.0, %v794
      %v796 = vpop.f32.mrb[0].mxu0
      %v797 = vpop.f32.mrb[0].mxu0
      %v798 = vpop.f32.mrb[0].mxu0
      %799 = vdwg.mxu0
      %v800 = vadd.f32 %v740, %v795
      %v801 = vld [vmem:[%s303] sm:$0x3]
      %s802 = scalar_lea.vmem %s3, 32
      %v803 = vld [vmem:[%s802] sm:$0xf]
      %v806 = vunpack.c.l.s4 1983009808
      %v807 = vunpack.c.0.s8 %v806
      %v808 = vlaneseq
      %v809 = vshrl.u32 %v808, 7
      %v810 = vsub.s32 %v807, %v809
      %v811 = vrot.slane %v801, %v810
      %812 = vrot.lane.b32.xlu0 %v811, 106
      %v813 = vpop.permute.xlu0 %812
      %v815 = vsel %vm347, %v803, 0
      %v818 = vsel %vm351, %v813, 0
      %820 = vmatprep.subr.bf16.mxu0 0
      %821 = vmatpush1.bf16.msra.mxu0 %v818
      %822 = vmatprep.subr.bf16.mxu0 0
      %823 = vmatpush1.bf16.msra.mxu0 0
      %824 = vmatprep.subr.bf16.mxu0 0
      %825 = vmatpush1.bf16.msra.mxu0 0
      %826 = vmatprep.subr.bf16.mxu0 0
      %827 = vmatpush1.bf16.msra.mxu0 0
      %828 = vmatprep.subr.bf16.mxu0 0
      %829 = vmatpush1.bf16.msra.mxu0 0
      %830 = vmatprep.subr.bf16.mxu0 0
      %831 = vmatpush1.bf16.msra.mxu0 0
      %832 = vmatprep.subr.bf16.mxu0 0
      %833 = vmatpush1.bf16.msra.mxu0 0
      %834 = vmatprep.subr.bf16.mxu0 0
      %835 = vmatpush1.bf16.msra.mxu0 0
      %836 = vmatprep.subr.bf16.mxu0 0
      %837 = vmatpush1.bf16.msra.mxu0 0
      %838 = vmatprep.subr.bf16.mxu0 0
      %839 = vmatpush1.bf16.msra.mxu0 0
      %840 = vmatprep.subr.bf16.mxu0 0
      %841 = vmatpush1.bf16.msra.mxu0 0
      %842 = vmatprep.subr.bf16.mxu0 0
      %843 = vmatpush1.bf16.msra.mxu0 0
      %844 = vmatprep.subr.bf16.mxu0 0
      %845 = vmatpush1.bf16.msra.mxu0 0
      %846 = vmatprep.subr.bf16.mxu0 0
      %847 = vmatpush1.bf16.msra.mxu0 0
      %848 = vmatprep.subr.bf16.mxu0 0
      %849 = vmatpush1.bf16.msra.mxu0 0
      %850 = vmatprep.subr.bf16.mxu0 0
      %851 = vmatpush1.bf16.msra.mxu0 0
      %852 = vmatprep.mubr.bf16.mxu0 0
      %853 = vmatmul.mubr.bf16.gmra.mrb[0].mxu0 %v815
      %v854 = vpop.f32.mrb[0].mxu0
      %v855 = vadd.f32 0.0, %v854
      %v856 = vpop.f32.mrb[0].mxu0
      %v857 = vpop.f32.mrb[0].mxu0
      %v858 = vpop.f32.mrb[0].mxu0
      %859 = vdwg.mxu0
      %v860 = vadd.f32 %v800, %v855
      %v861 = vld [vmem:[%s312] sm:$0x3]
      %s862 = scalar_lea.vmem %s3, 36
      %v863 = vld [vmem:[%s862] sm:$0xf]
      %v865 = vsel %vm347, %v863, 0
      %v868 = vsel %vm351, %v861, 0
      %870 = vmatprep.subr.bf16.mxu0 0
      %871 = vmatpush1.bf16.msra.mxu0 %v868
      %872 = vmatprep.subr.bf16.mxu0 0
      %873 = vmatpush1.bf16.msra.mxu0 0
      %874 = vmatprep.subr.bf16.mxu0 0
      %875 = vmatpush1.bf16.msra.mxu0 0
      %876 = vmatprep.subr.bf16.mxu0 0
      %877 = vmatpush1.bf16.msra.mxu0 0
      %878 = vmatprep.subr.bf16.mxu0 0
      %879 = vmatpush1.bf16.msra.mxu0 0
      %880 = vmatprep.subr.bf16.mxu0 0
      %881 = vmatpush1.bf16.msra.mxu0 0
      %882 = vmatprep.subr.bf16.mxu0 0
      %883 = vmatpush1.bf16.msra.mxu0 0
      %884 = vmatprep.subr.bf16.mxu0 0
      %885 = vmatpush1.bf16.msra.mxu0 0
      %886 = vmatprep.subr.bf16.mxu0 0
      %887 = vmatpush1.bf16.msra.mxu0 0
      %888 = vmatprep.subr.bf16.mxu0 0
      %889 = vmatpush1.bf16.msra.mxu0 0
      %890 = vmatprep.subr.bf16.mxu0 0
      %891 = vmatpush1.bf16.msra.mxu0 0
      %892 = vmatprep.subr.bf16.mxu0 0
      %893 = vmatpush1.bf16.msra.mxu0 0
      %894 = vmatprep.subr.bf16.mxu0 0
      %895 = vmatpush1.bf16.msra.mxu0 0
      %896 = vmatprep.subr.bf16.mxu0 0
      %897 = vmatpush1.bf16.msra.mxu0 0
      %898 = vmatprep.subr.bf16.mxu0 0
      %899 = vmatpush1.bf16.msra.mxu0 0
      %900 = vmatprep.subr.bf16.mxu0 0
      %901 = vmatpush1.bf16.msra.mxu0 0
      %902 = vmatprep.mubr.bf16.mxu0 0
      %903 = vmatmul.mubr.bf16.gmra.mrb[0].mxu0 %v865
      %v904 = vpop.f32.mrb[0].mxu0
      %v905 = vadd.f32 0.0, %v904
      %v906 = vpop.f32.mrb[0].mxu0
      %v907 = vpop.f32.mrb[0].mxu0
      %v908 = vpop.f32.mrb[0].mxu0
      %909 = vdwg.mxu0
      %v910 = vadd.f32 %v860, %v905
      %s911 = scalar_lea.vmem %s3, 40
      %v912 = vld [vmem:[%s911] sm:$0xf]
      %v915 = vunpack.c.l.s4 1983009808
      %v916 = vunpack.c.0.s8 %v915
      %v917 = vlaneseq
      %v918 = vshrl.u32 %v917, 7
      %v919 = vsub.s32 %v916, %v918
      %v920 = vrot.slane %v861, %v919
      %921 = vrot.lane.b32.xlu0 %v920, 127
      %v922 = vpop.permute.xlu0 %921
      %v924 = vsel %vm347, %v912, 0
      %v927 = vsel %vm351, %v922, 0
      %929 = vmatprep.subr.bf16.mxu0 0
      %930 = vmatpush1.bf16.msra.mxu0 %v927
      %931 = vmatprep.subr.bf16.mxu0 0
      %932 = vmatpush1.bf16.msra.mxu0 0
      %933 = vmatprep.subr.bf16.mxu0 0
      %934 = vmatpush1.bf16.msra.mxu0 0
      %935 = vmatprep.subr.bf16.mxu0 0
      %936 = vmatpush1.bf16.msra.mxu0 0
      %937 = vmatprep.subr.bf16.mxu0 0
      %938 = vmatpush1.bf16.msra.mxu0 0
      %939 = vmatprep.subr.bf16.mxu0 0
      %940 = vmatpush1.bf16.msra.mxu0 0
      %941 = vmatprep.subr.bf16.mxu0 0
      %942 = vmatpush1.bf16.msra.mxu0 0
      %943 = vmatprep.subr.bf16.mxu0 0
      %944 = vmatpush1.bf16.msra.mxu0 0
      %945 = vmatprep.subr.bf16.mxu0 0
      %946 = vmatpush1.bf16.msra.mxu0 0
      %947 = vmatprep.subr.bf16.mxu0 0
      %948 = vmatpush1.bf16.msra.mxu0 0
      %949 = vmatprep.subr.bf16.mxu0 0
      %950 = vmatpush1.bf16.msra.mxu0 0
      %951 = vmatprep.subr.bf16.mxu0 0
      %952 = vmatpush1.bf16.msra.mxu0 0
      %953 = vmatprep.subr.bf16.mxu0 0
      %954 = vmatpush1.bf16.msra.mxu0 0
      %955 = vmatprep.subr.bf16.mxu0 0
      %956 = vmatpush1.bf16.msra.mxu0 0
      %957 = vmatprep.subr.bf16.mxu0 0
      %958 = vmatpush1.bf16.msra.mxu0 0
      %959 = vmatprep.subr.bf16.mxu0 0
      %960 = vmatpush1.bf16.msra.mxu0 0
      %961 = vmatprep.mubr.bf16.mxu0 0
      %962 = vmatmul.mubr.bf16.gmra.mrb[0].mxu0 %v924
      %v963 = vpop.f32.mrb[0].mxu0
      %v964 = vadd.f32 0.0, %v963
      %v965 = vpop.f32.mrb[0].mxu0
      %v966 = vpop.f32.mrb[0].mxu0
      %v967 = vpop.f32.mrb[0].mxu0
      %968 = vdwg.mxu0
      %v969 = vadd.f32 %v910, %v964
      %v970 = vld [vmem:[%s312] sm:$0x3]
      %s971 = scalar_lea.vmem %s3, 44
      %v972 = vld [vmem:[%s971] sm:$0xf]
      %v975 = vunpack.c.l.s4 1983009808
      %v976 = vunpack.c.0.s8 %v975
      %v977 = vlaneseq
      %v978 = vshrl.u32 %v977, 7
      %v979 = vsub.s32 %v976, %v978
      %v980 = vrot.slane %v970, %v979
      %981 = vrot.lane.b32.xlu0 %v980, 126
      %v982 = vpop.permute.xlu0 %981
      %v984 = vsel %vm347, %v972, 0
      %v987 = vsel %vm351, %v982, 0
      %989 = vmatprep.subr.bf16.mxu0 0
      %990 = vmatpush1.bf16.msra.mxu0 %v987
      %991 = vmatprep.subr.bf16.mxu0 0
      %992 = vmatpush1.bf16.msra.mxu0 0
      %993 = vmatprep.subr.bf16.mxu0 0
      %994 = vmatpush1.bf16.msra.mxu0 0
      %995 = vmatprep.subr.bf16.mxu0 0
      %996 = vmatpush1.bf16.msra.mxu0 0
      %997 = vmatprep.subr.bf16.mxu0 0
      %998 = vmatpush1.bf16.msra.mxu0 0
      %999 = vmatprep.subr.bf16.mxu0 0
      %1000 = vmatpush1.bf16.msra.mxu0 0
      %1001 = vmatprep.subr.bf16.mxu0 0
      %1002 = vmatpush1.bf16.msra.mxu0 0
      %1003 = vmatprep.subr.bf16.mxu0 0
      %1004 = vmatpush1.bf16.msra.mxu0 0
      %1005 = vmatprep.subr.bf16.mxu0 0
      %1006 = vmatpush1.bf16.msra.mxu0 0
      %1007 = vmatprep.subr.bf16.mxu0 0
      %1008 = vmatpush1.bf16.msra.mxu0 0
      %1009 = vmatprep.subr.bf16.mxu0 0
      %1010 = vmatpush1.bf16.msra.mxu0 0
      %1011 = vmatprep.subr.bf16.mxu0 0
      %1012 = vmatpush1.bf16.msra.mxu0 0
      %1013 = vmatprep.subr.bf16.mxu0 0
      %1014 = vmatpush1.bf16.msra.mxu0 0
      %1015 = vmatprep.subr.bf16.mxu0 0
      %1016 = vmatpush1.bf16.msra.mxu0 0
      %1017 = vmatprep.subr.bf16.mxu0 0
      %1018 = vmatpush1.bf16.msra.mxu0 0
      %1019 = vmatprep.subr.bf16.mxu0 0
      %1020 = vmatpush1.bf16.msra.mxu0 0
      %1021 = vmatprep.mubr.bf16.mxu0 0
      %1022 = vmatmul.mubr.bf16.gmra.mrb[0].mxu0 %v984
      %v1023 = vpop.f32.mrb[0].mxu0
      %v1024 = vadd.f32 0.0, %v1023
      %v1025 = vpop.f32.mrb[0].mxu0
      %v1026 = vpop.f32.mrb[0].mxu0
      %v1027 = vpop.f32.mrb[0].mxu0
      %1028 = vdwg.mxu0
      %v1029 = vadd.f32 %v969, %v1024
      %v1030 = vld [vmem:[%s312] sm:$0x3]
      %s1031 = scalar_lea.vmem %s3, 48
      %v1032 = vld [vmem:[%s1031] sm:$0xf]
      %v1035 = vunpack.c.l.s4 1983009808
      %v1036 = vunpack.c.0.s8 %v1035
      %v1037 = vlaneseq
      %v1038 = vshrl.u32 %v1037, 7
      %v1039 = vsub.s32 %v1036, %v1038
      %v1040 = vrot.slane %v1030, %v1039
      %1041 = vrot.lane.b32.xlu0 %v1040, 118
      %v1042 = vpop.permute.xlu0 %1041
      %v1044 = vsel %vm347, %v1032, 0
      %v1047 = vsel %vm351, %v1042, 0
      %1049 = vmatprep.subr.bf16.mxu0 0
      %1050 = vmatpush1.bf16.msra.mxu0 %v1047
      %1051 = vmatprep.subr.bf16.mxu0 0
      %1052 = vmatpush1.bf16.msra.mxu0 0
      %1053 = vmatprep.subr.bf16.mxu0 0
      %1054 = vmatpush1.bf16.msra.mxu0 0
      %1055 = vmatprep.subr.bf16.mxu0 0
      %1056 = vmatpush1.bf16.msra.mxu0 0
      %1057 = vmatprep.subr.bf16.mxu0 0
      %1058 = vmatpush1.bf16.msra.mxu0 0
      %1059 = vmatprep.subr.bf16.mxu0 0
      %1060 = vmatpush1.bf16.msra.mxu0 0
      %1061 = vmatprep.subr.bf16.mxu0 0
      %1062 = vmatpush1.bf16.msra.mxu0 0
      %1063 = vmatprep.subr.bf16.mxu0 0
      %1064 = vmatpush1.bf16.msra.mxu0 0
      %1065 = vmatprep.subr.bf16.mxu0 0
      %1066 = vmatpush1.bf16.msra.mxu0 0
      %1067 = vmatprep.subr.bf16.mxu0 0
      %1068 = vmatpush1.bf16.msra.mxu0 0
      %1069 = vmatprep.subr.bf16.mxu0 0
      %1070 = vmatpush1.bf16.msra.mxu0 0
      %1071 = vmatprep.subr.bf16.mxu0 0
      %1072 = vmatpush1.bf16.msra.mxu0 0
      %1073 = vmatprep.subr.bf16.mxu0 0
      %1074 = vmatpush1.bf16.msra.mxu0 0
      %1075 = vmatprep.subr.bf16.mxu0 0
      %1076 = vmatpush1.bf16.msra.mxu0 0
      %1077 = vmatprep.subr.bf16.mxu0 0
      %1078 = vmatpush1.bf16.msra.mxu0 0
      %1079 = vmatprep.subr.bf16.mxu0 0
      %1080 = vmatpush1.bf16.msra.mxu0 0
      %1081 = vmatprep.mubr.bf16.mxu0 0
      %1082 = vmatmul.mubr.bf16.gmra.mrb[0].mxu0 %v1044
      %v1083 = vpop.f32.mrb[0].mxu0
      %v1084 = vadd.f32 0.0, %v1083
      %v1085 = vpop.f32.mrb[0].mxu0
      %v1086 = vpop.f32.mrb[0].mxu0
      %v1087 = vpop.f32.mrb[0].mxu0
      %1088 = vdwg.mxu0
      %v1089 = vadd.f32 %v1029, %v1084
      %v1090 = vld [vmem:[%s312] sm:$0x3]
      %s1091 = scalar_lea.vmem %s3, 52
      %v1092 = vld [vmem:[%s1091] sm:$0xf]
      %v1095 = vunpack.c.l.s4 1983009808
      %v1096 = vunpack.c.0.s8 %v1095
      %v1097 = vlaneseq
      %v1098 = vshrl.u32 %v1097, 7
      %v1099 = vsub.s32 %v1096, %v1098
      %v1100 = vrot.slane %v1090, %v1099
      %1101 = vrot.lane.b32.xlu0 %v1100, 117
      %v1102 = vpop.permute.xlu0 %1101
      %v1104 = vsel %vm347, %v1092, 0
      %v1107 = vsel %vm351, %v1102, 0
      %1109 = vmatprep.subr.bf16.mxu0 0
      %1110 = vmatpush1.bf16.msra.mxu0 %v1107
      %1111 = vmatprep.subr.bf16.mxu0 0
      %1112 = vmatpush1.bf16.msra.mxu0 0
      %1113 = vmatprep.subr.bf16.mxu0 0
      %1114 = vmatpush1.bf16.msra.mxu0 0
      %1115 = vmatprep.subr.bf16.mxu0 0
      %1116 = vmatpush1.bf16.msra.mxu0 0
      %1117 = vmatprep.subr.bf16.mxu0 0
      %1118 = vmatpush1.bf16.msra.mxu0 0
      %1119 = vmatprep.subr.bf16.mxu0 0
      %1120 = vmatpush1.bf16.msra.mxu0 0
      %1121 = vmatprep.subr.bf16.mxu0 0
      %1122 = vmatpush1.bf16.msra.mxu0 0
      %1123 = vmatprep.subr.bf16.mxu0 0
      %1124 = vmatpush1.bf16.msra.mxu0 0
      %1125 = vmatprep.subr.bf16.mxu0 0
      %1126 = vmatpush1.bf16.msra.mxu0 0
      %1127 = vmatprep.subr.bf16.mxu0 0
      %1128 = vmatpush1.bf16.msra.mxu0 0
      %1129 = vmatprep.subr.bf16.mxu0 0
      %1130 = vmatpush1.bf16.msra.mxu0 0
      %1131 = vmatprep.subr.bf16.mxu0 0
      %1132 = vmatpush1.bf16.msra.mxu0 0
      %1133 = vmatprep.subr.bf16.mxu0 0
      %1134 = vmatpush1.bf16.msra.mxu0 0
      %1135 = vmatprep.subr.bf16.mxu0 0
      %1136 = vmatpush1.bf16.msra.mxu0 0
      %1137 = vmatprep.subr.bf16.mxu0 0
      %1138 = vmatpush1.bf16.msra.mxu0 0
      %1139 = vmatprep.subr.bf16.mxu0 0
      %1140 = vmatpush1.bf16.msra.mxu0 0
      %1141 = vmatprep.mubr.bf16.mxu0 0
      %1142 = vmatmul.mubr.bf16.gmra.mrb[0].mxu0 %v1104
      %v1143 = vpop.f32.mrb[0].mxu0
      %v1144 = vadd.f32 0.0, %v1143
      %v1145 = vpop.f32.mrb[0].mxu0
      %v1146 = vpop.f32.mrb[0].mxu0
      %v1147 = vpop.f32.mrb[0].mxu0
      %1148 = vdwg.mxu0
      %v1149 = vadd.f32 %v1089, %v1144
      %v1150 = vld [vmem:[%s312] sm:$0x3]
      %s1151 = scalar_lea.vmem %s3, 56
      %v1152 = vld [vmem:[%s1151] sm:$0xf]
      %v1155 = vunpack.c.l.s4 1983009808
      %v1156 = vunpack.c.0.s8 %v1155
      %v1157 = vlaneseq
      %v1158 = vshrl.u32 %v1157, 7
      %v1159 = vsub.s32 %v1156, %v1158
      %v1160 = vrot.slane %v1150, %v1159
      %1161 = vrot.lane.b32.xlu0 %v1160, 116
      %v1162 = vpop.permute.xlu0 %1161
      %v1164 = vsel %vm347, %v1152, 0
      %v1167 = vsel %vm351, %v1162, 0
      %1169 = vmatprep.subr.bf16.mxu0 0
      %1170 = vmatpush1.bf16.msra.mxu0 %v1167
      %1171 = vmatprep.subr.bf16.mxu0 0
      %1172 = vmatpush1.bf16.msra.mxu0 0
      %1173 = vmatprep.subr.bf16.mxu0 0
      %1174 = vmatpush1.bf16.msra.mxu0 0
      %1175 = vmatprep.subr.bf16.mxu0 0
      %1176 = vmatpush1.bf16.msra.mxu0 0
      %1177 = vmatprep.subr.bf16.mxu0 0
      %1178 = vmatpush1.bf16.msra.mxu0 0
      %1179 = vmatprep.subr.bf16.mxu0 0
      %1180 = vmatpush1.bf16.msra.mxu0 0
      %1181 = vmatprep.subr.bf16.mxu0 0
      %1182 = vmatpush1.bf16.msra.mxu0 0
      %1183 = vmatprep.subr.bf16.mxu0 0
      %1184 = vmatpush1.bf16.msra.mxu0 0
      %1185 = vmatprep.subr.bf16.mxu0 0
      %1186 = vmatpush1.bf16.msra.mxu0 0
      %1187 = vmatprep.subr.bf16.mxu0 0
      %1188 = vmatpush1.bf16.msra.mxu0 0
      %1189 = vmatprep.subr.bf16.mxu0 0
      %1190 = vmatpush1.bf16.msra.mxu0 0
      %1191 = vmatprep.subr.bf16.mxu0 0
      %1192 = vmatpush1.bf16.msra.mxu0 0
      %1193 = vmatprep.subr.bf16.mxu0 0
      %1194 = vmatpush1.bf16.msra.mxu0 0
      %1195 = vmatprep.subr.bf16.mxu0 0
      %1196 = vmatpush1.bf16.msra.mxu0 0
      %1197 = vmatprep.subr.bf16.mxu0 0
      %1198 = vmatpush1.bf16.msra.mxu0 0
      %1199 = vmatprep.subr.bf16.mxu0 0
      %1200 = vmatpush1.bf16.msra.mxu0 0
      %1201 = vmatprep.mubr.bf16.mxu0 0
      %1202 = vmatmul.mubr.bf16.gmra.mrb[0].mxu0 %v1164
      %v1203 = vpop.f32.mrb[0].mxu0
      %v1204 = vadd.f32 0.0, %v1203
      %v1205 = vpop.f32.mrb[0].mxu0
      %v1206 = vpop.f32.mrb[0].mxu0
      %v1207 = vpop.f32.mrb[0].mxu0
      %1208 = vdwg.mxu0
      %v1209 = vadd.f32 %v1149, %v1204
      %v1210 = vld [vmem:[%s312] sm:$0x3]
      %s1211 = scalar_lea.vmem %s3, 60
      %v1212 = vld [vmem:[%s1211] sm:$0xf]
      %v1215 = vunpack.c.l.s4 1983009808
      %v1216 = vunpack.c.0.s8 %v1215
      %v1217 = vlaneseq
      %v1218 = vshrl.u32 %v1217, 7
      %v1219 = vsub.s32 %v1216, %v1218
      %v1220 = vrot.slane %v1210, %v1219
      %1221 = vrot.lane.b32.xlu0 %v1220, 108
      %v1222 = vpop.permute.xlu0 %1221
      %v1224 = vsel %vm347, %v1212, 0
      %v1227 = vsel %vm351, %v1222, 0
      %1229 = vmatprep.subr.bf16.mxu0 0
      %1230 = vmatpush1.bf16.msra.mxu0 %v1227
      %1231 = vmatprep.subr.bf16.mxu0 0
      %1232 = vmatpush1.bf16.msra.mxu0 0
      %1233 = vmatprep.subr.bf16.mxu0 0
      %1234 = vmatpush1.bf16.msra.mxu0 0
      %1235 = vmatprep.subr.bf16.mxu0 0
      %1236 = vmatpush1.bf16.msra.mxu0 0
      %1237 = vmatprep.subr.bf16.mxu0 0
      %1238 = vmatpush1.bf16.msra.mxu0 0
      %1239 = vmatprep.subr.bf16.mxu0 0
      %1240 = vmatpush1.bf16.msra.mxu0 0
      %1241 = vmatprep.subr.bf16.mxu0 0
      %1242 = vmatpush1.bf16.msra.mxu0 0
      %1243 = vmatprep.subr.bf16.mxu0 0
      %1244 = vmatpush1.bf16.msra.mxu0 0
      %1245 = vmatprep.subr.bf16.mxu0 0
      %1246 = vmatpush1.bf16.msra.mxu0 0
      %1247 = vmatprep.subr.bf16.mxu0 0
      %1248 = vmatpush1.bf16.msra.mxu0 0
      %1249 = vmatprep.subr.bf16.mxu0 0
      %1250 = vmatpush1.bf16.msra.mxu0 0
      %1251 = vmatprep.subr.bf16.mxu0 0
      %1252 = vmatpush1.bf16.msra.mxu0 0
      %1253 = vmatprep.subr.bf16.mxu0 0
      %1254 = vmatpush1.bf16.msra.mxu0 0
      %1255 = vmatprep.subr.bf16.mxu0 0
      %1256 = vmatpush1.bf16.msra.mxu0 0
      %1257 = vmatprep.subr.bf16.mxu0 0
      %1258 = vmatpush1.bf16.msra.mxu0 0
      %1259 = vmatprep.subr.bf16.mxu0 0
      %1260 = vmatpush1.bf16.msra.mxu0 0
      %1261 = vmatprep.mubr.bf16.mxu0 0
      %1262 = vmatmul.mubr.bf16.gmra.mrb[0].mxu0 %v1224
      %v1263 = vpop.f32.mrb[0].mxu0
      %v1264 = vadd.f32 0.0, %v1263
      %v1265 = vpop.f32.mrb[0].mxu0
      %v1266 = vpop.f32.mrb[0].mxu0
      %v1267 = vpop.f32.mrb[0].mxu0
      %1268 = vdwg.mxu0
      %v1269 = vadd.f32 %v1209, %v1264
      %v1270 = vld [vmem:[%s312] sm:$0x3]
      %s1271 = scalar_lea.vmem %s3, 64
      %v1272 = vld [vmem:[%s1271] sm:$0xf]
      %v1275 = vunpack.c.l.s4 1983009808
      %v1276 = vunpack.c.0.s8 %v1275
      %v1277 = vlaneseq
      %v1278 = vshrl.u32 %v1277, 7
      %v1279 = vsub.s32 %v1276, %v1278
      %v1280 = vrot.slane %v1270, %v1279
      %1281 = vrot.lane.b32.xlu0 %v1280, 107
      %v1282 = vpop.permute.xlu0 %1281
      %v1284 = vsel %vm347, %v1272, 0
      %v1287 = vsel %vm351, %v1282, 0
      %1289 = vmatprep.subr.bf16.mxu0 0
      %1290 = vmatpush1.bf16.msra.mxu0 %v1287
      %1291 = vmatprep.subr.bf16.mxu0 0
      %1292 = vmatpush1.bf16.msra.mxu0 0
      %1293 = vmatprep.subr.bf16.mxu0 0
      %1294 = vmatpush1.bf16.msra.mxu0 0
      %1295 = vmatprep.subr.bf16.mxu0 0
      %1296 = vmatpush1.bf16.msra.mxu0 0
      %1297 = vmatprep.subr.bf16.mxu0 0
      %1298 = vmatpush1.bf16.msra.mxu0 0
      %1299 = vmatprep.subr.bf16.mxu0 0
      %1300 = vmatpush1.bf16.msra.mxu0 0
      %1301 = vmatprep.subr.bf16.mxu0 0
      %1302 = vmatpush1.bf16.msra.mxu0 0
      %1303 = vmatprep.subr.bf16.mxu0 0
      %1304 = vmatpush1.bf16.msra.mxu0 0
      %1305 = vmatprep.subr.bf16.mxu0 0
      %1306 = vmatpush1.bf16.msra.mxu0 0
      %1307 = vmatprep.subr.bf16.mxu0 0
      %1308 = vmatpush1.bf16.msra.mxu0 0
      %1309 = vmatprep.subr.bf16.mxu0 0
      %1310 = vmatpush1.bf16.msra.mxu0 0
      %1311 = vmatprep.subr.bf16.mxu0 0
      %1312 = vmatpush1.bf16.msra.mxu0 0
      %1313 = vmatprep.subr.bf16.mxu0 0
      %1314 = vmatpush1.bf16.msra.mxu0 0
      %1315 = vmatprep.subr.bf16.mxu0 0
      %1316 = vmatpush1.bf16.msra.mxu0 0
      %1317 = vmatprep.subr.bf16.mxu0 0
      %1318 = vmatpush1.bf16.msra.mxu0 0
      %1319 = vmatprep.subr.bf16.mxu0 0
      %1320 = vmatpush1.bf16.msra.mxu0 0
      %1321 = vmatprep.mubr.bf16.mxu0 0
      %1322 = vmatmul.mubr.bf16.gmra.mrb[0].mxu0 %v1284
      %v1323 = vpop.f32.mrb[0].mxu0
      %v1324 = vadd.f32 0.0, %v1323
      %v1325 = vpop.f32.mrb[0].mxu0
      %v1326 = vpop.f32.mrb[0].mxu0
      %v1327 = vpop.f32.mrb[0].mxu0
      %1328 = vdwg.mxu0
      %v1329 = vadd.f32 %v1269, %v1324
      %v1330 = vld [vmem:[%s312] sm:$0x3]
      %s1331 = scalar_lea.vmem %s3, 68
      %v1332 = vld [vmem:[%s1331] sm:$0xf]
      %v1335 = vunpack.c.l.s4 1983009808
      %v1336 = vunpack.c.0.s8 %v1335
      %v1337 = vlaneseq
      %v1338 = vshrl.u32 %v1337, 7
      %v1339 = vsub.s32 %v1336, %v1338
      %v1340 = vrot.slane %v1330, %v1339
      %1341 = vrot.lane.b32.xlu0 %v1340, 106
      %v1342 = vpop.permute.xlu0 %1341
      %v1344 = vsel %vm347, %v1332, 0
      %v1347 = vsel %vm351, %v1342, 0
      %1349 = vmatprep.subr.bf16.mxu0 0
      %1350 = vmatpush1.bf16.msra.mxu0 %v1347
      %1351 = vmatprep.subr.bf16.mxu0 0
      %1352 = vmatpush1.bf16.msra.mxu0 0
      %1353 = vmatprep.subr.bf16.mxu0 0
      %1354 = vmatpush1.bf16.msra.mxu0 0
      %1355 = vmatprep.subr.bf16.mxu0 0
      %1356 = vmatpush1.bf16.msra.mxu0 0
      %1357 = vmatprep.subr.bf16.mxu0 0
      %1358 = vmatpush1.bf16.msra.mxu0 0
      %1359 = vmatprep.subr.bf16.mxu0 0
      %1360 = vmatpush1.bf16.msra.mxu0 0
      %1361 = vmatprep.subr.bf16.mxu0 0
      %1362 = vmatpush1.bf16.msra.mxu0 0
      %1363 = vmatprep.subr.bf16.mxu0 0
      %1364 = vmatpush1.bf16.msra.mxu0 0
      %1365 = vmatprep.subr.bf16.mxu0 0
      %1366 = vmatpush1.bf16.msra.mxu0 0
      %1367 = vmatprep.subr.bf16.mxu0 0
      %1368 = vmatpush1.bf16.msra.mxu0 0
      %1369 = vmatprep.subr.bf16.mxu0 0
      %1370 = vmatpush1.bf16.msra.mxu0 0
      %1371 = vmatprep.subr.bf16.mxu0 0
      %1372 = vmatpush1.bf16.msra.mxu0 0
      %1373 = vmatprep.subr.bf16.mxu0 0
      %1374 = vmatpush1.bf16.msra.mxu0 0
      %1375 = vmatprep.subr.bf16.mxu0 0
      %1376 = vmatpush1.bf16.msra.mxu0 0
      %1377 = vmatprep.subr.bf16.mxu0 0
      %1378 = vmatpush1.bf16.msra.mxu0 0
      %1379 = vmatprep.subr.bf16.mxu0 0
      %1380 = vmatpush1.bf16.msra.mxu0 0
      %1381 = vmatprep.mubr.bf16.mxu0 0
      %1382 = vmatmul.mubr.bf16.gmra.mrb[0].mxu0 %v1344
      %v1383 = vpop.f32.mrb[0].mxu0
      %v1384 = vadd.f32 0.0, %v1383
      %v1385 = vpop.f32.mrb[0].mxu0
      %v1386 = vpop.f32.mrb[0].mxu0
      %v1387 = vpop.f32.mrb[0].mxu0
      %1388 = vdwg.mxu0
      %v1389 = vadd.f32 %v1329, %v1384
      %v1390 = vld [vmem:[%s322] sm:$0x3]
      %s1391 = scalar_lea.vmem %s3, 72
      %v1392 = vld [vmem:[%s1391] sm:$0xf]
      %v1394 = vsel %vm347, %v1392, 0
      %v1397 = vsel %vm351, %v1390, 0
      %1399 = vmatprep.subr.bf16.mxu0 0
      %1400 = vmatpush1.bf16.msra.mxu0 %v1397
      %1401 = vmatprep.subr.bf16.mxu0 0
      %1402 = vmatpush1.bf16.msra.mxu0 0
      %1403 = vmatprep.subr.bf16.mxu0 0
      %1404 = vmatpush1.bf16.msra.mxu0 0
      %1405 = vmatprep.subr.bf16.mxu0 0
      %1406 = vmatpush1.bf16.msra.mxu0 0
      %1407 = vmatprep.subr.bf16.mxu0 0
      %1408 = vmatpush1.bf16.msra.mxu0 0
      %1409 = vmatprep.subr.bf16.mxu0 0
      %1410 = vmatpush1.bf16.msra.mxu0 0
      %1411 = vmatprep.subr.bf16.mxu0 0
      %1412 = vmatpush1.bf16.msra.mxu0 0
      %1413 = vmatprep.subr.bf16.mxu0 0
      %1414 = vmatpush1.bf16.msra.mxu0 0
      %1415 = vmatprep.subr.bf16.mxu0 0
      %1416 = vmatpush1.bf16.msra.mxu0 0
      %1417 = vmatprep.subr.bf16.mxu0 0
      %1418 = vmatpush1.bf16.msra.mxu0 0
      %1419 = vmatprep.subr.bf16.mxu0 0
      %1420 = vmatpush1.bf16.msra.mxu0 0
      %1421 = vmatprep.subr.bf16.mxu0 0
      %1422 = vmatpush1.bf16.msra.mxu0 0
      %1423 = vmatprep.subr.bf16.mxu0 0
      %1424 = vmatpush1.bf16.msra.mxu0 0
      %1425 = vmatprep.subr.bf16.mxu0 0
      %1426 = vmatpush1.bf16.msra.mxu0 0
      %1427 = vmatprep.subr.bf16.mxu0 0
      %1428 = vmatpush1.bf16.msra.mxu0 0
      %1429 = vmatprep.subr.bf16.mxu0 0
      %1430 = vmatpush1.bf16.msra.mxu0 0
      %1431 = vmatprep.mubr.bf16.mxu0 0
      %1432 = vmatmul.mubr.bf16.gmra.mrb[0].mxu0 %v1394
      %v1433 = vpop.f32.mrb[0].mxu0
      %v1434 = vadd.f32 0.0, %v1433
      %v1435 = vpop.f32.mrb[0].mxu0
      %v1436 = vpop.f32.mrb[0].mxu0
      %v1437 = vpop.f32.mrb[0].mxu0
      %1438 = vdwg.mxu0
      %v1439 = vadd.f32 %v1389, %v1434
      %s1440 = scalar_lea.vmem %s3, 76
      %v1441 = vld [vmem:[%s1440] sm:$0xf]
      %v1444 = vunpack.c.l.s4 1983009808
      %v1445 = vunpack.c.0.s8 %v1444
      %v1446 = vlaneseq
      %v1447 = vshrl.u32 %v1446, 7
      %v1448 = vsub.s32 %v1445, %v1447
      %v1449 = vrot.slane %v1390, %v1448
      %1450 = vrot.lane.b32.xlu0 %v1449, 127
      %v1451 = vpop.permute.xlu0 %1450
      %v1453 = vsel %vm347, %v1441, 0
      %v1456 = vsel %vm351, %v1451, 0
      %1458 = vmatprep.subr.bf16.mxu0 0
      %1459 = vmatpush1.bf16.msra.mxu0 %v1456
      %1460 = vmatprep.subr.bf16.mxu0 0
      %1461 = vmatpush1.bf16.msra.mxu0 0
      %1462 = vmatprep.subr.bf16.mxu0 0
      %1463 = vmatpush1.bf16.msra.mxu0 0
      %1464 = vmatprep.subr.bf16.mxu0 0
      %1465 = vmatpush1.bf16.msra.mxu0 0
      %1466 = vmatprep.subr.bf16.mxu0 0
      %1467 = vmatpush1.bf16.msra.mxu0 0
      %1468 = vmatprep.subr.bf16.mxu0 0
      %1469 = vmatpush1.bf16.msra.mxu0 0
      %1470 = vmatprep.subr.bf16.mxu0 0
      %1471 = vmatpush1.bf16.msra.mxu0 0
      %1472 = vmatprep.subr.bf16.mxu0 0
      %1473 = vmatpush1.bf16.msra.mxu0 0
      %1474 = vmatprep.subr.bf16.mxu0 0
      %1475 = vmatpush1.bf16.msra.mxu0 0
      %1476 = vmatprep.subr.bf16.mxu0 0
      %1477 = vmatpush1.bf16.msra.mxu0 0
      %1478 = vmatprep.subr.bf16.mxu0 0
      %1479 = vmatpush1.bf16.msra.mxu0 0
      %1480 = vmatprep.subr.bf16.mxu0 0
      %1481 = vmatpush1.bf16.msra.mxu0 0
      %1482 = vmatprep.subr.bf16.mxu0 0
      %1483 = vmatpush1.bf16.msra.mxu0 0
      %1484 = vmatprep.subr.bf16.mxu0 0
      %1485 = vmatpush1.bf16.msra.mxu0 0
      %1486 = vmatprep.subr.bf16.mxu0 0
      %1487 = vmatpush1.bf16.msra.mxu0 0
      %1488 = vmatprep.subr.bf16.mxu0 0
      %1489 = vmatpush1.bf16.msra.mxu0 0
      %1490 = vmatprep.mubr.bf16.mxu0 0
      %1491 = vmatmul.mubr.bf16.gmra.mrb[0].mxu0 %v1453
      %v1492 = vpop.f32.mrb[0].mxu0
      %v1493 = vadd.f32 0.0, %v1492
      %v1494 = vpop.f32.mrb[0].mxu0
      %v1495 = vpop.f32.mrb[0].mxu0
      %v1496 = vpop.f32.mrb[0].mxu0
      %1497 = vdwg.mxu0
      %v1498 = vadd.f32 %v1439, %v1493
      %v1499 = vld [vmem:[%s322] sm:$0x3]
      %s1500 = scalar_lea.vmem %s3, 80
      %v1501 = vld [vmem:[%s1500] sm:$0xf]
      %v1504 = vunpack.c.l.s4 1983009808
      %v1505 = vunpack.c.0.s8 %v1504
      %v1506 = vlaneseq
      %v1507 = vshrl.u32 %v1506, 7
      %v1508 = vsub.s32 %v1505, %v1507
      %v1509 = vrot.slane %v1499, %v1508
      %1510 = vrot.lane.b32.xlu0 %v1509, 126
      %v1511 = vpop.permute.xlu0 %1510
      %v1513 = vsel %vm347, %v1501, 0
      %v1516 = vsel %vm351, %v1511, 0
      %1518 = vmatprep.subr.bf16.mxu0 0
      %1519 = vmatpush1.bf16.msra.mxu0 %v1516
      %1520 = vmatprep.subr.bf16.mxu0 0
      %1521 = vmatpush1.bf16.msra.mxu0 0
      %1522 = vmatprep.subr.bf16.mxu0 0
      %1523 = vmatpush1.bf16.msra.mxu0 0
      %1524 = vmatprep.subr.bf16.mxu0 0
      %1525 = vmatpush1.bf16.msra.mxu0 0
      %1526 = vmatprep.subr.bf16.mxu0 0
      %1527 = vmatpush1.bf16.msra.mxu0 0
      %1528 = vmatprep.subr.bf16.mxu0 0
      %1529 = vmatpush1.bf16.msra.mxu0 0
      %1530 = vmatprep.subr.bf16.mxu0 0
      %1531 = vmatpush1.bf16.msra.mxu0 0
      %1532 = vmatprep.subr.bf16.mxu0 0
      %1533 = vmatpush1.bf16.msra.mxu0 0
      %1534 = vmatprep.subr.bf16.mxu0 0
      %1535 = vmatpush1.bf16.msra.mxu0 0
      %1536 = vmatprep.subr.bf16.mxu0 0
      %1537 = vmatpush1.bf16.msra.mxu0 0
      %1538 = vmatprep.subr.bf16.mxu0 0
      %1539 = vmatpush1.bf16.msra.mxu0 0
      %1540 = vmatprep.subr.bf16.mxu0 0
      %1541 = vmatpush1.bf16.msra.mxu0 0
      %1542 = vmatprep.subr.bf16.mxu0 0
      %1543 = vmatpush1.bf16.msra.mxu0 0
      %1544 = vmatprep.subr.bf16.mxu0 0
      %1545 = vmatpush1.bf16.msra.mxu0 0
      %1546 = vmatprep.subr.bf16.mxu0 0
      %1547 = vmatpush1.bf16.msra.mxu0 0
      %1548 = vmatprep.subr.bf16.mxu0 0
      %1549 = vmatpush1.bf16.msra.mxu0 0
      %1550 = vmatprep.mubr.bf16.mxu0 0
      %1551 = vmatmul.mubr.bf16.gmra.mrb[0].mxu0 %v1513
      %v1552 = vpop.f32.mrb[0].mxu0
      %v1553 = vadd.f32 0.0, %v1552
      %v1554 = vpop.f32.mrb[0].mxu0
      %v1555 = vpop.f32.mrb[0].mxu0
      %v1556 = vpop.f32.mrb[0].mxu0
      %1557 = vdwg.mxu0
      %v1558 = vadd.f32 %v1498, %v1553
      %v1559 = vld [vmem:[%s322] sm:$0x3]
      %s1560 = scalar_lea.vmem %s3, 84
      %v1561 = vld [vmem:[%s1560] sm:$0xf]
      %v1564 = vunpack.c.l.s4 1983009808
      %v1565 = vunpack.c.0.s8 %v1564
      %v1566 = vlaneseq
      %v1567 = vshrl.u32 %v1566, 7
      %v1568 = vsub.s32 %v1565, %v1567
      %v1569 = vrot.slane %v1559, %v1568
      %1570 = vrot.lane.b32.xlu0 %v1569, 118
      %v1571 = vpop.permute.xlu0 %1570
      %v1573 = vsel %vm347, %v1561, 0
      %v1576 = vsel %vm351, %v1571, 0
      %1578 = vmatprep.subr.bf16.mxu0 0
      %1579 = vmatpush1.bf16.msra.mxu0 %v1576
      %1580 = vmatprep.subr.bf16.mxu0 0
      %1581 = vmatpush1.bf16.msra.mxu0 0
      %1582 = vmatprep.subr.bf16.mxu0 0
      %1583 = vmatpush1.bf16.msra.mxu0 0
      %1584 = vmatprep.subr.bf16.mxu0 0
      %1585 = vmatpush1.bf16.msra.mxu0 0
      %1586 = vmatprep.subr.bf16.mxu0 0
      %1587 = vmatpush1.bf16.msra.mxu0 0
      %1588 = vmatprep.subr.bf16.mxu0 0
      %1589 = vmatpush1.bf16.msra.mxu0 0
      %1590 = vmatprep.subr.bf16.mxu0 0
      %1591 = vmatpush1.bf16.msra.mxu0 0
      %1592 = vmatprep.subr.bf16.mxu0 0
      %1593 = vmatpush1.bf16.msra.mxu0 0
      %1594 = vmatprep.subr.bf16.mxu0 0
      %1595 = vmatpush1.bf16.msra.mxu0 0
      %1596 = vmatprep.subr.bf16.mxu0 0
      %1597 = vmatpush1.bf16.msra.mxu0 0
      %1598 = vmatprep.subr.bf16.mxu0 0
      %1599 = vmatpush1.bf16.msra.mxu0 0
      %1600 = vmatprep.subr.bf16.mxu0 0
      %1601 = vmatpush1.bf16.msra.mxu0 0
      %1602 = vmatprep.subr.bf16.mxu0 0
      %1603 = vmatpush1.bf16.msra.mxu0 0
      %1604 = vmatprep.subr.bf16.mxu0 0
      %1605 = vmatpush1.bf16.msra.mxu0 0
      %1606 = vmatprep.subr.bf16.mxu0 0
      %1607 = vmatpush1.bf16.msra.mxu0 0
      %1608 = vmatprep.subr.bf16.mxu0 0
      %1609 = vmatpush1.bf16.msra.mxu0 0
      %1610 = vmatprep.mubr.bf16.mxu0 0
      %1611 = vmatmul.mubr.bf16.gmra.mrb[0].mxu0 %v1573
      %v1612 = vpop.f32.mrb[0].mxu0
      %v1613 = vadd.f32 0.0, %v1612
      %v1614 = vpop.f32.mrb[0].mxu0
      %v1615 = vpop.f32.mrb[0].mxu0
      %v1616 = vpop.f32.mrb[0].mxu0
      %1617 = vdwg.mxu0
      %v1618 = vadd.f32 %v1558, %v1613
      %v1619 = vld [vmem:[%s322] sm:$0x3]
      %s1620 = scalar_lea.vmem %s3, 88
      %v1621 = vld [vmem:[%s1620] sm:$0xf]
      %v1624 = vunpack.c.l.s4 1983009808
      %v1625 = vunpack.c.0.s8 %v1624
      %v1626 = vlaneseq
      %v1627 = vshrl.u32 %v1626, 7
      %v1628 = vsub.s32 %v1625, %v1627
      %v1629 = vrot.slane %v1619, %v1628
      %1630 = vrot.lane.b32.xlu0 %v1629, 117
      %v1631 = vpop.permute.xlu0 %1630
      %v1633 = vsel %vm347, %v1621, 0
      %v1636 = vsel %vm351, %v1631, 0
      %1638 = vmatprep.subr.bf16.mxu0 0
      %1639 = vmatpush1.bf16.msra.mxu0 %v1636
      %1640 = vmatprep.subr.bf16.mxu0 0
      %1641 = vmatpush1.bf16.msra.mxu0 0
      %1642 = vmatprep.subr.bf16.mxu0 0
      %1643 = vmatpush1.bf16.msra.mxu0 0
      %1644 = vmatprep.subr.bf16.mxu0 0
      %1645 = vmatpush1.bf16.msra.mxu0 0
      %1646 = vmatprep.subr.bf16.mxu0 0
      %1647 = vmatpush1.bf16.msra.mxu0 0
      %1648 = vmatprep.subr.bf16.mxu0 0
      %1649 = vmatpush1.bf16.msra.mxu0 0
      %1650 = vmatprep.subr.bf16.mxu0 0
      %1651 = vmatpush1.bf16.msra.mxu0 0
      %1652 = vmatprep.subr.bf16.mxu0 0
      %1653 = vmatpush1.bf16.msra.mxu0 0
      %1654 = vmatprep.subr.bf16.mxu0 0
      %1655 = vmatpush1.bf16.msra.mxu0 0
      %1656 = vmatprep.subr.bf16.mxu0 0
      %1657 = vmatpush1.bf16.msra.mxu0 0
      %1658 = vmatprep.subr.bf16.mxu0 0
      %1659 = vmatpush1.bf16.msra.mxu0 0
      %1660 = vmatprep.subr.bf16.mxu0 0
      %1661 = vmatpush1.bf16.msra.mxu0 0
      %1662 = vmatprep.subr.bf16.mxu0 0
      %1663 = vmatpush1.bf16.msra.mxu0 0
      %1664 = vmatprep.subr.bf16.mxu0 0
      %1665 = vmatpush1.bf16.msra.mxu0 0
      %1666 = vmatprep.subr.bf16.mxu0 0
      %1667 = vmatpush1.bf16.msra.mxu0 0
      %1668 = vmatprep.subr.bf16.mxu0 0
      %1669 = vmatpush1.bf16.msra.mxu0 0
      %1670 = vmatprep.mubr.bf16.mxu0 0
      %1671 = vmatmul.mubr.bf16.gmra.mrb[0].mxu0 %v1633
      %v1672 = vpop.f32.mrb[0].mxu0
      %v1673 = vadd.f32 0.0, %v1672
      %v1674 = vpop.f32.mrb[0].mxu0
      %v1675 = vpop.f32.mrb[0].mxu0
      %v1676 = vpop.f32.mrb[0].mxu0
      %1677 = vdwg.mxu0
      %v1678 = vadd.f32 %v1618, %v1673
      %v1679 = vld [vmem:[%s322] sm:$0x3]
      %s1680 = scalar_lea.vmem %s3, 92
      %v1681 = vld [vmem:[%s1680] sm:$0xf]
      %v1684 = vunpack.c.l.s4 1983009808
      %v1685 = vunpack.c.0.s8 %v1684
      %v1686 = vlaneseq
      %v1687 = vshrl.u32 %v1686, 7
      %v1688 = vsub.s32 %v1685, %v1687
      %v1689 = vrot.slane %v1679, %v1688
      %1690 = vrot.lane.b32.xlu0 %v1689, 116
      %v1691 = vpop.permute.xlu0 %1690
      %v1693 = vsel %vm347, %v1681, 0
      %v1696 = vsel %vm351, %v1691, 0
      %1698 = vmatprep.subr.bf16.mxu0 0
      %1699 = vmatpush1.bf16.msra.mxu0 %v1696
      %1700 = vmatprep.subr.bf16.mxu0 0
      %1701 = vmatpush1.bf16.msra.mxu0 0
      %1702 = vmatprep.subr.bf16.mxu0 0
      %1703 = vmatpush1.bf16.msra.mxu0 0
      %1704 = vmatprep.subr.bf16.mxu0 0
      %1705 = vmatpush1.bf16.msra.mxu0 0
      %1706 = vmatprep.subr.bf16.mxu0 0
      %1707 = vmatpush1.bf16.msra.mxu0 0
      %1708 = vmatprep.subr.bf16.mxu0 0
      %1709 = vmatpush1.bf16.msra.mxu0 0
      %1710 = vmatprep.subr.bf16.mxu0 0
      %1711 = vmatpush1.bf16.msra.mxu0 0
      %1712 = vmatprep.subr.bf16.mxu0 0
      %1713 = vmatpush1.bf16.msra.mxu0 0
      %1714 = vmatprep.subr.bf16.mxu0 0
      %1715 = vmatpush1.bf16.msra.mxu0 0
      %1716 = vmatprep.subr.bf16.mxu0 0
      %1717 = vmatpush1.bf16.msra.mxu0 0
      %1718 = vmatprep.subr.bf16.mxu0 0
      %1719 = vmatpush1.bf16.msra.mxu0 0
      %1720 = vmatprep.subr.bf16.mxu0 0
      %1721 = vmatpush1.bf16.msra.mxu0 0
      %1722 = vmatprep.subr.bf16.mxu0 0
      %1723 = vmatpush1.bf16.msra.mxu0 0
      %1724 = vmatprep.subr.bf16.mxu0 0
      %1725 = vmatpush1.bf16.msra.mxu0 0
      %1726 = vmatprep.subr.bf16.mxu0 0
      %1727 = vmatpush1.bf16.msra.mxu0 0
      %1728 = vmatprep.subr.bf16.mxu0 0
      %1729 = vmatpush1.bf16.msra.mxu0 0
      %1730 = vmatprep.mubr.bf16.mxu0 0
      %1731 = vmatmul.mubr.bf16.gmra.mrb[0].mxu0 %v1693
      %v1732 = vpop.f32.mrb[0].mxu0
      %v1733 = vadd.f32 0.0, %v1732
      %v1734 = vpop.f32.mrb[0].mxu0
      %v1735 = vpop.f32.mrb[0].mxu0
      %v1736 = vpop.f32.mrb[0].mxu0
      %1737 = vdwg.mxu0
      %v1738 = vadd.f32 %v1678, %v1733
      %v1739 = vld [vmem:[%s322] sm:$0x3]
      %s1740 = scalar_lea.vmem %s3, 96
      %v1741 = vld [vmem:[%s1740] sm:$0xf]
      %v1744 = vunpack.c.l.s4 1983009808
      %v1745 = vunpack.c.0.s8 %v1744
      %v1746 = vlaneseq
      %v1747 = vshrl.u32 %v1746, 7
      %v1748 = vsub.s32 %v1745, %v1747
      %v1749 = vrot.slane %v1739, %v1748
      %1750 = vrot.lane.b32.xlu0 %v1749, 108
      %v1751 = vpop.permute.xlu0 %1750
      %v1753 = vsel %vm347, %v1741, 0
      %v1756 = vsel %vm351, %v1751, 0
      %1758 = vmatprep.subr.bf16.mxu0 0
      %1759 = vmatpush1.bf16.msra.mxu0 %v1756
      %1760 = vmatprep.subr.bf16.mxu0 0
      %1761 = vmatpush1.bf16.msra.mxu0 0
      %1762 = vmatprep.subr.bf16.mxu0 0
      %1763 = vmatpush1.bf16.msra.mxu0 0
      %1764 = vmatprep.subr.bf16.mxu0 0
      %1765 = vmatpush1.bf16.msra.mxu0 0
      %1766 = vmatprep.subr.bf16.mxu0 0
      %1767 = vmatpush1.bf16.msra.mxu0 0
      %1768 = vmatprep.subr.bf16.mxu0 0
      %1769 = vmatpush1.bf16.msra.mxu0 0
      %1770 = vmatprep.subr.bf16.mxu0 0
      %1771 = vmatpush1.bf16.msra.mxu0 0
      %1772 = vmatprep.subr.bf16.mxu0 0
      %1773 = vmatpush1.bf16.msra.mxu0 0
      %1774 = vmatprep.subr.bf16.mxu0 0
      %1775 = vmatpush1.bf16.msra.mxu0 0
      %1776 = vmatprep.subr.bf16.mxu0 0
      %1777 = vmatpush1.bf16.msra.mxu0 0
      %1778 = vmatprep.subr.bf16.mxu0 0
      %1779 = vmatpush1.bf16.msra.mxu0 0
      %1780 = vmatprep.subr.bf16.mxu0 0
      %1781 = vmatpush1.bf16.msra.mxu0 0
      %1782 = vmatprep.subr.bf16.mxu0 0
      %1783 = vmatpush1.bf16.msra.mxu0 0
      %1784 = vmatprep.subr.bf16.mxu0 0
      %1785 = vmatpush1.bf16.msra.mxu0 0
      %1786 = vmatprep.subr.bf16.mxu0 0
      %1787 = vmatpush1.bf16.msra.mxu0 0
      %1788 = vmatprep.subr.bf16.mxu0 0
      %1789 = vmatpush1.bf16.msra.mxu0 0
      %1790 = vmatprep.mubr.bf16.mxu0 0
      %1791 = vmatmul.mubr.bf16.gmra.mrb[0].mxu0 %v1753
      %v1792 = vpop.f32.mrb[0].mxu0
      %v1793 = vadd.f32 0.0, %v1792
      %v1794 = vpop.f32.mrb[0].mxu0
      %v1795 = vpop.f32.mrb[0].mxu0
      %v1796 = vpop.f32.mrb[0].mxu0
      %1797 = vdwg.mxu0
      %v1798 = vadd.f32 %v1738, %v1793
      %v1799 = vld [vmem:[%s322] sm:$0x3]
      %s1800 = scalar_lea.vmem %s3, 100
      %v1801 = vld [vmem:[%s1800] sm:$0xf]
      %v1804 = vunpack.c.l.s4 1983009808
      %v1805 = vunpack.c.0.s8 %v1804
      %v1806 = vlaneseq
      %v1807 = vshrl.u32 %v1806, 7
      %v1808 = vsub.s32 %v1805, %v1807
      %v1809 = vrot.slane %v1799, %v1808
      %1810 = vrot.lane.b32.xlu0 %v1809, 107
      %v1811 = vpop.permute.xlu0 %1810
      %v1813 = vsel %vm347, %v1801, 0
      %v1816 = vsel %vm351, %v1811, 0
      %1818 = vmatprep.subr.bf16.mxu0 0
      %1819 = vmatpush1.bf16.msra.mxu0 %v1816
      %1820 = vmatprep.subr.bf16.mxu0 0
      %1821 = vmatpush1.bf16.msra.mxu0 0
      %1822 = vmatprep.subr.bf16.mxu0 0
      %1823 = vmatpush1.bf16.msra.mxu0 0
      %1824 = vmatprep.subr.bf16.mxu0 0
      %1825 = vmatpush1.bf16.msra.mxu0 0
      %1826 = vmatprep.subr.bf16.mxu0 0
      %1827 = vmatpush1.bf16.msra.mxu0 0
      %1828 = vmatprep.subr.bf16.mxu0 0
      %1829 = vmatpush1.bf16.msra.mxu0 0
      %1830 = vmatprep.subr.bf16.mxu0 0
      %1831 = vmatpush1.bf16.msra.mxu0 0
      %1832 = vmatprep.subr.bf16.mxu0 0
      %1833 = vmatpush1.bf16.msra.mxu0 0
      %1834 = vmatprep.subr.bf16.mxu0 0
      %1835 = vmatpush1.bf16.msra.mxu0 0
      %1836 = vmatprep.subr.bf16.mxu0 0
      %1837 = vmatpush1.bf16.msra.mxu0 0
      %1838 = vmatprep.subr.bf16.mxu0 0
      %1839 = vmatpush1.bf16.msra.mxu0 0
      %1840 = vmatprep.subr.bf16.mxu0 0
      %1841 = vmatpush1.bf16.msra.mxu0 0
      %1842 = vmatprep.subr.bf16.mxu0 0
      %1843 = vmatpush1.bf16.msra.mxu0 0
      %1844 = vmatprep.subr.bf16.mxu0 0
      %1845 = vmatpush1.bf16.msra.mxu0 0
      %1846 = vmatprep.subr.bf16.mxu0 0
      %1847 = vmatpush1.bf16.msra.mxu0 0
      %1848 = vmatprep.subr.bf16.mxu0 0
      %1849 = vmatpush1.bf16.msra.mxu0 0
      %1850 = vmatprep.mubr.bf16.mxu0 0
      %1851 = vmatmul.mubr.bf16.gmra.mrb[0].mxu0 %v1813
      %v1852 = vpop.f32.mrb[0].mxu0
      %v1853 = vadd.f32 0.0, %v1852
      %v1854 = vpop.f32.mrb[0].mxu0
      %v1855 = vpop.f32.mrb[0].mxu0
      %v1856 = vpop.f32.mrb[0].mxu0
      %1857 = vdwg.mxu0
      %v1858 = vadd.f32 %v1798, %v1853
      %v1859 = vld [vmem:[%s322] sm:$0x3]
      %s1860 = scalar_lea.vmem %s3, 104
      %v1861 = vld [vmem:[%s1860] sm:$0xf]
      %v1864 = vunpack.c.l.s4 1983009808
      %v1865 = vunpack.c.0.s8 %v1864
      %v1866 = vlaneseq
      %v1867 = vshrl.u32 %v1866, 7
      %v1868 = vsub.s32 %v1865, %v1867
      %v1869 = vrot.slane %v1859, %v1868
      %1870 = vrot.lane.b32.xlu0 %v1869, 106
      %v1871 = vpop.permute.xlu0 %1870
      %v1873 = vsel %vm347, %v1861, 0
      %v1876 = vsel %vm351, %v1871, 0
      %1878 = vmatprep.subr.bf16.mxu0 0
      %1879 = vmatpush1.bf16.msra.mxu0 %v1876
      %1880 = vmatprep.subr.bf16.mxu0 0
      %1881 = vmatpush1.bf16.msra.mxu0 0
      %1882 = vmatprep.subr.bf16.mxu0 0
      %1883 = vmatpush1.bf16.msra.mxu0 0
      %1884 = vmatprep.subr.bf16.mxu0 0
      %1885 = vmatpush1.bf16.msra.mxu0 0
      %1886 = vmatprep.subr.bf16.mxu0 0
      %1887 = vmatpush1.bf16.msra.mxu0 0
      %1888 = vmatprep.subr.bf16.mxu0 0
      %1889 = vmatpush1.bf16.msra.mxu0 0
      %1890 = vmatprep.subr.bf16.mxu0 0
      %1891 = vmatpush1.bf16.msra.mxu0 0
      %1892 = vmatprep.subr.bf16.mxu0 0
      %1893 = vmatpush1.bf16.msra.mxu0 0
      %1894 = vmatprep.subr.bf16.mxu0 0
      %1895 = vmatpush1.bf16.msra.mxu0 0
      %1896 = vmatprep.subr.bf16.mxu0 0
      %1897 = vmatpush1.bf16.msra.mxu0 0
      %1898 = vmatprep.subr.bf16.mxu0 0
      %1899 = vmatpush1.bf16.msra.mxu0 0
      %1900 = vmatprep.subr.bf16.mxu0 0
      %1901 = vmatpush1.bf16.msra.mxu0 0
      %1902 = vmatprep.subr.bf16.mxu0 0
      %1903 = vmatpush1.bf16.msra.mxu0 0
      %1904 = vmatprep.subr.bf16.mxu0 0
      %1905 = vmatpush1.bf16.msra.mxu0 0
      %1906 = vmatprep.subr.bf16.mxu0 0
      %1907 = vmatpush1.bf16.msra.mxu0 0
      %1908 = vmatprep.subr.bf16.mxu0 0
      %1909 = vmatpush1.bf16.msra.mxu0 0
      %1910 = vmatprep.mubr.bf16.mxu0 0
      %1911 = vmatmul.mubr.bf16.gmra.mrb[0].mxu0 %v1873
      %v1912 = vpop.f32.mrb[0].mxu0
      %v1913 = vadd.f32 0.0, %v1912
      %v1914 = vpop.f32.mrb[0].mxu0
      %v1915 = vpop.f32.mrb[0].mxu0
      %v1916 = vpop.f32.mrb[0].mxu0
      %1917 = vdwg.mxu0
      %v1918 = vadd.f32 %v1858, %v1913
      %v1919 = vld [vmem:[%s4] sm:$0xff]
      %1921 = vset.pattern.permute.xlu0 0
      %1922 = vperm.xlu0 %1921, %v1919
      %v1923 = vpop.permute.xlu0 %1922
      %v1925 = vadd.f32 %v1918, %v1923
      %v1926 = vmax.f32 %v1925, 0.0
      %v1927 = vpack.c.bf16 %v1926, %v1926
      %vm1928 = vcmask 650240
      %1929 = vst.msk [vmem:[%s331] sm:$0xf] %vm1928, %v1927
      %p1930 = scmp.lt.s32.totalorder %s20, 1
      %s1931 = scalar_select %p1930, %s20, 1
      %p1932 = scmp.lt.s32.totalorder %s21, 7
      %s1933 = scalar_select %p1932, %s21, 7
      %s1934 = smul.addr %s1931, 8
      %s1935 = sadd.s32 %s1933, %s1934
      %s1936 = smul.addr %s1935, 4
      %s1937 = scalar_lea.vmem %s5, %s1936
      // Predicated region
      $region41: #{down_forward.2} parent=39 // pred_check
        %p1938 = pneg %p178
      $region42: #{down_forward.2} parent=39 // pred_check_branch
        %1940 = sbr.rel (%p1938) target = $region44
      $region43: #{down_forward.2} parent=39 // pred_region
        _
      $region44: #{down_forward.2} parent=39 // pred_fallthru
        _
    $region40: #{down_forward.2} parent=5 // pred_fallthru
      _
    %p1941 = scmp.le.s32.totalorder 2, %s11
    // Predicated region
    $region45: #{down_forward.2} parent=5 // pred_check
      %p1942 = pneg %p1941
    $region46: #{down_forward.2} parent=5 // pred_check_branch
      %1944 = sbr.rel (%p1942) target = $region48
    $region47: #{down_forward.2} parent=5 // pred_region
      %s1945 = ssub.s32 %s11, 2
      // Predicated region
      $region49: #{down_forward.2} parent=47 // pred_check
        %p1946 = pneg %p184
      $region50: #{down_forward.2} parent=47 // pred_check_branch
        %1948 = sbr.rel (%p1946) target = $region52
      $region51: #{down_forward.2} parent=47 // pred_region
        %p1949 = scmp.lt.s32.totalorder %s22, 1
        %s1950 = scalar_select %p1949, %s22, 1
        %p1951 = scmp.lt.s32.totalorder %s23, 7
        %s1952 = scalar_select %p1951, %s23, 7
        %s1953 = smul.addr %s1950, 8
        %s1954 = sadd.s32 %s1952, %s1953
        %s1955 = smul.addr %s1954, 4
        %s1956 = scalar_lea.vmem %s5, %s1955
      $region52: #{down_forward.2} parent=47 // pred_fallthru
        _
    $region48: #{down_forward.2} parent=5 // pred_fallthru
      _
  $region6: #{down_forward.2} parent=0 // loop_footer
    %s15 = sadd.s32 1, %s11
  $region7: #{down_forward.2} parent=0 // loop_footer_branch
    %10 = sbr.rel target = $region3
  $region8: #{down_forward.2} parent=0 // loop_exit
    _

// kernel: down_forward.3
$region0: #{down_forward.3}
  #allocation0 [shape = 'u32[]', space=smem, size = 0x4, offset = 0x4, fixed_abs, tag = 'smem constant byte address 0x4 - core index']
  #allocation1 [shape = 'u32[144,128]{1,0:T(1,128)}', space=vmem, size = 0x12000, scoped, tag = 'internal scratch']
  %s0 = inlined_call_operand.vmem [shape: bf16[2,10,8,102], index: 0, kind: input, shape index: {}, may-alias: {0,1,2}]
  %s1 = inlined_call_operand.vmem [shape: bf16[2,10,8,102], index: 1, kind: input, shape index: {}, may-alias: {0,1,2}]
  %s2 = inlined_call_operand.vmem [shape: bf16[2,10,8,102], index: 2, kind: input, shape index: {}, may-alias: {0,1,2}]
  %s3 = inlined_call_operand.vmem [shape: bf16[27,8,8], index: 3, kind: input, shape index: {}]
  %s4 = inlined_call_operand.vmem [shape: f32[8,1], index: 4, kind: input, shape index: {}]
  %s5 = inlined_call_operand.vmem [shape: f32[2,8,8,80], index: 5, kind: output, shape index: {}]
  %s6 = sld [smem:[#allocation0]]
  $region53: #{down_forward.3} parent=0
    _
  %s8 = ssub.s32 1, %s6
  %s9 = scalar_select 0, %s8, %s6
  loop: start=0, step=1, limit=18
  $region2: #{down_forward.3} parent=0 // loop_pre_header
    _
  $region3: #{down_forward.3} parent=0 // loop_header
    %s11 = sphi 0, %s15
    %p12 = scmp.ge.s32.totalorder %s11, 18
    %s18 = sphi 0, %s30
    %s19 = sphi 0, %s26
    %s20 = sphi 0, %s18
    %s21 = sphi 0, %s19
    %s22 = sphi 0, %s20
    %s23 = sphi 0, %s21
    %s35 = sphi 0, %s37
    %s38 = sphi 0, %s35
    %s39 = sphi 0, %s38
    %s55 = sphi 0, %s39
    %s65 = sphi 0, %s67
    %s68 = sphi 0, %s65
    %s69 = sphi 0, %s68
    %s85 = sphi 0, %s69
    %s95 = sphi 0, %s97
    %s98 = sphi 0, %s95
    %s99 = sphi 0, %s98
    %s115 = sphi 0, %s99
    %s119 = sphi 0, %s119
    %s121 = sphi 0, %s119
    %s122 = sphi 0, %s121
    %s136 = sphi 0, %s122
    %s140 = sphi 0, %s140
    %s142 = sphi 0, %s140
    %s143 = sphi 0, %s142
    %s157 = sphi 0, %s143
    %s165 = sphi 0, %s167
    %s168 = sphi 0, %s165
    %s169 = sphi 0, %s168
    %s185 = sphi 0, %s169
  $region4: #{down_forward.3} parent=0 // loop_header_branch
    %14 = sbr.rel (%p12) target = $region8
  $region5: #{down_forward.3} parent=0 // loop_body
    %s16 = ssub.s32 %s11, 1
    %s17 = ssub.s32 %s11, 2
    %s24 = sadd.s32 1, %s19
    %p25 = scmp.ge.s32.totalorder %s24, 8
    %s26 = scalar_select %p25, 0, %s24
    %s27 = sadd.s32 1, %s18
    %s28 = scalar_select %p25, %s27, %s18
    %p29 = scmp.ge.s32.totalorder %s28, 2
    %s30 = scalar_select %p29, 0, %s28
    %s31 = ssub.s32 %s18, %s30
    %s32 = ssub.s32 %s19, %s26
    %s33 = sor.u32 %s31, %s32
    %p34 = scmp.eq.s32.totalorder %s33, 0
    %s36 = sadd.s32 %s35, 1
    %s37 = scalar_select %p34, %s35, %s36
    %p40 = pneg %p34
    %p41 = scmp.eq.s32.totalorder %s11, 15
    %p42 = por %p40, %p41
    %p43 = scmp.ne.s32.totalorder %s35, %s38
    %p44 = scmp.eq.s32.totalorder %s11, 0
    %p45 = por %p43, %p44
    %p46 = scmp.ne.s32.totalorder %s35, %s38
    %p47 = scmp.eq.s32.totalorder %s16, 15
    %p48 = por %p46, %p47
    %p49 = scmp.ne.s32.totalorder %s38, %s39
    %p50 = scmp.eq.s32.totalorder %s16, 0
    %p51 = por %p49, %p50
    %p52 = scmp.ne.s32.totalorder %s38, %s39
    %p53 = scmp.eq.s32.totalorder %s17, 15
    %p54 = por %p52, %p53
    %p56 = scmp.ne.s32.totalorder %s39, %s55
    %p57 = scmp.eq.s32.totalorder %s17, 0
    %p58 = por %p56, %p57
    %s59 = sadd.s32 %s19, 1
    %s60 = sadd.s32 %s26, 1
    %s61 = ssub.s32 %s18, %s30
    %s62 = ssub.s32 %s59, %s60
    %s63 = sor.u32 %s61, %s62
    %p64 = scmp.eq.s32.totalorder %s63, 0
    %s66 = sadd.s32 %s65, 1
    %s67 = scalar_select %p64, %s65, %s66
    %p70 = pneg %p64
    %p71 = scmp.eq.s32.totalorder %s11, 15
    %p72 = por %p70, %p71
    %p73 = scmp.ne.s32.totalorder %s65, %s68
    %p74 = scmp.eq.s32.totalorder %s11, 0
    %p75 = por %p73, %p74
    %p76 = scmp.ne.s32.totalorder %s65, %s68
    %p77 = scmp.eq.s32.totalorder %s16, 15
    %p78 = por %p76, %p77
    %p79 = scmp.ne.s32.totalorder %s68, %s69
    %p80 = scmp.eq.s32.totalorder %s16, 0
    %p81 = por %p79, %p80
    %p82 = scmp.ne.s32.totalorder %s68, %s69
    %p83 = scmp.eq.s32.totalorder %s17, 15
    %p84 = por %p82, %p83
    %p86 = scmp.ne.s32.totalorder %s69, %s85
    %p87 = scmp.eq.s32.totalorder %s17, 0
    %p88 = por %p86, %p87
    %s89 = sadd.s32 %s19, 2
    %s90 = sadd.s32 %s26, 2
    %s91 = ssub.s32 %s18, %s30
    %s92 = ssub.s32 %s89, %s90
    %s93 = sor.u32 %s91, %s92
    %p94 = scmp.eq.s32.totalorder %s93, 0
    %s96 = sadd.s32 %s95, 1
    %s97 = scalar_select %p94, %s95, %s96
    %p100 = pneg %p94
    %p101 = scmp.eq.s32.totalorder %s11, 15
    %p102 = por %p100, %p101
    %p103 = scmp.ne.s32.totalorder %s95, %s98
    %p104 = scmp.eq.s32.totalorder %s11, 0
    %p105 = por %p103, %p104
    %p106 = scmp.ne.s32.totalorder %s95, %s98
    %p107 = scmp.eq.s32.totalorder %s16, 15
    %p108 = por %p106, %p107
    %p109 = scmp.ne.s32.totalorder %s98, %s99
    %p110 = scmp.eq.s32.totalorder %s16, 0
    %p111 = por %p109, %p110
    %p112 = scmp.ne.s32.totalorder %s98, %s99
    %p113 = scmp.eq.s32.totalorder %s17, 15
    %p114 = por %p112, %p113
    %p116 = scmp.ne.s32.totalorder %s99, %s115
    %p117 = scmp.eq.s32.totalorder %s17, 0
    %p118 = por %p116, %p117
    %s120 = sadd.s32 %s119, 1
    %p123 = scmp.eq.s32.totalorder %s11, 15
    %p124 = scmp.ne.s32.totalorder %s119, %s121
    %p125 = scmp.eq.s32.totalorder %s11, 0
    %p126 = por %p124, %p125
    %p127 = scmp.ne.s32.totalorder %s119, %s121
    %p128 = scmp.eq.s32.totalorder %s16, 15
    %p129 = por %p127, %p128
    %p130 = scmp.ne.s32.totalorder %s121, %s122
    %p131 = scmp.eq.s32.totalorder %s16, 0
    %p132 = por %p130, %p131
    %p133 = scmp.ne.s32.totalorder %s121, %s122
    %p134 = scmp.eq.s32.totalorder %s17, 15
    %p135 = por %p133, %p134
    %p137 = scmp.ne.s32.totalorder %s122, %s136
    %p138 = scmp.eq.s32.totalorder %s17, 0
    %p139 = por %p137, %p138
    %s141 = sadd.s32 %s140, 1
    %p144 = scmp.eq.s32.totalorder %s11, 15
    %p145 = scmp.ne.s32.totalorder %s140, %s142
    %p146 = scmp.eq.s32.totalorder %s11, 0
    %p147 = por %p145, %p146
    %p148 = scmp.ne.s32.totalorder %s140, %s142
    %p149 = scmp.eq.s32.totalorder %s16, 15
    %p150 = por %p148, %p149
    %p151 = scmp.ne.s32.totalorder %s142, %s143
    %p152 = scmp.eq.s32.totalorder %s16, 0
    %p153 = por %p151, %p152
    %p154 = scmp.ne.s32.totalorder %s142, %s143
    %p155 = scmp.eq.s32.totalorder %s17, 15
    %p156 = por %p154, %p155
    %p158 = scmp.ne.s32.totalorder %s143, %s157
    %p159 = scmp.eq.s32.totalorder %s17, 0
    %p160 = por %p158, %p159
    %s161 = ssub.s32 %s18, %s30
    %s162 = ssub.s32 %s19, %s26
    %s163 = sor.u32 %s161, %s162
    %p164 = scmp.eq.s32.totalorder %s163, 0
    %s166 = sadd.s32 %s165, 1
    %s167 = scalar_select %p164, %s165, %s166
    %p170 = pneg %p164
    %p171 = scmp.eq.s32.totalorder %s11, 15
    %p172 = por %p170, %p171
    %p173 = scmp.ne.s32.totalorder %s165, %s168
    %p174 = scmp.eq.s32.totalorder %s11, 0
    %p175 = por %p173, %p174
    %p176 = scmp.ne.s32.totalorder %s165, %s168
    %p177 = scmp.eq.s32.totalorder %s16, 15
    %p178 = por %p176, %p177
    %p179 = scmp.ne.s32.totalorder %s168, %s169
    %p180 = scmp.eq.s32.totalorder %s16, 0
    %p181 = por %p179, %p180
    %p182 = scmp.ne.s32.totalorder %s168, %s169
    %p183 = scmp.eq.s32.totalorder %s17, 15
    %p184 = por %p182, %p183
    %p186 = scmp.ne.s32.totalorder %s169, %s185
    %p187 = scmp.eq.s32.totalorder %s17, 0
    %p188 = por %p186, %p187
    %p189 = scmp.le.s32.totalorder 1, %s11
    %p190 = scmp.lt.s32.totalorder %s11, 17
    %p191 = pnand %p189, %p190
    %p192 = pneg %p191
    // Predicated region
    $region9: #{down_forward.3} parent=5 // pred_check
      _
    $region10: #{down_forward.3} parent=5 // pred_check_branch
      %194 = sbr.rel (%p191) target = $region12
    $region11: #{down_forward.3} parent=5 // pred_region
      %s195 = ssub.s32 %s11, 1
      // Predicated region
      $region13: #{down_forward.3} parent=11 // pred_check
        %p196 = pneg %p132
      $region14: #{down_forward.3} parent=11 // pred_check_branch
        %198 = sbr.rel (%p196) target = $region16
      $region15: #{down_forward.3} parent=11 // pred_region
        _
      $region16: #{down_forward.3} parent=11 // pred_fallthru
        _
      // Predicated region
      $region17: #{down_forward.3} parent=11 // pred_check
        %p199 = pneg %p153
      $region18: #{down_forward.3} parent=11 // pred_check_branch
        %201 = sbr.rel (%p199) target = $region20
      $region19: #{down_forward.3} parent=11 // pred_region
        _
      $region20: #{down_forward.3} parent=11 // pred_fallthru
        _
    $region12: #{down_forward.3} parent=5 // pred_fallthru
      _
    %p202 = scmp.lt.s32.totalorder %s11, 16
    // Predicated region
    $region21: #{down_forward.3} parent=5 // pred_check
      %p203 = pneg %p202
    $region22: #{down_forward.3} parent=5 // pred_check_branch
      %205 = sbr.rel (%p203) target = $region24
    $region23: #{down_forward.3} parent=5 // pred_region
      // Predicated region
      $region25: #{down_forward.3} parent=23 // pred_check
        %p206 = pneg %p45
      $region26: #{down_forward.3} parent=23 // pred_check_branch
        %208 = sbr.rel (%p206) target = $region28
      $region27: #{down_forward.3} parent=23 // pred_region
        %p209 = scmp.lt.s32.totalorder %s18, 1
        %s210 = scalar_select %p209, %s18, 1
        %p211 = scmp.lt.s32.totalorder %s19, 9
        %s212 = scalar_select %p211, %s19, 9
        %s213 = smul.addr %s210, 10
        %s214 = sadd.s32 %s212, %s213
        %s215 = smul.addr %s214, 4
        %s216 = scalar_lea.vmem %s0, %s215
      $region28: #{down_forward.3} parent=23 // pred_fallthru
        _
      // Predicated region
      $region29: #{down_forward.3} parent=23 // pred_check
        %p217 = pneg %p75
      $region30: #{down_forward.3} parent=23 // pred_check_branch
        %219 = sbr.rel (%p217) target = $region32
      $region31: #{down_forward.3} parent=23 // pred_region
        %s220 = sadd.s32 %s19, 1
        %p221 = scmp.lt.s32.totalorder %s18, 1
        %s222 = scalar_select %p221, %s18, 1
        %p223 = scmp.lt.s32.totalorder %s220, 9
        %s224 = scalar_select %p223, %s220, 9
        %s225 = smul.addr %s222, 10
        %s226 = sadd.s32 %s224, %s225
        %s227 = smul.addr %s226, 4
        %s228 = scalar_lea.vmem %s1, %s227
        %s229 = sadd.s32 %s19, 1
      $region32: #{down_forward.3} parent=23 // pred_fallthru
        _
      // Predicated region
      $region33: #{down_forward.3} parent=23 // pred_check
        %p230 = pneg %p105
      $region34: #{down_forward.3} parent=23 // pred_check_branch
        %232 = sbr.rel (%p230) target = $region36
      $region35: #{down_forward.3} parent=23 // pred_region
        %s233 = sadd.s32 %s19, 2
        %p234 = scmp.lt.s32.totalorder %s18, 1
        %s235 = scalar_select %p234, %s18, 1
        %p236 = scmp.lt.s32.totalorder %s233, 9
        %s237 = scalar_select %p236, %s233, 9
        %s238 = smul.addr %s235, 10
        %s239 = sadd.s32 %s237, %s238
        %s240 = smul.addr %s239, 4
        %s241 = scalar_lea.vmem %s2, %s240
        %s242 = sadd.s32 %s19, 2
      $region36: #{down_forward.3} parent=23 // pred_fallthru
        _
    $region24: #{down_forward.3} parent=5 // pred_fallthru
      _
    %p243 = scmp.le.s32.totalorder 1, %s11
    %p244 = scmp.lt.s32.totalorder %s11, 17
    %p245 = pnand %p243, %p244
    %p246 = pneg %p245
    // Predicated region
    $region37: #{down_forward.3} parent=5 // pred_check
      _
    $region38: #{down_forward.3} parent=5 // pred_check_branch
      %248 = sbr.rel (%p245) target = $region40
    $region39: #{down_forward.3} parent=5 // pred_region
      %s249 = ssub.s32 %s11, 1
      %p250 = scmp.lt.s32.totalorder %s20, 1
      %s251 = scalar_select %p250, %s20, 1
      %p252 = scmp.lt.s32.totalorder %s21, 9
      %s253 = scalar_select %p252, %s21, 9
      %s254 = smul.addr %s251, 10
      %s255 = sadd.s32 %s253, %s254
      %s256 = smul.addr %s255, 4
      %s257 = scalar_lea.vmem %s0, %s256
      %p258 = pneg %p51
      %p259 = pneg %p48
      %s260 = sadd.s32 %s21, 1
      %p261 = scmp.lt.s32.totalorder %s20, 1
      %s262 = scalar_select %p261, %s20, 1
      %p263 = scmp.lt.s32.totalorder %s260, 9
      %s264 = scalar_select %p263, %s260, 9
      %s265 = smul.addr %s262, 10
      %s266 = sadd.s32 %s264, %s265
      %s267 = smul.addr %s266, 4
      %s268 = scalar_lea.vmem %s1, %s267
      %p269 = pneg %p81
      %p270 = pneg %p78
      %s271 = sadd.s32 %s21, 2
      %p272 = scmp.lt.s32.totalorder %s20, 1
      %s273 = scalar_select %p272, %s20, 1
      %p274 = scmp.lt.s32.totalorder %s271, 9
      %s275 = scalar_select %p274, %s271, 9
      %s276 = smul.addr %s273, 10
      %s277 = sadd.s32 %s275, %s276
      %s278 = smul.addr %s277, 4
      %s279 = scalar_lea.vmem %s2, %s278
      %p280 = pneg %p111
      %p281 = pneg %p108
      %p282 = pneg %p132
      %p283 = pneg %p129
      %p284 = pneg %p153
      %p285 = pneg %p150
      %p286 = pneg %p181
      %p287 = pneg %p178
      %p288 = scmp.lt.s32.totalorder %s20, 1
      %s289 = scalar_select %p288, %s20, 1
      %p290 = scmp.lt.s32.totalorder %s21, 7
      %s291 = scalar_select %p290, %s21, 7
      %s292 = smul.addr %s289, 8
      %s293 = sadd.s32 %s291, %s292
      %s294 = smul.addr %s293, 8
      %s295 = scalar_lea.vmem %s5, %s294
      %p296 = scmp.lt.s32.totalorder %s20, 1
      %s297 = scalar_select %p296, %s20, 1
      %p298 = scmp.lt.s32.totalorder %s21, 9
      %s299 = scalar_select %p298, %s21, 9
      %s300 = smul.addr %s297, 10
      %s301 = sadd.s32 %s299, %s300
      %s302 = smul.addr %s301, 4
      %s303 = scalar_lea.vmem %s0, %s302
      %s304 = sadd.s32 %s21, 1
      %p305 = scmp.lt.s32.totalorder %s20, 1
      %s306 = scalar_select %p305, %s20, 1
      %p307 = scmp.lt.s32.totalorder %s304, 9
      %s308 = scalar_select %p307, %s304, 9
      %s309 = smul.addr %s306, 10
      %s310 = sadd.s32 %s308, %s309
      %s311 = smul.addr %s310, 4
      %s312 = scalar_lea.vmem %s1, %s311
      %s313 = sadd.s32 %s21, 1
      %s314 = sadd.s32 %s21, 2
      %p315 = scmp.lt.s32.totalorder %s20, 1
      %s316 = scalar_select %p315, %s20, 1
      %p317 = scmp.lt.s32.totalorder %s314, 9
      %s318 = scalar_select %p317, %s314, 9
      %s319 = smul.addr %s316, 10
      %s320 = sadd.s32 %s318, %s319
      %s321 = smul.addr %s320, 4
      %s322 = scalar_lea.vmem %s2, %s321
      %s323 = sadd.s32 %s21, 2
      %p324 = scmp.lt.s32.totalorder %s20, 1
      %s325 = scalar_select %p324, %s20, 1
      %p326 = scmp.lt.s32.totalorder %s21, 7
      %s327 = scalar_select %p326, %s21, 7
      %s328 = smul.addr %s325, 8
      %s329 = sadd.s32 %s327, %s328
      %s330 = smul.addr %s329, 8
      %s331 = scalar_lea.vmem %s5, %s330
      %v333 = vld [vmem:[%s303] sm:$0xf]
      %v334 = vld [vmem:[%s3] sm:$0xf]
      %s335 = scalar_lea.vmem %s3, 4
      %v336 = vld [vmem:[%s335] sm:$0xf]
      %v338 = vunpack.c.l.b16 %v333
      %v339 = vpack.c.b16 %v338, %v338
      %340 = vrot.lane.b32.xlu0 %v339, 127
      %v341 = vpop.permute.xlu0 %340
      %vm342 = vcmask 64512
      %v344 = vsel %vm342, %v336, 0
      %vm346 = vcmask 1043456
      %v348 = vsel %vm346, %v341, 0
      %350 = vmatprep.subr.bf16.mxu0 0
      %351 = vmatpush1.bf16.msra.mxu0 %v348
      %352 = vmatprep.subr.bf16.mxu0 0
      %353 = vmatpush1.bf16.msra.mxu0 0
      %354 = vmatprep.subr.bf16.mxu0 0
      %355 = vmatpush1.bf16.msra.mxu0 0
      %356 = vmatprep.subr.bf16.mxu0 0
      %357 = vmatpush1.bf16.msra.mxu0 0
      %358 = vmatprep.subr.bf16.mxu0 0
      %359 = vmatpush1.bf16.msra.mxu0 0
      %360 = vmatprep.subr.bf16.mxu0 0
      %361 = vmatpush1.bf16.msra.mxu0 0
      %362 = vmatprep.subr.bf16.mxu0 0
      %363 = vmatpush1.bf16.msra.mxu0 0
      %364 = vmatprep.subr.bf16.mxu0 0
      %365 = vmatpush1.bf16.msra.mxu0 0
      %366 = vmatprep.subr.bf16.mxu0 0
      %367 = vmatpush1.bf16.msra.mxu0 0
      %368 = vmatprep.subr.bf16.mxu0 0
      %369 = vmatpush1.bf16.msra.mxu0 0
      %370 = vmatprep.subr.bf16.mxu0 0
      %371 = vmatpush1.bf16.msra.mxu0 0
      %372 = vmatprep.subr.bf16.mxu0 0
      %373 = vmatpush1.bf16.msra.mxu0 0
      %374 = vmatprep.subr.bf16.mxu0 0
      %375 = vmatpush1.bf16.msra.mxu0 0
      %376 = vmatprep.subr.bf16.mxu0 0
      %377 = vmatpush1.bf16.msra.mxu0 0
      %378 = vmatprep.subr.bf16.mxu0 0
      %379 = vmatpush1.bf16.msra.mxu0 0
      %380 = vmatprep.subr.bf16.mxu0 0
      %381 = vmatpush1.bf16.msra.mxu0 0
      %382 = vmatprep.mubr.bf16.mxu0 0
      %383 = vmatmul.mubr.bf16.gmra.mrb[0].mxu0 %v344
      %v384 = vpop.f32.mrb[0].mxu0
      %v385 = vadd.f32 0.0, %v384
      %v386 = vpop.f32.mrb[0].mxu0
      %v387 = vpop.f32.mrb[0].mxu0
      %v388 = vpop.f32.mrb[0].mxu0
      %389 = vdwg.mxu0
      %v391 = vsel %vm342, %v334, 0
      %v394 = vsel %vm346, %v333, 0
      %396 = vmatprep.subr.bf16.mxu0 0
      %397 = vmatpush1.bf16.msra.mxu0 %v394
      %398 = vmatprep.subr.bf16.mxu0 0
      %399 = vmatpush1.bf16.msra.mxu0 0
      %400 = vmatprep.subr.bf16.mxu0 0
      %401 = vmatpush1.bf16.msra.mxu0 0
      %402 = vmatprep.subr.bf16.mxu0 0
      %403 = vmatpush1.bf16.msra.mxu0 0
      %404 = vmatprep.subr.bf16.mxu0 0
      %405 = vmatpush1.bf16.msra.mxu0 0
      %406 = vmatprep.subr.bf16.mxu0 0
      %407 = vmatpush1.bf16.msra.mxu0 0
      %408 = vmatprep.subr.bf16.mxu0 0
      %409 = vmatpush1.bf16.msra.mxu0 0
      %410 = vmatprep.subr.bf16.mxu0 0
      %411 = vmatpush1.bf16.msra.mxu0 0
      %412 = vmatprep.subr.bf16.mxu0 0
      %413 = vmatpush1.bf16.msra.mxu0 0
      %414 = vmatprep.subr.bf16.mxu0 0
      %415 = vmatpush1.bf16.msra.mxu0 0
      %416 = vmatprep.subr.bf16.mxu0 0
      %417 = vmatpush1.bf16.msra.mxu0 0
      %418 = vmatprep.subr.bf16.mxu0 0
      %419 = vmatpush1.bf16.msra.mxu0 0
      %420 = vmatprep.subr.bf16.mxu0 0
      %421 = vmatpush1.bf16.msra.mxu0 0
      %422 = vmatprep.subr.bf16.mxu0 0
      %423 = vmatpush1.bf16.msra.mxu0 0
      %424 = vmatprep.subr.bf16.mxu0 0
      %425 = vmatpush1.bf16.msra.mxu0 0
      %426 = vmatprep.subr.bf16.mxu0 0
      %427 = vmatpush1.bf16.msra.mxu0 0
      %428 = vmatprep.mubr.bf16.mxu0 0
      %429 = vmatmul.mubr.bf16.gmra.mrb[0].mxu0 %v391
      %v430 = vpop.f32.mrb[0].mxu0
      %v431 = vadd.f32 %v385, %v430
      %v432 = vpop.f32.mrb[0].mxu0
      %v433 = vpop.f32.mrb[0].mxu0
      %v434 = vpop.f32.mrb[0].mxu0
      %435 = vdwg.mxu0
      %s436 = scalar_lea.vmem %s3, 8
      %v437 = vld [vmem:[%s436] sm:$0xf]
      %438 = vrot.lane.b32.xlu0 %v339, 126
      %v439 = vpop.permute.xlu0 %438
      %v441 = vsel %vm342, %v437, 0
      %v444 = vsel %vm346, %v439, 0
      %446 = vmatprep.subr.bf16.mxu0 0
      %447 = vmatpush1.bf16.msra.mxu0 %v444
      %448 = vmatprep.subr.bf16.mxu0 0
      %449 = vmatpush1.bf16.msra.mxu0 0
      %450 = vmatprep.subr.bf16.mxu0 0
      %451 = vmatpush1.bf16.msra.mxu0 0
      %452 = vmatprep.subr.bf16.mxu0 0
      %453 = vmatpush1.bf16.msra.mxu0 0
      %454 = vmatprep.subr.bf16.mxu0 0
      %455 = vmatpush1.bf16.msra.mxu0 0
      %456 = vmatprep.subr.bf16.mxu0 0
      %457 = vmatpush1.bf16.msra.mxu0 0
      %458 = vmatprep.subr.bf16.mxu0 0
      %459 = vmatpush1.bf16.msra.mxu0 0
      %460 = vmatprep.subr.bf16.mxu0 0
      %461 = vmatpush1.bf16.msra.mxu0 0
      %462 = vmatprep.subr.bf16.mxu0 0
      %463 = vmatpush1.bf16.msra.mxu0 0
      %464 = vmatprep.subr.bf16.mxu0 0
      %465 = vmatpush1.bf16.msra.mxu0 0
      %466 = vmatprep.subr.bf16.mxu0 0
      %467 = vmatpush1.bf16.msra.mxu0 0
      %468 = vmatprep.subr.bf16.mxu0 0
      %469 = vmatpush1.bf16.msra.mxu0 0
      %470 = vmatprep.subr.bf16.mxu0 0
      %471 = vmatpush1.bf16.msra.mxu0 0
      %472 = vmatprep.subr.bf16.mxu0 0
      %473 = vmatpush1.bf16.msra.mxu0 0
      %474 = vmatprep.subr.bf16.mxu0 0
      %475 = vmatpush1.bf16.msra.mxu0 0
      %476 = vmatprep.subr.bf16.mxu0 0
      %477 = vmatpush1.bf16.msra.mxu0 0
      %478 = vmatprep.mubr.bf16.mxu0 0
      %479 = vmatmul.mubr.bf16.gmra.mrb[0].mxu0 %v441
      %v480 = vpop.f32.mrb[0].mxu0
      %v481 = vadd.f32 0.0, %v480
      %v482 = vpop.f32.mrb[0].mxu0
      %v483 = vpop.f32.mrb[0].mxu0
      %v484 = vpop.f32.mrb[0].mxu0
      %485 = vdwg.mxu0
      %v486 = vadd.f32 %v431, %v481
      %s487 = scalar_lea.vmem %s3, 12
      %v488 = vld [vmem:[%s487] sm:$0xf]
      %489 = vrot.lane.b32.xlu0 %v339, 118
      %v490 = vpop.permute.xlu0 %489
      %v492 = vsel %vm342, %v488, 0
      %v495 = vsel %vm346, %v490, 0
      %497 = vmatprep.subr.bf16.mxu0 0
      %498 = vmatpush1.bf16.msra.mxu0 %v495
      %499 = vmatprep.subr.bf16.mxu0 0
      %500 = vmatpush1.bf16.msra.mxu0 0
      %501 = vmatprep.subr.bf16.mxu0 0
      %502 = vmatpush1.bf16.msra.mxu0 0
      %503 = vmatprep.subr.bf16.mxu0 0
      %504 = vmatpush1.bf16.msra.mxu0 0
      %505 = vmatprep.subr.bf16.mxu0 0
      %506 = vmatpush1.bf16.msra.mxu0 0
      %507 = vmatprep.subr.bf16.mxu0 0
      %508 = vmatpush1.bf16.msra.mxu0 0
      %509 = vmatprep.subr.bf16.mxu0 0
      %510 = vmatpush1.bf16.msra.mxu0 0
      %511 = vmatprep.subr.bf16.mxu0 0
      %512 = vmatpush1.bf16.msra.mxu0 0
      %513 = vmatprep.subr.bf16.mxu0 0
      %514 = vmatpush1.bf16.msra.mxu0 0
      %515 = vmatprep.subr.bf16.mxu0 0
      %516 = vmatpush1.bf16.msra.mxu0 0
      %517 = vmatprep.subr.bf16.mxu0 0
      %518 = vmatpush1.bf16.msra.mxu0 0
      %519 = vmatprep.subr.bf16.mxu0 0
      %520 = vmatpush1.bf16.msra.mxu0 0
      %521 = vmatprep.subr.bf16.mxu0 0
      %522 = vmatpush1.bf16.msra.mxu0 0
      %523 = vmatprep.subr.bf16.mxu0 0
      %524 = vmatpush1.bf16.msra.mxu0 0
      %525 = vmatprep.subr.bf16.mxu0 0
      %526 = vmatpush1.bf16.msra.mxu0 0
      %527 = vmatprep.subr.bf16.mxu0 0
      %528 = vmatpush1.bf16.msra.mxu0 0
      %529 = vmatprep.mubr.bf16.mxu0 0
      %530 = vmatmul.mubr.bf16.gmra.mrb[0].mxu0 %v492
      %v531 = vpop.f32.mrb[0].mxu0
      %v532 = vadd.f32 0.0, %v531
      %v533 = vpop.f32.mrb[0].mxu0
      %v534 = vpop.f32.mrb[0].mxu0
      %v535 = vpop.f32.mrb[0].mxu0
      %536 = vdwg.mxu0
      %v537 = vadd.f32 %v486, %v532
      %s538 = scalar_lea.vmem %s3, 16
      %v539 = vld [vmem:[%s538] sm:$0xf]
      %540 = vrot.lane.b32.xlu0 %v339, 117
      %v541 = vpop.permute.xlu0 %540
      %v543 = vsel %vm342, %v539, 0
      %v546 = vsel %vm346, %v541, 0
      %548 = vmatprep.subr.bf16.mxu0 0
      %549 = vmatpush1.bf16.msra.mxu0 %v546
      %550 = vmatprep.subr.bf16.mxu0 0
      %551 = vmatpush1.bf16.msra.mxu0 0
      %552 = vmatprep.subr.bf16.mxu0 0
      %553 = vmatpush1.bf16.msra.mxu0 0
      %554 = vmatprep.subr.bf16.mxu0 0
      %555 = vmatpush1.bf16.msra.mxu0 0
      %556 = vmatprep.subr.bf16.mxu0 0
      %557 = vmatpush1.bf16.msra.mxu0 0
      %558 = vmatprep.subr.bf16.mxu0 0
      %559 = vmatpush1.bf16.msra.mxu0 0
      %560 = vmatprep.subr.bf16.mxu0 0
      %561 = vmatpush1.bf16.msra.mxu0 0
      %562 = vmatprep.subr.bf16.mxu0 0
      %563 = vmatpush1.bf16.msra.mxu0 0
      %564 = vmatprep.subr.bf16.mxu0 0
      %565 = vmatpush1.bf16.msra.mxu0 0
      %566 = vmatprep.subr.bf16.mxu0 0
      %567 = vmatpush1.bf16.msra.mxu0 0
      %568 = vmatprep.subr.bf16.mxu0 0
      %569 = vmatpush1.bf16.msra.mxu0 0
      %570 = vmatprep.subr.bf16.mxu0 0
      %571 = vmatpush1.bf16.msra.mxu0 0
      %572 = vmatprep.subr.bf16.mxu0 0
      %573 = vmatpush1.bf16.msra.mxu0 0
      %574 = vmatprep.subr.bf16.mxu0 0
      %575 = vmatpush1.bf16.msra.mxu0 0
      %576 = vmatprep.subr.bf16.mxu0 0
      %577 = vmatpush1.bf16.msra.mxu0 0
      %578 = vmatprep.subr.bf16.mxu0 0
      %579 = vmatpush1.bf16.msra.mxu0 0
      %580 = vmatprep.mubr.bf16.mxu0 0
      %581 = vmatmul.mubr.bf16.gmra.mrb[0].mxu0 %v543
      %v582 = vpop.f32.mrb[0].mxu0
      %v583 = vadd.f32 0.0, %v582
      %v584 = vpop.f32.mrb[0].mxu0
      %v585 = vpop.f32.mrb[0].mxu0
      %v586 = vpop.f32.mrb[0].mxu0
      %587 = vdwg.mxu0
      %v588 = vadd.f32 %v537, %v583
      %s589 = scalar_lea.vmem %s3, 20
      %v590 = vld [vmem:[%s589] sm:$0xf]
      %591 = vrot.lane.b32.xlu0 %v339, 116
      %v592 = vpop.permute.xlu0 %591
      %v594 = vsel %vm342, %v590, 0
      %v597 = vsel %vm346, %v592, 0
      %599 = vmatprep.subr.bf16.mxu0 0
      %600 = vmatpush1.bf16.msra.mxu0 %v597
      %601 = vmatprep.subr.bf16.mxu0 0
      %602 = vmatpush1.bf16.msra.mxu0 0
      %603 = vmatprep.subr.bf16.mxu0 0
      %604 = vmatpush1.bf16.msra.mxu0 0
      %605 = vmatprep.subr.bf16.mxu0 0
      %606 = vmatpush1.bf16.msra.mxu0 0
      %607 = vmatprep.subr.bf16.mxu0 0
      %608 = vmatpush1.bf16.msra.mxu0 0
      %609 = vmatprep.subr.bf16.mxu0 0
      %610 = vmatpush1.bf16.msra.mxu0 0
      %611 = vmatprep.subr.bf16.mxu0 0
      %612 = vmatpush1.bf16.msra.mxu0 0
      %613 = vmatprep.subr.bf16.mxu0 0
      %614 = vmatpush1.bf16.msra.mxu0 0
      %615 = vmatprep.subr.bf16.mxu0 0
      %616 = vmatpush1.bf16.msra.mxu0 0
      %617 = vmatprep.subr.bf16.mxu0 0
      %618 = vmatpush1.bf16.msra.mxu0 0
      %619 = vmatprep.subr.bf16.mxu0 0
      %620 = vmatpush1.bf16.msra.mxu0 0
      %621 = vmatprep.subr.bf16.mxu0 0
      %622 = vmatpush1.bf16.msra.mxu0 0
      %623 = vmatprep.subr.bf16.mxu0 0
      %624 = vmatpush1.bf16.msra.mxu0 0
      %625 = vmatprep.subr.bf16.mxu0 0
      %626 = vmatpush1.bf16.msra.mxu0 0
      %627 = vmatprep.subr.bf16.mxu0 0
      %628 = vmatpush1.bf16.msra.mxu0 0
      %629 = vmatprep.subr.bf16.mxu0 0
      %630 = vmatpush1.bf16.msra.mxu0 0
      %631 = vmatprep.mubr.bf16.mxu0 0
      %632 = vmatmul.mubr.bf16.gmra.mrb[0].mxu0 %v594
      %v633 = vpop.f32.mrb[0].mxu0
      %v634 = vadd.f32 0.0, %v633
      %v635 = vpop.f32.mrb[0].mxu0
      %v636 = vpop.f32.mrb[0].mxu0
      %v637 = vpop.f32.mrb[0].mxu0
      %638 = vdwg.mxu0
      %v639 = vadd.f32 %v588, %v634
      %s640 = scalar_lea.vmem %s3, 24
      %v641 = vld [vmem:[%s640] sm:$0xf]
      %642 = vrot.lane.b32.xlu0 %v339, 108
      %v643 = vpop.permute.xlu0 %642
      %v645 = vsel %vm342, %v641, 0
      %v648 = vsel %vm346, %v643, 0
      %650 = vmatprep.subr.bf16.mxu0 0
      %651 = vmatpush1.bf16.msra.mxu0 %v648
      %652 = vmatprep.subr.bf16.mxu0 0
      %653 = vmatpush1.bf16.msra.mxu0 0
      %654 = vmatprep.subr.bf16.mxu0 0
      %655 = vmatpush1.bf16.msra.mxu0 0
      %656 = vmatprep.subr.bf16.mxu0 0
      %657 = vmatpush1.bf16.msra.mxu0 0
      %658 = vmatprep.subr.bf16.mxu0 0
      %659 = vmatpush1.bf16.msra.mxu0 0
      %660 = vmatprep.subr.bf16.mxu0 0
      %661 = vmatpush1.bf16.msra.mxu0 0
      %662 = vmatprep.subr.bf16.mxu0 0
      %663 = vmatpush1.bf16.msra.mxu0 0
      %664 = vmatprep.subr.bf16.mxu0 0
      %665 = vmatpush1.bf16.msra.mxu0 0
      %666 = vmatprep.subr.bf16.mxu0 0
      %667 = vmatpush1.bf16.msra.mxu0 0
      %668 = vmatprep.subr.bf16.mxu0 0
      %669 = vmatpush1.bf16.msra.mxu0 0
      %670 = vmatprep.subr.bf16.mxu0 0
      %671 = vmatpush1.bf16.msra.mxu0 0
      %672 = vmatprep.subr.bf16.mxu0 0
      %673 = vmatpush1.bf16.msra.mxu0 0
      %674 = vmatprep.subr.bf16.mxu0 0
      %675 = vmatpush1.bf16.msra.mxu0 0
      %676 = vmatprep.subr.bf16.mxu0 0
      %677 = vmatpush1.bf16.msra.mxu0 0
      %678 = vmatprep.subr.bf16.mxu0 0
      %679 = vmatpush1.bf16.msra.mxu0 0
      %680 = vmatprep.subr.bf16.mxu0 0
      %681 = vmatpush1.bf16.msra.mxu0 0
      %682 = vmatprep.mubr.bf16.mxu0 0
      %683 = vmatmul.mubr.bf16.gmra.mrb[0].mxu0 %v645
      %v684 = vpop.f32.mrb[0].mxu0
      %v685 = vadd.f32 0.0, %v684
      %v686 = vpop.f32.mrb[0].mxu0
      %v687 = vpop.f32.mrb[0].mxu0
      %v688 = vpop.f32.mrb[0].mxu0
      %689 = vdwg.mxu0
      %v690 = vadd.f32 %v639, %v685
      %s691 = scalar_lea.vmem %s3, 28
      %v692 = vld [vmem:[%s691] sm:$0xf]
      %693 = vrot.lane.b32.xlu0 %v339, 107
      %v694 = vpop.permute.xlu0 %693
      %v696 = vsel %vm342, %v692, 0
      %v699 = vsel %vm346, %v694, 0
      %701 = vmatprep.subr.bf16.mxu0 0
      %702 = vmatpush1.bf16.msra.mxu0 %v699
      %703 = vmatprep.subr.bf16.mxu0 0
      %704 = vmatpush1.bf16.msra.mxu0 0
      %705 = vmatprep.subr.bf16.mxu0 0
      %706 = vmatpush1.bf16.msra.mxu0 0
      %707 = vmatprep.subr.bf16.mxu0 0
      %708 = vmatpush1.bf16.msra.mxu0 0
      %709 = vmatprep.subr.bf16.mxu0 0
      %710 = vmatpush1.bf16.msra.mxu0 0
      %711 = vmatprep.subr.bf16.mxu0 0
      %712 = vmatpush1.bf16.msra.mxu0 0
      %713 = vmatprep.subr.bf16.mxu0 0
      %714 = vmatpush1.bf16.msra.mxu0 0
      %715 = vmatprep.subr.bf16.mxu0 0
      %716 = vmatpush1.bf16.msra.mxu0 0
      %717 = vmatprep.subr.bf16.mxu0 0
      %718 = vmatpush1.bf16.msra.mxu0 0
      %719 = vmatprep.subr.bf16.mxu0 0
      %720 = vmatpush1.bf16.msra.mxu0 0
      %721 = vmatprep.subr.bf16.mxu0 0
      %722 = vmatpush1.bf16.msra.mxu0 0
      %723 = vmatprep.subr.bf16.mxu0 0
      %724 = vmatpush1.bf16.msra.mxu0 0
      %725 = vmatprep.subr.bf16.mxu0 0
      %726 = vmatpush1.bf16.msra.mxu0 0
      %727 = vmatprep.subr.bf16.mxu0 0
      %728 = vmatpush1.bf16.msra.mxu0 0
      %729 = vmatprep.subr.bf16.mxu0 0
      %730 = vmatpush1.bf16.msra.mxu0 0
      %731 = vmatprep.subr.bf16.mxu0 0
      %732 = vmatpush1.bf16.msra.mxu0 0
      %733 = vmatprep.mubr.bf16.mxu0 0
      %734 = vmatmul.mubr.bf16.gmra.mrb[0].mxu0 %v696
      %v735 = vpop.f32.mrb[0].mxu0
      %v736 = vadd.f32 0.0, %v735
      %v737 = vpop.f32.mrb[0].mxu0
      %v738 = vpop.f32.mrb[0].mxu0
      %v739 = vpop.f32.mrb[0].mxu0
      %740 = vdwg.mxu0
      %v741 = vadd.f32 %v690, %v736
      %s742 = scalar_lea.vmem %s3, 32
      %v743 = vld [vmem:[%s742] sm:$0xf]
      %744 = vrot.lane.b32.xlu0 %v339, 106
      %v745 = vpop.permute.xlu0 %744
      %v747 = vsel %vm342, %v743, 0
      %v750 = vsel %vm346, %v745, 0
      %752 = vmatprep.subr.bf16.mxu0 0
      %753 = vmatpush1.bf16.msra.mxu0 %v750
      %754 = vmatprep.subr.bf16.mxu0 0
      %755 = vmatpush1.bf16.msra.mxu0 0
      %756 = vmatprep.subr.bf16.mxu0 0
      %757 = vmatpush1.bf16.msra.mxu0 0
      %758 = vmatprep.subr.bf16.mxu0 0
      %759 = vmatpush1.bf16.msra.mxu0 0
      %760 = vmatprep.subr.bf16.mxu0 0
      %761 = vmatpush1.bf16.msra.mxu0 0
      %762 = vmatprep.subr.bf16.mxu0 0
      %763 = vmatpush1.bf16.msra.mxu0 0
      %764 = vmatprep.subr.bf16.mxu0 0
      %765 = vmatpush1.bf16.msra.mxu0 0
      %766 = vmatprep.subr.bf16.mxu0 0
      %767 = vmatpush1.bf16.msra.mxu0 0
      %768 = vmatprep.subr.bf16.mxu0 0
      %769 = vmatpush1.bf16.msra.mxu0 0
      %770 = vmatprep.subr.bf16.mxu0 0
      %771 = vmatpush1.bf16.msra.mxu0 0
      %772 = vmatprep.subr.bf16.mxu0 0
      %773 = vmatpush1.bf16.msra.mxu0 0
      %774 = vmatprep.subr.bf16.mxu0 0
      %775 = vmatpush1.bf16.msra.mxu0 0
      %776 = vmatprep.subr.bf16.mxu0 0
      %777 = vmatpush1.bf16.msra.mxu0 0
      %778 = vmatprep.subr.bf16.mxu0 0
      %779 = vmatpush1.bf16.msra.mxu0 0
      %780 = vmatprep.subr.bf16.mxu0 0
      %781 = vmatpush1.bf16.msra.mxu0 0
      %782 = vmatprep.subr.bf16.mxu0 0
      %783 = vmatpush1.bf16.msra.mxu0 0
      %784 = vmatprep.mubr.bf16.mxu0 0
      %785 = vmatmul.mubr.bf16.gmra.mrb[0].mxu0 %v747
      %v786 = vpop.f32.mrb[0].mxu0
      %v787 = vadd.f32 0.0, %v786
      %v788 = vpop.f32.mrb[0].mxu0
      %v789 = vpop.f32.mrb[0].mxu0
      %v790 = vpop.f32.mrb[0].mxu0
      %791 = vdwg.mxu0
      %v792 = vadd.f32 %v741, %v787
      %v793 = vld [vmem:[%s312] sm:$0xf]
      %s794 = scalar_lea.vmem %s3, 36
      %v795 = vld [vmem:[%s794] sm:$0xf]
      %v797 = vsel %vm342, %v795, 0
      %v800 = vsel %vm346, %v793, 0
      %802 = vmatprep.subr.bf16.mxu0 0
      %803 = vmatpush1.bf16.msra.mxu0 %v800
      %804 = vmatprep.subr.bf16.mxu0 0
      %805 = vmatpush1.bf16.msra.mxu0 0
      %806 = vmatprep.subr.bf16.mxu0 0
      %807 = vmatpush1.bf16.msra.mxu0 0
      %808 = vmatprep.subr.bf16.mxu0 0
      %809 = vmatpush1.bf16.msra.mxu0 0
      %810 = vmatprep.subr.bf16.mxu0 0
      %811 = vmatpush1.bf16.msra.mxu0 0
      %812 = vmatprep.subr.bf16.mxu0 0
      %813 = vmatpush1.bf16.msra.mxu0 0
      %814 = vmatprep.subr.bf16.mxu0 0
      %815 = vmatpush1.bf16.msra.mxu0 0
      %816 = vmatprep.subr.bf16.mxu0 0
      %817 = vmatpush1.bf16.msra.mxu0 0
      %818 = vmatprep.subr.bf16.mxu0 0
      %819 = vmatpush1.bf16.msra.mxu0 0
      %820 = vmatprep.subr.bf16.mxu0 0
      %821 = vmatpush1.bf16.msra.mxu0 0
      %822 = vmatprep.subr.bf16.mxu0 0
      %823 = vmatpush1.bf16.msra.mxu0 0
      %824 = vmatprep.subr.bf16.mxu0 0
      %825 = vmatpush1.bf16.msra.mxu0 0
      %826 = vmatprep.subr.bf16.mxu0 0
      %827 = vmatpush1.bf16.msra.mxu0 0
      %828 = vmatprep.subr.bf16.mxu0 0
      %829 = vmatpush1.bf16.msra.mxu0 0
      %830 = vmatprep.subr.bf16.mxu0 0
      %831 = vmatpush1.bf16.msra.mxu0 0
      %832 = vmatprep.subr.bf16.mxu0 0
      %833 = vmatpush1.bf16.msra.mxu0 0
      %834 = vmatprep.mubr.bf16.mxu0 0
      %835 = vmatmul.mubr.bf16.gmra.mrb[0].mxu0 %v797
      %v836 = vpop.f32.mrb[0].mxu0
      %v837 = vadd.f32 0.0, %v836
      %v838 = vpop.f32.mrb[0].mxu0
      %v839 = vpop.f32.mrb[0].mxu0
      %v840 = vpop.f32.mrb[0].mxu0
      %841 = vdwg.mxu0
      %v842 = vadd.f32 %v792, %v837
      %s843 = scalar_lea.vmem %s3, 40
      %v844 = vld [vmem:[%s843] sm:$0xf]
      %v846 = vunpack.c.l.b16 %v793
      %v847 = vpack.c.b16 %v846, %v846
      %848 = vrot.lane.b32.xlu0 %v847, 127
      %v849 = vpop.permute.xlu0 %848
      %v851 = vsel %vm342, %v844, 0
      %v854 = vsel %vm346, %v849, 0
      %856 = vmatprep.subr.bf16.mxu0 0
      %857 = vmatpush1.bf16.msra.mxu0 %v854
      %858 = vmatprep.subr.bf16.mxu0 0
      %859 = vmatpush1.bf16.msra.mxu0 0
      %860 = vmatprep.subr.bf16.mxu0 0
      %861 = vmatpush1.bf16.msra.mxu0 0
      %862 = vmatprep.subr.bf16.mxu0 0
      %863 = vmatpush1.bf16.msra.mxu0 0
      %864 = vmatprep.subr.bf16.mxu0 0
      %865 = vmatpush1.bf16.msra.mxu0 0
      %866 = vmatprep.subr.bf16.mxu0 0
      %867 = vmatpush1.bf16.msra.mxu0 0
      %868 = vmatprep.subr.bf16.mxu0 0
      %869 = vmatpush1.bf16.msra.mxu0 0
      %870 = vmatprep.subr.bf16.mxu0 0
      %871 = vmatpush1.bf16.msra.mxu0 0
      %872 = vmatprep.subr.bf16.mxu0 0
      %873 = vmatpush1.bf16.msra.mxu0 0
      %874 = vmatprep.subr.bf16.mxu0 0
      %875 = vmatpush1.bf16.msra.mxu0 0
      %876 = vmatprep.subr.bf16.mxu0 0
      %877 = vmatpush1.bf16.msra.mxu0 0
      %878 = vmatprep.subr.bf16.mxu0 0
      %879 = vmatpush1.bf16.msra.mxu0 0
      %880 = vmatprep.subr.bf16.mxu0 0
      %881 = vmatpush1.bf16.msra.mxu0 0
      %882 = vmatprep.subr.bf16.mxu0 0
      %883 = vmatpush1.bf16.msra.mxu0 0
      %884 = vmatprep.subr.bf16.mxu0 0
      %885 = vmatpush1.bf16.msra.mxu0 0
      %886 = vmatprep.subr.bf16.mxu0 0
      %887 = vmatpush1.bf16.msra.mxu0 0
      %888 = vmatprep.mubr.bf16.mxu0 0
      %889 = vmatmul.mubr.bf16.gmra.mrb[0].mxu0 %v851
      %v890 = vpop.f32.mrb[0].mxu0
      %v891 = vadd.f32 0.0, %v890
      %v892 = vpop.f32.mrb[0].mxu0
      %v893 = vpop.f32.mrb[0].mxu0
      %v894 = vpop.f32.mrb[0].mxu0
      %895 = vdwg.mxu0
      %v896 = vadd.f32 %v842, %v891
      %s897 = scalar_lea.vmem %s3, 44
      %v898 = vld [vmem:[%s897] sm:$0xf]
      %899 = vrot.lane.b32.xlu0 %v847, 126
      %v900 = vpop.permute.xlu0 %899
      %v902 = vsel %vm342, %v898, 0
      %v905 = vsel %vm346, %v900, 0
      %907 = vmatprep.subr.bf16.mxu0 0
      %908 = vmatpush1.bf16.msra.mxu0 %v905
      %909 = vmatprep.subr.bf16.mxu0 0
      %910 = vmatpush1.bf16.msra.mxu0 0
      %911 = vmatprep.subr.bf16.mxu0 0
      %912 = vmatpush1.bf16.msra.mxu0 0
      %913 = vmatprep.subr.bf16.mxu0 0
      %914 = vmatpush1.bf16.msra.mxu0 0
      %915 = vmatprep.subr.bf16.mxu0 0
      %916 = vmatpush1.bf16.msra.mxu0 0
      %917 = vmatprep.subr.bf16.mxu0 0
      %918 = vmatpush1.bf16.msra.mxu0 0
      %919 = vmatprep.subr.bf16.mxu0 0
      %920 = vmatpush1.bf16.msra.mxu0 0
      %921 = vmatprep.subr.bf16.mxu0 0
      %922 = vmatpush1.bf16.msra.mxu0 0
      %923 = vmatprep.subr.bf16.mxu0 0
      %924 = vmatpush1.bf16.msra.mxu0 0
      %925 = vmatprep.subr.bf16.mxu0 0
      %926 = vmatpush1.bf16.msra.mxu0 0
      %927 = vmatprep.subr.bf16.mxu0 0
      %928 = vmatpush1.bf16.msra.mxu0 0
      %929 = vmatprep.subr.bf16.mxu0 0
      %930 = vmatpush1.bf16.msra.mxu0 0
      %931 = vmatprep.subr.bf16.mxu0 0
      %932 = vmatpush1.bf16.msra.mxu0 0
      %933 = vmatprep.subr.bf16.mxu0 0
      %934 = vmatpush1.bf16.msra.mxu0 0
      %935 = vmatprep.subr.bf16.mxu0 0
      %936 = vmatpush1.bf16.msra.mxu0 0
      %937 = vmatprep.subr.bf16.mxu0 0
      %938 = vmatpush1.bf16.msra.mxu0 0
      %939 = vmatprep.mubr.bf16.mxu0 0
      %940 = vmatmul.mubr.bf16.gmra.mrb[0].mxu0 %v902
      %v941 = vpop.f32.mrb[0].mxu0
      %v942 = vadd.f32 0.0, %v941
      %v943 = vpop.f32.mrb[0].mxu0
      %v944 = vpop.f32.mrb[0].mxu0
      %v945 = vpop.f32.mrb[0].mxu0
      %946 = vdwg.mxu0
      %v947 = vadd.f32 %v896, %v942
      %s948 = scalar_lea.vmem %s3, 48
      %v949 = vld [vmem:[%s948] sm:$0xf]
      %950 = vrot.lane.b32.xlu0 %v847, 118
      %v951 = vpop.permute.xlu0 %950
      %v953 = vsel %vm342, %v949, 0
      %v956 = vsel %vm346, %v951, 0
      %958 = vmatprep.subr.bf16.mxu0 0
      %959 = vmatpush1.bf16.msra.mxu0 %v956
      %960 = vmatprep.subr.bf16.mxu0 0
      %961 = vmatpush1.bf16.msra.mxu0 0
      %962 = vmatprep.subr.bf16.mxu0 0
      %963 = vmatpush1.bf16.msra.mxu0 0
      %964 = vmatprep.subr.bf16.mxu0 0
      %965 = vmatpush1.bf16.msra.mxu0 0
      %966 = vmatprep.subr.bf16.mxu0 0
      %967 = vmatpush1.bf16.msra.mxu0 0
      %968 = vmatprep.subr.bf16.mxu0 0
      %969 = vmatpush1.bf16.msra.mxu0 0
      %970 = vmatprep.subr.bf16.mxu0 0
      %971 = vmatpush1.bf16.msra.mxu0 0
      %972 = vmatprep.subr.bf16.mxu0 0
      %973 = vmatpush1.bf16.msra.mxu0 0
      %974 = vmatprep.subr.bf16.mxu0 0
      %975 = vmatpush1.bf16.msra.mxu0 0
      %976 = vmatprep.subr.bf16.mxu0 0
      %977 = vmatpush1.bf16.msra.mxu0 0
      %978 = vmatprep.subr.bf16.mxu0 0
      %979 = vmatpush1.bf16.msra.mxu0 0
      %980 = vmatprep.subr.bf16.mxu0 0
      %981 = vmatpush1.bf16.msra.mxu0 0
      %982 = vmatprep.subr.bf16.mxu0 0
      %983 = vmatpush1.bf16.msra.mxu0 0
      %984 = vmatprep.subr.bf16.mxu0 0
      %985 = vmatpush1.bf16.msra.mxu0 0
      %986 = vmatprep.subr.bf16.mxu0 0
      %987 = vmatpush1.bf16.msra.mxu0 0
      %988 = vmatprep.subr.bf16.mxu0 0
      %989 = vmatpush1.bf16.msra.mxu0 0
      %990 = vmatprep.mubr.bf16.mxu0 0
      %991 = vmatmul.mubr.bf16.gmra.mrb[0].mxu0 %v953
      %v992 = vpop.f32.mrb[0].mxu0
      %v993 = vadd.f32 0.0, %v992
      %v994 = vpop.f32.mrb[0].mxu0
      %v995 = vpop.f32.mrb[0].mxu0
      %v996 = vpop.f32.mrb[0].mxu0
      %997 = vdwg.mxu0
      %v998 = vadd.f32 %v947, %v993
      %s999 = scalar_lea.vmem %s3, 52
      %v1000 = vld [vmem:[%s999] sm:$0xf]
      %1001 = vrot.lane.b32.xlu0 %v847, 117
      %v1002 = vpop.permute.xlu0 %1001
      %v1004 = vsel %vm342, %v1000, 0
      %v1007 = vsel %vm346, %v1002, 0
      %1009 = vmatprep.subr.bf16.mxu0 0
      %1010 = vmatpush1.bf16.msra.mxu0 %v1007
      %1011 = vmatprep.subr.bf16.mxu0 0
      %1012 = vmatpush1.bf16.msra.mxu0 0
      %1013 = vmatprep.subr.bf16.mxu0 0
      %1014 = vmatpush1.bf16.msra.mxu0 0
      %1015 = vmatprep.subr.bf16.mxu0 0
      %1016 = vmatpush1.bf16.msra.mxu0 0
      %1017 = vmatprep.subr.bf16.mxu0 0
      %1018 = vmatpush1.bf16.msra.mxu0 0
      %1019 = vmatprep.subr.bf16.mxu0 0
      %1020 = vmatpush1.bf16.msra.mxu0 0
      %1021 = vmatprep.subr.bf16.mxu0 0
      %1022 = vmatpush1.bf16.msra.mxu0 0
      %1023 = vmatprep.subr.bf16.mxu0 0
      %1024 = vmatpush1.bf16.msra.mxu0 0
      %1025 = vmatprep.subr.bf16.mxu0 0
      %1026 = vmatpush1.bf16.msra.mxu0 0
      %1027 = vmatprep.subr.bf16.mxu0 0
      %1028 = vmatpush1.bf16.msra.mxu0 0
      %1029 = vmatprep.subr.bf16.mxu0 0
      %1030 = vmatpush1.bf16.msra.mxu0 0
      %1031 = vmatprep.subr.bf16.mxu0 0
      %1032 = vmatpush1.bf16.msra.mxu0 0
      %1033 = vmatprep.subr.bf16.mxu0 0
      %1034 = vmatpush1.bf16.msra.mxu0 0
      %1035 = vmatprep.subr.bf16.mxu0 0
      %1036 = vmatpush1.bf16.msra.mxu0 0
      %1037 = vmatprep.subr.bf16.mxu0 0
      %1038 = vmatpush1.bf16.msra.mxu0 0
      %1039 = vmatprep.subr.bf16.mxu0 0
      %1040 = vmatpush1.bf16.msra.mxu0 0
      %1041 = vmatprep.mubr.bf16.mxu0 0
      %1042 = vmatmul.mubr.bf16.gmra.mrb[0].mxu0 %v1004
      %v1043 = vpop.f32.mrb[0].mxu0
      %v1044 = vadd.f32 0.0, %v1043
      %v1045 = vpop.f32.mrb[0].mxu0
      %v1046 = vpop.f32.mrb[0].mxu0
      %v1047 = vpop.f32.mrb[0].mxu0
      %1048 = vdwg.mxu0
      %v1049 = vadd.f32 %v998, %v1044
      %s1050 = scalar_lea.vmem %s3, 56
      %v1051 = vld [vmem:[%s1050] sm:$0xf]
      %1052 = vrot.lane.b32.xlu0 %v847, 116
      %v1053 = vpop.permute.xlu0 %1052
      %v1055 = vsel %vm342, %v1051, 0
      %v1058 = vsel %vm346, %v1053, 0
      %1060 = vmatprep.subr.bf16.mxu0 0
      %1061 = vmatpush1.bf16.msra.mxu0 %v1058
      %1062 = vmatprep.subr.bf16.mxu0 0
      %1063 = vmatpush1.bf16.msra.mxu0 0
      %1064 = vmatprep.subr.bf16.mxu0 0
      %1065 = vmatpush1.bf16.msra.mxu0 0
      %1066 = vmatprep.subr.bf16.mxu0 0
      %1067 = vmatpush1.bf16.msra.mxu0 0
      %1068 = vmatprep.subr.bf16.mxu0 0
      %1069 = vmatpush1.bf16.msra.mxu0 0
      %1070 = vmatprep.subr.bf16.mxu0 0
      %1071 = vmatpush1.bf16.msra.mxu0 0
      %1072 = vmatprep.subr.bf16.mxu0 0
      %1073 = vmatpush1.bf16.msra.mxu0 0
      %1074 = vmatprep.subr.bf16.mxu0 0
      %1075 = vmatpush1.bf16.msra.mxu0 0
      %1076 = vmatprep.subr.bf16.mxu0 0
      %1077 = vmatpush1.bf16.msra.mxu0 0
      %1078 = vmatprep.subr.bf16.mxu0 0
      %1079 = vmatpush1.bf16.msra.mxu0 0
      %1080 = vmatprep.subr.bf16.mxu0 0
      %1081 = vmatpush1.bf16.msra.mxu0 0
      %1082 = vmatprep.subr.bf16.mxu0 0
      %1083 = vmatpush1.bf16.msra.mxu0 0
      %1084 = vmatprep.subr.bf16.mxu0 0
      %1085 = vmatpush1.bf16.msra.mxu0 0
      %1086 = vmatprep.subr.bf16.mxu0 0
      %1087 = vmatpush1.bf16.msra.mxu0 0
      %1088 = vmatprep.subr.bf16.mxu0 0
      %1089 = vmatpush1.bf16.msra.mxu0 0
      %1090 = vmatprep.subr.bf16.mxu0 0
      %1091 = vmatpush1.bf16.msra.mxu0 0
      %1092 = vmatprep.mubr.bf16.mxu0 0
      %1093 = vmatmul.mubr.bf16.gmra.mrb[0].mxu0 %v1055
      %v1094 = vpop.f32.mrb[0].mxu0
      %v1095 = vadd.f32 0.0, %v1094
      %v1096 = vpop.f32.mrb[0].mxu0
      %v1097 = vpop.f32.mrb[0].mxu0
      %v1098 = vpop.f32.mrb[0].mxu0
      %1099 = vdwg.mxu0
      %v1100 = vadd.f32 %v1049, %v1095
      %s1101 = scalar_lea.vmem %s3, 60
      %v1102 = vld [vmem:[%s1101] sm:$0xf]
      %1103 = vrot.lane.b32.xlu0 %v847, 108
      %v1104 = vpop.permute.xlu0 %1103
      %v1106 = vsel %vm342, %v1102, 0
      %v1109 = vsel %vm346, %v1104, 0
      %1111 = vmatprep.subr.bf16.mxu0 0
      %1112 = vmatpush1.bf16.msra.mxu0 %v1109
      %1113 = vmatprep.subr.bf16.mxu0 0
      %1114 = vmatpush1.bf16.msra.mxu0 0
      %1115 = vmatprep.subr.bf16.mxu0 0
      %1116 = vmatpush1.bf16.msra.mxu0 0
      %1117 = vmatprep.subr.bf16.mxu0 0
      %1118 = vmatpush1.bf16.msra.mxu0 0
      %1119 = vmatprep.subr.bf16.mxu0 0
      %1120 = vmatpush1.bf16.msra.mxu0 0
      %1121 = vmatprep.subr.bf16.mxu0 0
      %1122 = vmatpush1.bf16.msra.mxu0 0
      %1123 = vmatprep.subr.bf16.mxu0 0
      %1124 = vmatpush1.bf16.msra.mxu0 0
      %1125 = vmatprep.subr.bf16.mxu0 0
      %1126 = vmatpush1.bf16.msra.mxu0 0
      %1127 = vmatprep.subr.bf16.mxu0 0
      %1128 = vmatpush1.bf16.msra.mxu0 0
      %1129 = vmatprep.subr.bf16.mxu0 0
      %1130 = vmatpush1.bf16.msra.mxu0 0
      %1131 = vmatprep.subr.bf16.mxu0 0
      %1132 = vmatpush1.bf16.msra.mxu0 0
      %1133 = vmatprep.subr.bf16.mxu0 0
      %1134 = vmatpush1.bf16.msra.mxu0 0
      %1135 = vmatprep.subr.bf16.mxu0 0
      %1136 = vmatpush1.bf16.msra.mxu0 0
      %1137 = vmatprep.subr.bf16.mxu0 0
      %1138 = vmatpush1.bf16.msra.mxu0 0
      %1139 = vmatprep.subr.bf16.mxu0 0
      %1140 = vmatpush1.bf16.msra.mxu0 0
      %1141 = vmatprep.subr.bf16.mxu0 0
      %1142 = vmatpush1.bf16.msra.mxu0 0
      %1143 = vmatprep.mubr.bf16.mxu0 0
      %1144 = vmatmul.mubr.bf16.gmra.mrb[0].mxu0 %v1106
      %v1145 = vpop.f32.mrb[0].mxu0
      %v1146 = vadd.f32 0.0, %v1145
      %v1147 = vpop.f32.mrb[0].mxu0
      %v1148 = vpop.f32.mrb[0].mxu0
      %v1149 = vpop.f32.mrb[0].mxu0
      %1150 = vdwg.mxu0
      %v1151 = vadd.f32 %v1100, %v1146
      %s1152 = scalar_lea.vmem %s3, 64
      %v1153 = vld [vmem:[%s1152] sm:$0xf]
      %1154 = vrot.lane.b32.xlu0 %v847, 107
      %v1155 = vpop.permute.xlu0 %1154
      %v1157 = vsel %vm342, %v1153, 0
      %v1160 = vsel %vm346, %v1155, 0
      %1162 = vmatprep.subr.bf16.mxu0 0
      %1163 = vmatpush1.bf16.msra.mxu0 %v1160
      %1164 = vmatprep.subr.bf16.mxu0 0
      %1165 = vmatpush1.bf16.msra.mxu0 0
      %1166 = vmatprep.subr.bf16.mxu0 0
      %1167 = vmatpush1.bf16.msra.mxu0 0
      %1168 = vmatprep.subr.bf16.mxu0 0
      %1169 = vmatpush1.bf16.msra.mxu0 0
      %1170 = vmatprep.subr.bf16.mxu0 0
      %1171 = vmatpush1.bf16.msra.mxu0 0
      %1172 = vmatprep.subr.bf16.mxu0 0
      %1173 = vmatpush1.bf16.msra.mxu0 0
      %1174 = vmatprep.subr.bf16.mxu0 0
      %1175 = vmatpush1.bf16.msra.mxu0 0
      %1176 = vmatprep.subr.bf16.mxu0 0
      %1177 = vmatpush1.bf16.msra.mxu0 0
      %1178 = vmatprep.subr.bf16.mxu0 0
      %1179 = vmatpush1.bf16.msra.mxu0 0
      %1180 = vmatprep.subr.bf16.mxu0 0
      %1181 = vmatpush1.bf16.msra.mxu0 0
      %1182 = vmatprep.subr.bf16.mxu0 0
      %1183 = vmatpush1.bf16.msra.mxu0 0
      %1184 = vmatprep.subr.bf16.mxu0 0
      %1185 = vmatpush1.bf16.msra.mxu0 0
      %1186 = vmatprep.subr.bf16.mxu0 0
      %1187 = vmatpush1.bf16.msra.mxu0 0
      %1188 = vmatprep.subr.bf16.mxu0 0
      %1189 = vmatpush1.bf16.msra.mxu0 0
      %1190 = vmatprep.subr.bf16.mxu0 0
      %1191 = vmatpush1.bf16.msra.mxu0 0
      %1192 = vmatprep.subr.bf16.mxu0 0
      %1193 = vmatpush1.bf16.msra.mxu0 0
      %1194 = vmatprep.mubr.bf16.mxu0 0
      %1195 = vmatmul.mubr.bf16.gmra.mrb[0].mxu0 %v1157
      %v1196 = vpop.f32.mrb[0].mxu0
      %v1197 = vadd.f32 0.0, %v1196
      %v1198 = vpop.f32.mrb[0].mxu0
      %v1199 = vpop.f32.mrb[0].mxu0
      %v1200 = vpop.f32.mrb[0].mxu0
      %1201 = vdwg.mxu0
      %v1202 = vadd.f32 %v1151, %v1197
      %s1203 = scalar_lea.vmem %s3, 68
      %v1204 = vld [vmem:[%s1203] sm:$0xf]
      %1205 = vrot.lane.b32.xlu0 %v847, 106
      %v1206 = vpop.permute.xlu0 %1205
      %v1208 = vsel %vm342, %v1204, 0
      %v1211 = vsel %vm346, %v1206, 0
      %1213 = vmatprep.subr.bf16.mxu0 0
      %1214 = vmatpush1.bf16.msra.mxu0 %v1211
      %1215 = vmatprep.subr.bf16.mxu0 0
      %1216 = vmatpush1.bf16.msra.mxu0 0
      %1217 = vmatprep.subr.bf16.mxu0 0
      %1218 = vmatpush1.bf16.msra.mxu0 0
      %1219 = vmatprep.subr.bf16.mxu0 0
      %1220 = vmatpush1.bf16.msra.mxu0 0
      %1221 = vmatprep.subr.bf16.mxu0 0
      %1222 = vmatpush1.bf16.msra.mxu0 0
      %1223 = vmatprep.subr.bf16.mxu0 0
      %1224 = vmatpush1.bf16.msra.mxu0 0
      %1225 = vmatprep.subr.bf16.mxu0 0
      %1226 = vmatpush1.bf16.msra.mxu0 0
      %1227 = vmatprep.subr.bf16.mxu0 0
      %1228 = vmatpush1.bf16.msra.mxu0 0
      %1229 = vmatprep.subr.bf16.mxu0 0
      %1230 = vmatpush1.bf16.msra.mxu0 0
      %1231 = vmatprep.subr.bf16.mxu0 0
      %1232 = vmatpush1.bf16.msra.mxu0 0
      %1233 = vmatprep.subr.bf16.mxu0 0
      %1234 = vmatpush1.bf16.msra.mxu0 0
      %1235 = vmatprep.subr.bf16.mxu0 0
      %1236 = vmatpush1.bf16.msra.mxu0 0
      %1237 = vmatprep.subr.bf16.mxu0 0
      %1238 = vmatpush1.bf16.msra.mxu0 0
      %1239 = vmatprep.subr.bf16.mxu0 0
      %1240 = vmatpush1.bf16.msra.mxu0 0
      %1241 = vmatprep.subr.bf16.mxu0 0
      %1242 = vmatpush1.bf16.msra.mxu0 0
      %1243 = vmatprep.subr.bf16.mxu0 0
      %1244 = vmatpush1.bf16.msra.mxu0 0
      %1245 = vmatprep.mubr.bf16.mxu0 0
      %1246 = vmatmul.mubr.bf16.gmra.mrb[0].mxu0 %v1208
      %v1247 = vpop.f32.mrb[0].mxu0
      %v1248 = vadd.f32 0.0, %v1247
      %v1249 = vpop.f32.mrb[0].mxu0
      %v1250 = vpop.f32.mrb[0].mxu0
      %v1251 = vpop.f32.mrb[0].mxu0
      %1252 = vdwg.mxu0
      %v1253 = vadd.f32 %v1202, %v1248
      %v1254 = vld [vmem:[%s322] sm:$0xf]
      %s1255 = scalar_lea.vmem %s3, 72
      %v1256 = vld [vmem:[%s1255] sm:$0xf]
      %v1258 = vsel %vm342, %v1256, 0
      %v1261 = vsel %vm346, %v1254, 0
      %1263 = vmatprep.subr.bf16.mxu0 0
      %1264 = vmatpush1.bf16.msra.mxu0 %v1261
      %1265 = vmatprep.subr.bf16.mxu0 0
      %1266 = vmatpush1.bf16.msra.mxu0 0
      %1267 = vmatprep.subr.bf16.mxu0 0
      %1268 = vmatpush1.bf16.msra.mxu0 0
      %1269 = vmatprep.subr.bf16.mxu0 0
      %1270 = vmatpush1.bf16.msra.mxu0 0
      %1271 = vmatprep.subr.bf16.mxu0 0
      %1272 = vmatpush1.bf16.msra.mxu0 0
      %1273 = vmatprep.subr.bf16.mxu0 0
      %1274 = vmatpush1.bf16.msra.mxu0 0
      %1275 = vmatprep.subr.bf16.mxu0 0
      %1276 = vmatpush1.bf16.msra.mxu0 0
      %1277 = vmatprep.subr.bf16.mxu0 0
      %1278 = vmatpush1.bf16.msra.mxu0 0
      %1279 = vmatprep.subr.bf16.mxu0 0
      %1280 = vmatpush1.bf16.msra.mxu0 0
      %1281 = vmatprep.subr.bf16.mxu0 0
      %1282 = vmatpush1.bf16.msra.mxu0 0
      %1283 = vmatprep.subr.bf16.mxu0 0
      %1284 = vmatpush1.bf16.msra.mxu0 0
      %1285 = vmatprep.subr.bf16.mxu0 0
      %1286 = vmatpush1.bf16.msra.mxu0 0
      %1287 = vmatprep.subr.bf16.mxu0 0
      %1288 = vmatpush1.bf16.msra.mxu0 0
      %1289 = vmatprep.subr.bf16.mxu0 0
      %1290 = vmatpush1.bf16.msra.mxu0 0
      %1291 = vmatprep.subr.bf16.mxu0 0
      %1292 = vmatpush1.bf16.msra.mxu0 0
      %1293 = vmatprep.subr.bf16.mxu0 0
      %1294 = vmatpush1.bf16.msra.mxu0 0
      %1295 = vmatprep.mubr.bf16.mxu0 0
      %1296 = vmatmul.mubr.bf16.gmra.mrb[0].mxu0 %v1258
      %v1297 = vpop.f32.mrb[0].mxu0
      %v1298 = vadd.f32 0.0, %v1297
      %v1299 = vpop.f32.mrb[0].mxu0
      %v1300 = vpop.f32.mrb[0].mxu0
      %v1301 = vpop.f32.mrb[0].mxu0
      %1302 = vdwg.mxu0
      %v1303 = vadd.f32 %v1253, %v1298
      %s1304 = scalar_lea.vmem %s3, 76
      %v1305 = vld [vmem:[%s1304] sm:$0xf]
      %v1307 = vunpack.c.l.b16 %v1254
      %v1308 = vpack.c.b16 %v1307, %v1307
      %1309 = vrot.lane.b32.xlu0 %v1308, 127
      %v1310 = vpop.permute.xlu0 %1309
      %v1312 = vsel %vm342, %v1305, 0
      %v1315 = vsel %vm346, %v1310, 0
      %1317 = vmatprep.subr.bf16.mxu0 0
      %1318 = vmatpush1.bf16.msra.mxu0 %v1315
      %1319 = vmatprep.subr.bf16.mxu0 0
      %1320 = vmatpush1.bf16.msra.mxu0 0
      %1321 = vmatprep.subr.bf16.mxu0 0
      %1322 = vmatpush1.bf16.msra.mxu0 0
      %1323 = vmatprep.subr.bf16.mxu0 0
      %1324 = vmatpush1.bf16.msra.mxu0 0
      %1325 = vmatprep.subr.bf16.mxu0 0
      %1326 = vmatpush1.bf16.msra.mxu0 0
      %1327 = vmatprep.subr.bf16.mxu0 0
      %1328 = vmatpush1.bf16.msra.mxu0 0
      %1329 = vmatprep.subr.bf16.mxu0 0
      %1330 = vmatpush1.bf16.msra.mxu0 0
      %1331 = vmatprep.subr.bf16.mxu0 0
      %1332 = vmatpush1.bf16.msra.mxu0 0
      %1333 = vmatprep.subr.bf16.mxu0 0
      %1334 = vmatpush1.bf16.msra.mxu0 0
      %1335 = vmatprep.subr.bf16.mxu0 0
      %1336 = vmatpush1.bf16.msra.mxu0 0
      %1337 = vmatprep.subr.bf16.mxu0 0
      %1338 = vmatpush1.bf16.msra.mxu0 0
      %1339 = vmatprep.subr.bf16.mxu0 0
      %1340 = vmatpush1.bf16.msra.mxu0 0
      %1341 = vmatprep.subr.bf16.mxu0 0
      %1342 = vmatpush1.bf16.msra.mxu0 0
      %1343 = vmatprep.subr.bf16.mxu0 0
      %1344 = vmatpush1.bf16.msra.mxu0 0
      %1345 = vmatprep.subr.bf16.mxu0 0
      %1346 = vmatpush1.bf16.msra.mxu0 0
      %1347 = vmatprep.subr.bf16.mxu0 0
      %1348 = vmatpush1.bf16.msra.mxu0 0
      %1349 = vmatprep.mubr.bf16.mxu0 0
      %1350 = vmatmul.mubr.bf16.gmra.mrb[0].mxu0 %v1312
      %v1351 = vpop.f32.mrb[0].mxu0
      %v1352 = vadd.f32 0.0, %v1351
      %v1353 = vpop.f32.mrb[0].mxu0
      %v1354 = vpop.f32.mrb[0].mxu0
      %v1355 = vpop.f32.mrb[0].mxu0
      %1356 = vdwg.mxu0
      %v1357 = vadd.f32 %v1303, %v1352
      %s1358 = scalar_lea.vmem %s3, 80
      %v1359 = vld [vmem:[%s1358] sm:$0xf]
      %1360 = vrot.lane.b32.xlu0 %v1308, 126
      %v1361 = vpop.permute.xlu0 %1360
      %v1363 = vsel %vm342, %v1359, 0
      %v1366 = vsel %vm346, %v1361, 0
      %1368 = vmatprep.subr.bf16.mxu0 0
      %1369 = vmatpush1.bf16.msra.mxu0 %v1366
      %1370 = vmatprep.subr.bf16.mxu0 0
      %1371 = vmatpush1.bf16.msra.mxu0 0
      %1372 = vmatprep.subr.bf16.mxu0 0
      %1373 = vmatpush1.bf16.msra.mxu0 0
      %1374 = vmatprep.subr.bf16.mxu0 0
      %1375 = vmatpush1.bf16.msra.mxu0 0
      %1376 = vmatprep.subr.bf16.mxu0 0
      %1377 = vmatpush1.bf16.msra.mxu0 0
      %1378 = vmatprep.subr.bf16.mxu0 0
      %1379 = vmatpush1.bf16.msra.mxu0 0
      %1380 = vmatprep.subr.bf16.mxu0 0
      %1381 = vmatpush1.bf16.msra.mxu0 0
      %1382 = vmatprep.subr.bf16.mxu0 0
      %1383 = vmatpush1.bf16.msra.mxu0 0
      %1384 = vmatprep.subr.bf16.mxu0 0
      %1385 = vmatpush1.bf16.msra.mxu0 0
      %1386 = vmatprep.subr.bf16.mxu0 0
      %1387 = vmatpush1.bf16.msra.mxu0 0
      %1388 = vmatprep.subr.bf16.mxu0 0
      %1389 = vmatpush1.bf16.msra.mxu0 0
      %1390 = vmatprep.subr.bf16.mxu0 0
      %1391 = vmatpush1.bf16.msra.mxu0 0
      %1392 = vmatprep.subr.bf16.mxu0 0
      %1393 = vmatpush1.bf16.msra.mxu0 0
      %1394 = vmatprep.subr.bf16.mxu0 0
      %1395 = vmatpush1.bf16.msra.mxu0 0
      %1396 = vmatprep.subr.bf16.mxu0 0
      %1397 = vmatpush1.bf16.msra.mxu0 0
      %1398 = vmatprep.subr.bf16.mxu0 0
      %1399 = vmatpush1.bf16.msra.mxu0 0
      %1400 = vmatprep.mubr.bf16.mxu0 0
      %1401 = vmatmul.mubr.bf16.gmra.mrb[0].mxu0 %v1363
      %v1402 = vpop.f32.mrb[0].mxu0
      %v1403 = vadd.f32 0.0, %v1402
      %v1404 = vpop.f32.mrb[0].mxu0
      %v1405 = vpop.f32.mrb[0].mxu0
      %v1406 = vpop.f32.mrb[0].mxu0
      %1407 = vdwg.mxu0
      %v1408 = vadd.f32 %v1357, %v1403
      %s1409 = scalar_lea.vmem %s3, 84
      %v1410 = vld [vmem:[%s1409] sm:$0xf]
      %1411 = vrot.lane.b32.xlu0 %v1308, 118
      %v1412 = vpop.permute.xlu0 %1411
      %v1414 = vsel %vm342, %v1410, 0
      %v1417 = vsel %vm346, %v1412, 0
      %1419 = vmatprep.subr.bf16.mxu0 0
      %1420 = vmatpush1.bf16.msra.mxu0 %v1417
      %1421 = vmatprep.subr.bf16.mxu0 0
      %1422 = vmatpush1.bf16.msra.mxu0 0
      %1423 = vmatprep.subr.bf16.mxu0 0
      %1424 = vmatpush1.bf16.msra.mxu0 0
      %1425 = vmatprep.subr.bf16.mxu0 0
      %1426 = vmatpush1.bf16.msra.mxu0 0
      %1427 = vmatprep.subr.bf16.mxu0 0
      %1428 = vmatpush1.bf16.msra.mxu0 0
      %1429 = vmatprep.subr.bf16.mxu0 0
      %1430 = vmatpush1.bf16.msra.mxu0 0
      %1431 = vmatprep.subr.bf16.mxu0 0
      %1432 = vmatpush1.bf16.msra.mxu0 0
      %1433 = vmatprep.subr.bf16.mxu0 0
      %1434 = vmatpush1.bf16.msra.mxu0 0
      %1435 = vmatprep.subr.bf16.mxu0 0
      %1436 = vmatpush1.bf16.msra.mxu0 0
      %1437 = vmatprep.subr.bf16.mxu0 0
      %1438 = vmatpush1.bf16.msra.mxu0 0
      %1439 = vmatprep.subr.bf16.mxu0 0
      %1440 = vmatpush1.bf16.msra.mxu0 0
      %1441 = vmatprep.subr.bf16.mxu0 0
      %1442 = vmatpush1.bf16.msra.mxu0 0
      %1443 = vmatprep.subr.bf16.mxu0 0
      %1444 = vmatpush1.bf16.msra.mxu0 0
      %1445 = vmatprep.subr.bf16.mxu0 0
      %1446 = vmatpush1.bf16.msra.mxu0 0
      %1447 = vmatprep.subr.bf16.mxu0 0
      %1448 = vmatpush1.bf16.msra.mxu0 0
      %1449 = vmatprep.subr.bf16.mxu0 0
      %1450 = vmatpush1.bf16.msra.mxu0 0
      %1451 = vmatprep.mubr.bf16.mxu0 0
      %1452 = vmatmul.mubr.bf16.gmra.mrb[0].mxu0 %v1414
      %v1453 = vpop.f32.mrb[0].mxu0
      %v1454 = vadd.f32 0.0, %v1453
      %v1455 = vpop.f32.mrb[0].mxu0
      %v1456 = vpop.f32.mrb[0].mxu0
      %v1457 = vpop.f32.mrb[0].mxu0
      %1458 = vdwg.mxu0
      %v1459 = vadd.f32 %v1408, %v1454
      %s1460 = scalar_lea.vmem %s3, 88
      %v1461 = vld [vmem:[%s1460] sm:$0xf]
      %1462 = vrot.lane.b32.xlu0 %v1308, 117
      %v1463 = vpop.permute.xlu0 %1462
      %v1465 = vsel %vm342, %v1461, 0
      %v1468 = vsel %vm346, %v1463, 0
      %1470 = vmatprep.subr.bf16.mxu0 0
      %1471 = vmatpush1.bf16.msra.mxu0 %v1468
      %1472 = vmatprep.subr.bf16.mxu0 0
      %1473 = vmatpush1.bf16.msra.mxu0 0
      %1474 = vmatprep.subr.bf16.mxu0 0
      %1475 = vmatpush1.bf16.msra.mxu0 0
      %1476 = vmatprep.subr.bf16.mxu0 0
      %1477 = vmatpush1.bf16.msra.mxu0 0
      %1478 = vmatprep.subr.bf16.mxu0 0
      %1479 = vmatpush1.bf16.msra.mxu0 0
      %1480 = vmatprep.subr.bf16.mxu0 0
      %1481 = vmatpush1.bf16.msra.mxu0 0
      %1482 = vmatprep.subr.bf16.mxu0 0
      %1483 = vmatpush1.bf16.msra.mxu0 0
      %1484 = vmatprep.subr.bf16.mxu0 0
      %1485 = vmatpush1.bf16.msra.mxu0 0
      %1486 = vmatprep.subr.bf16.mxu0 0
      %1487 = vmatpush1.bf16.msra.mxu0 0
      %1488 = vmatprep.subr.bf16.mxu0 0
      %1489 = vmatpush1.bf16.msra.mxu0 0
      %1490 = vmatprep.subr.bf16.mxu0 0
      %1491 = vmatpush1.bf16.msra.mxu0 0
      %1492 = vmatprep.subr.bf16.mxu0 0
      %1493 = vmatpush1.bf16.msra.mxu0 0
      %1494 = vmatprep.subr.bf16.mxu0 0
      %1495 = vmatpush1.bf16.msra.mxu0 0
      %1496 = vmatprep.subr.bf16.mxu0 0
      %1497 = vmatpush1.bf16.msra.mxu0 0
      %1498 = vmatprep.subr.bf16.mxu0 0
      %1499 = vmatpush1.bf16.msra.mxu0 0
      %1500 = vmatprep.subr.bf16.mxu0 0
      %1501 = vmatpush1.bf16.msra.mxu0 0
      %1502 = vmatprep.mubr.bf16.mxu0 0
      %1503 = vmatmul.mubr.bf16.gmra.mrb[0].mxu0 %v1465
      %v1504 = vpop.f32.mrb[0].mxu0
      %v1505 = vadd.f32 0.0, %v1504
      %v1506 = vpop.f32.mrb[0].mxu0
      %v1507 = vpop.f32.mrb[0].mxu0
      %v1508 = vpop.f32.mrb[0].mxu0
      %1509 = vdwg.mxu0
      %v1510 = vadd.f32 %v1459, %v1505
      %s1511 = scalar_lea.vmem %s3, 92
      %v1512 = vld [vmem:[%s1511] sm:$0xf]
      %1513 = vrot.lane.b32.xlu0 %v1308, 116
      %v1514 = vpop.permute.xlu0 %1513
      %v1516 = vsel %vm342, %v1512, 0
      %v1519 = vsel %vm346, %v1514, 0
      %1521 = vmatprep.subr.bf16.mxu0 0
      %1522 = vmatpush1.bf16.msra.mxu0 %v1519
      %1523 = vmatprep.subr.bf16.mxu0 0
      %1524 = vmatpush1.bf16.msra.mxu0 0
      %1525 = vmatprep.subr.bf16.mxu0 0
      %1526 = vmatpush1.bf16.msra.mxu0 0
      %1527 = vmatprep.subr.bf16.mxu0 0
      %1528 = vmatpush1.bf16.msra.mxu0 0
      %1529 = vmatprep.subr.bf16.mxu0 0
      %1530 = vmatpush1.bf16.msra.mxu0 0
      %1531 = vmatprep.subr.bf16.mxu0 0
      %1532 = vmatpush1.bf16.msra.mxu0 0
      %1533 = vmatprep.subr.bf16.mxu0 0
      %1534 = vmatpush1.bf16.msra.mxu0 0
      %1535 = vmatprep.subr.bf16.mxu0 0
      %1536 = vmatpush1.bf16.msra.mxu0 0
      %1537 = vmatprep.subr.bf16.mxu0 0
      %1538 = vmatpush1.bf16.msra.mxu0 0
      %1539 = vmatprep.subr.bf16.mxu0 0
      %1540 = vmatpush1.bf16.msra.mxu0 0
      %1541 = vmatprep.subr.bf16.mxu0 0
      %1542 = vmatpush1.bf16.msra.mxu0 0
      %1543 = vmatprep.subr.bf16.mxu0 0
      %1544 = vmatpush1.bf16.msra.mxu0 0
      %1545 = vmatprep.subr.bf16.mxu0 0
      %1546 = vmatpush1.bf16.msra.mxu0 0
      %1547 = vmatprep.subr.bf16.mxu0 0
      %1548 = vmatpush1.bf16.msra.mxu0 0
      %1549 = vmatprep.subr.bf16.mxu0 0
      %1550 = vmatpush1.bf16.msra.mxu0 0
      %1551 = vmatprep.subr.bf16.mxu0 0
      %1552 = vmatpush1.bf16.msra.mxu0 0
      %1553 = vmatprep.mubr.bf16.mxu0 0
      %1554 = vmatmul.mubr.bf16.gmra.mrb[0].mxu0 %v1516
      %v1555 = vpop.f32.mrb[0].mxu0
      %v1556 = vadd.f32 0.0, %v1555
      %v1557 = vpop.f32.mrb[0].mxu0
      %v1558 = vpop.f32.mrb[0].mxu0
      %v1559 = vpop.f32.mrb[0].mxu0
      %1560 = vdwg.mxu0
      %v1561 = vadd.f32 %v1510, %v1556
      %s1562 = scalar_lea.vmem %s3, 96
      %v1563 = vld [vmem:[%s1562] sm:$0xf]
      %1564 = vrot.lane.b32.xlu0 %v1308, 108
      %v1565 = vpop.permute.xlu0 %1564
      %v1567 = vsel %vm342, %v1563, 0
      %v1570 = vsel %vm346, %v1565, 0
      %1572 = vmatprep.subr.bf16.mxu0 0
      %1573 = vmatpush1.bf16.msra.mxu0 %v1570
      %1574 = vmatprep.subr.bf16.mxu0 0
      %1575 = vmatpush1.bf16.msra.mxu0 0
      %1576 = vmatprep.subr.bf16.mxu0 0
      %1577 = vmatpush1.bf16.msra.mxu0 0
      %1578 = vmatprep.subr.bf16.mxu0 0
      %1579 = vmatpush1.bf16.msra.mxu0 0
      %1580 = vmatprep.subr.bf16.mxu0 0
      %1581 = vmatpush1.bf16.msra.mxu0 0
      %1582 = vmatprep.subr.bf16.mxu0 0
      %1583 = vmatpush1.bf16.msra.mxu0 0
      %1584 = vmatprep.subr.bf16.mxu0 0
      %1585 = vmatpush1.bf16.msra.mxu0 0
      %1586 = vmatprep.subr.bf16.mxu0 0
      %1587 = vmatpush1.bf16.msra.mxu0 0
      %1588 = vmatprep.subr.bf16.mxu0 0
      %1589 = vmatpush1.bf16.msra.mxu0 0
      %1590 = vmatprep.subr.bf16.mxu0 0
      %1591 = vmatpush1.bf16.msra.mxu0 0
      %1592 = vmatprep.subr.bf16.mxu0 0
      %1593 = vmatpush1.bf16.msra.mxu0 0
      %1594 = vmatprep.subr.bf16.mxu0 0
      %1595 = vmatpush1.bf16.msra.mxu0 0
      %1596 = vmatprep.subr.bf16.mxu0 0
      %1597 = vmatpush1.bf16.msra.mxu0 0
      %1598 = vmatprep.subr.bf16.mxu0 0
      %1599 = vmatpush1.bf16.msra.mxu0 0
      %1600 = vmatprep.subr.bf16.mxu0 0
      %1601 = vmatpush1.bf16.msra.mxu0 0
      %1602 = vmatprep.subr.bf16.mxu0 0
      %1603 = vmatpush1.bf16.msra.mxu0 0
      %1604 = vmatprep.mubr.bf16.mxu0 0
      %1605 = vmatmul.mubr.bf16.gmra.mrb[0].mxu0 %v1567
      %v1606 = vpop.f32.mrb[0].mxu0
      %v1607 = vadd.f32 0.0, %v1606
      %v1608 = vpop.f32.mrb[0].mxu0
      %v1609 = vpop.f32.mrb[0].mxu0
      %v1610 = vpop.f32.mrb[0].mxu0
      %1611 = vdwg.mxu0
      %v1612 = vadd.f32 %v1561, %v1607
      %s1613 = scalar_lea.vmem %s3, 100
      %v1614 = vld [vmem:[%s1613] sm:$0xf]
      %1615 = vrot.lane.b32.xlu0 %v1308, 107
      %v1616 = vpop.permute.xlu0 %1615
      %v1618 = vsel %vm342, %v1614, 0
      %v1621 = vsel %vm346, %v1616, 0
      %1623 = vmatprep.subr.bf16.mxu0 0
      %1624 = vmatpush1.bf16.msra.mxu0 %v1621
      %1625 = vmatprep.subr.bf16.mxu0 0
      %1626 = vmatpush1.bf16.msra.mxu0 0
      %1627 = vmatprep.subr.bf16.mxu0 0
      %1628 = vmatpush1.bf16.msra.mxu0 0
      %1629 = vmatprep.subr.bf16.mxu0 0
      %1630 = vmatpush1.bf16.msra.mxu0 0
      %1631 = vmatprep.subr.bf16.mxu0 0
      %1632 = vmatpush1.bf16.msra.mxu0 0
      %1633 = vmatprep.subr.bf16.mxu0 0
      %1634 = vmatpush1.bf16.msra.mxu0 0
      %1635 = vmatprep.subr.bf16.mxu0 0
      %1636 = vmatpush1.bf16.msra.mxu0 0
      %1637 = vmatprep.subr.bf16.mxu0 0
      %1638 = vmatpush1.bf16.msra.mxu0 0
      %1639 = vmatprep.subr.bf16.mxu0 0
      %1640 = vmatpush1.bf16.msra.mxu0 0
      %1641 = vmatprep.subr.bf16.mxu0 0
      %1642 = vmatpush1.bf16.msra.mxu0 0
      %1643 = vmatprep.subr.bf16.mxu0 0
      %1644 = vmatpush1.bf16.msra.mxu0 0
      %1645 = vmatprep.subr.bf16.mxu0 0
      %1646 = vmatpush1.bf16.msra.mxu0 0
      %1647 = vmatprep.subr.bf16.mxu0 0
      %1648 = vmatpush1.bf16.msra.mxu0 0
      %1649 = vmatprep.subr.bf16.mxu0 0
      %1650 = vmatpush1.bf16.msra.mxu0 0
      %1651 = vmatprep.subr.bf16.mxu0 0
      %1652 = vmatpush1.bf16.msra.mxu0 0
      %1653 = vmatprep.subr.bf16.mxu0 0
      %1654 = vmatpush1.bf16.msra.mxu0 0
      %1655 = vmatprep.mubr.bf16.mxu0 0
      %1656 = vmatmul.mubr.bf16.gmra.mrb[0].mxu0 %v1618
      %v1657 = vpop.f32.mrb[0].mxu0
      %v1658 = vadd.f32 0.0, %v1657
      %v1659 = vpop.f32.mrb[0].mxu0
      %v1660 = vpop.f32.mrb[0].mxu0
      %v1661 = vpop.f32.mrb[0].mxu0
      %1662 = vdwg.mxu0
      %v1663 = vadd.f32 %v1612, %v1658
      %s1664 = scalar_lea.vmem %s3, 104
      %v1665 = vld [vmem:[%s1664] sm:$0xf]
      %1666 = vrot.lane.b32.xlu0 %v1308, 106
      %v1667 = vpop.permute.xlu0 %1666
      %v1669 = vsel %vm342, %v1665, 0
      %v1672 = vsel %vm346, %v1667, 0
      %1674 = vmatprep.subr.bf16.mxu0 0
      %1675 = vmatpush1.bf16.msra.mxu0 %v1672
      %1676 = vmatprep.subr.bf16.mxu0 0
      %1677 = vmatpush1.bf16.msra.mxu0 0
      %1678 = vmatprep.subr.bf16.mxu0 0
      %1679 = vmatpush1.bf16.msra.mxu0 0
      %1680 = vmatprep.subr.bf16.mxu0 0
      %1681 = vmatpush1.bf16.msra.mxu0 0
      %1682 = vmatprep.subr.bf16.mxu0 0
      %1683 = vmatpush1.bf16.msra.mxu0 0
      %1684 = vmatprep.subr.bf16.mxu0 0
      %1685 = vmatpush1.bf16.msra.mxu0 0
      %1686 = vmatprep.subr.bf16.mxu0 0
      %1687 = vmatpush1.bf16.msra.mxu0 0
      %1688 = vmatprep.subr.bf16.mxu0 0
      %1689 = vmatpush1.bf16.msra.mxu0 0
      %1690 = vmatprep.subr.bf16.mxu0 0
      %1691 = vmatpush1.bf16.msra.mxu0 0
      %1692 = vmatprep.subr.bf16.mxu0 0
      %1693 = vmatpush1.bf16.msra.mxu0 0
      %1694 = vmatprep.subr.bf16.mxu0 0
      %1695 = vmatpush1.bf16.msra.mxu0 0
      %1696 = vmatprep.subr.bf16.mxu0 0
      %1697 = vmatpush1.bf16.msra.mxu0 0
      %1698 = vmatprep.subr.bf16.mxu0 0
      %1699 = vmatpush1.bf16.msra.mxu0 0
      %1700 = vmatprep.subr.bf16.mxu0 0
      %1701 = vmatpush1.bf16.msra.mxu0 0
      %1702 = vmatprep.subr.bf16.mxu0 0
      %1703 = vmatpush1.bf16.msra.mxu0 0
      %1704 = vmatprep.subr.bf16.mxu0 0
      %1705 = vmatpush1.bf16.msra.mxu0 0
      %1706 = vmatprep.mubr.bf16.mxu0 0
      %1707 = vmatmul.mubr.bf16.gmra.mrb[0].mxu0 %v1669
      %v1708 = vpop.f32.mrb[0].mxu0
      %v1709 = vadd.f32 0.0, %v1708
      %v1710 = vpop.f32.mrb[0].mxu0
      %v1711 = vpop.f32.mrb[0].mxu0
      %v1712 = vpop.f32.mrb[0].mxu0
      %1713 = vdwg.mxu0
      %v1714 = vadd.f32 %v1663, %v1709
      %v1715 = vld [vmem:[%s4] sm:$0xff]
      %1717 = vset.pattern.permute.xlu0 0
      %1718 = vperm.xlu0 %1717, %v1715
      %v1719 = vpop.permute.xlu0 %1718
      %v1721 = vadd.f32 %v1714, %v1719
      %v1722 = vmax.f32 %v1721, 0.0
      %vm1723 = vcmask 654336
      %1724 = vst.msk [vmem:[%s331] sm:$0xff] %vm1723, %v1722
      %p1725 = scmp.lt.s32.totalorder %s20, 1
      %s1726 = scalar_select %p1725, %s20, 1
      %p1727 = scmp.lt.s32.totalorder %s21, 7
      %s1728 = scalar_select %p1727, %s21, 7
      %s1729 = smul.addr %s1726, 8
      %s1730 = sadd.s32 %s1728, %s1729
      %s1731 = smul.addr %s1730, 8
      %s1732 = scalar_lea.vmem %s5, %s1731
      // Predicated region
      $region41: #{down_forward.3} parent=39 // pred_check
        %p1733 = pneg %p178
      $region42: #{down_forward.3} parent=39 // pred_check_branch
        %1735 = sbr.rel (%p1733) target = $region44
      $region43: #{down_forward.3} parent=39 // pred_region
        _
      $region44: #{down_forward.3} parent=39 // pred_fallthru
        _
    $region40: #{down_forward.3} parent=5 // pred_fallthru
      _
    %p1736 = scmp.le.s32.totalorder 2, %s11
    // Predicated region
    $region45: #{down_forward.3} parent=5 // pred_check
      %p1737 = pneg %p1736
    $region46: #{down_forward.3} parent=5 // pred_check_branch
      %1739 = sbr.rel (%p1737) target = $region48
    $region47: #{down_forward.3} parent=5 // pred_region
      %s1740 = ssub.s32 %s11, 2
      // Predicated region
      $region49: #{down_forward.3} parent=47 // pred_check
        %p1741 = pneg %p184
      $region50: #{down_forward.3} parent=47 // pred_check_branch
        %1743 = sbr.rel (%p1741) target = $region52
      $region51: #{down_forward.3} parent=47 // pred_region
        %p1744 = scmp.lt.s32.totalorder %s22, 1
        %s1745 = scalar_select %p1744, %s22, 1
        %p1746 = scmp.lt.s32.totalorder %s23, 7
        %s1747 = scalar_select %p1746, %s23, 7
        %s1748 = smul.addr %s1745, 8
        %s1749 = sadd.s32 %s1747, %s1748
        %s1750 = smul.addr %s1749, 8
        %s1751 = scalar_lea.vmem %s5, %s1750
      $region52: #{down_forward.3} parent=47 // pred_fallthru
        _
    $region48: #{down_forward.3} parent=5 // pred_fallthru
      _
  $region6: #{down_forward.3} parent=0 // loop_footer
    %s15 = sadd.s32 1, %s11
  $region7: #{down_forward.3} parent=0 // loop_footer_branch
    %10 = sbr.rel target = $region3
  $region8: #{down_forward.3} parent=0 // loop_exit
    _

</llo_original>
